<compile_context>
chip_gen: v7x
topology: tpu7x:2x2x1
jax: 0.10.0
libtpu: 0.0.40
codegen_flags: <defaults>
</compile_context>

<pallas_src>
import functools

import jax
import jax.numpy as jnp
from jax import lax
from jax.experimental import pallas as pl
from jax.experimental.pallas import tpu as pltpu

EULER_DT = 0.01
NSTEPS = 100  # len(torch.arange(0, 1, 0.01))


def _tree_sum(parts):
    # Pairwise reduction -> short dependency chains for the VALU.
    while len(parts) > 1:
        nxt = [parts[i] + parts[i + 1] for i in range(0, len(parts) - 1, 2)]
        if len(parts) % 2:
            nxt.append(parts[-1])
        parts = nxt
    return parts[0]


def _flow_kernel(x_ref, w1b_ref, w2b_ref, ttab_ref, b2b_ref, o_ref,
                 *, shifts, c_in, c_hid):
    # x_ref/o_ref : (C, L)            f32, L = N*H*W (lane-dense)
    # w1b_ref     : (9, C, HD, L)     mask-folded, lane-broadcast conv1 weights
    # w2b_ref     : (9, HD, C, L)     mask-folded, lane-broadcast conv2 weights
    # ttab_ref    : (NSTEPS, HD, L)   precomputed b1 + tb + t*tw per step
    # b2b_ref     : (C, L)            lane-broadcast conv2 bias
    L = x_ref.shape[-1]
    b2b = b2b_ref[...]

    def shifted(a, s):
        # shifted[:, l] = a[:, (l + s) mod L]; wrap-around lanes are killed by
        # the zero mask folded into the weights.
        return a if s == 0 else jnp.roll(a, -s, axis=-1)

    def conv(src, wref, n_in, n_out, init):
        # out[co, l] = init[co, l] + sum_{k, ci} w[k, ci, co, l] * src[ci, l + s_k]
        parts = [init]
        for k, s in enumerate(shifts):
            sh = shifted(src, s)                                    # (n_in, L)
            p = None
            for ci in range(n_in):
                row = jnp.broadcast_to(sh[ci:ci + 1, :], (n_out, L))
                term = wref[k, ci] * row                            # (n_out, L)
                p = term if p is None else p + term
            parts.append(p)
        return _tree_sum(parts)

    def step_fn(step, x):
        # conv1 + bias + time embedding (hoisted table), then ReLU
        h = conv(x, w1b_ref, c_in, c_hid, ttab_ref[step])           # (HD, L)
        h = jnp.maximum(h, 0.0)
        # conv2 + bias
        v = conv(h, w2b_ref, c_hid, c_in, b2b)                      # (C, L)
        return x + jnp.float32(EULER_DT) * v

    o_ref[...] = lax.fori_loop(0, NSTEPS, step_fn, x_ref[...])


def flow_matching_forward(x_nchw, params):
    """Pallas implementation of FlowMathcing.forward(x_0)."""
    w1, b1, tw, tb, w2, b2 = params
    N, C, H, W = x_nchw.shape
    HD = w1.shape[-1]
    HW = H * W
    L = N * HW
    f32 = jnp.float32

    # ---- lane-dense layout: channels on sublanes, (n, h, w) flat on lanes ----
    x0 = jnp.transpose(x_nchw.astype(f32), (1, 0, 2, 3)).reshape(C, L)

    # 3x3 taps: flat lane shift + validity mask (mask gets folded into weights).
    taps = [(dy, dx) for dy in range(3) for dx in range(3)]
    shifts = tuple((dy - 1) * W + (dx - 1) for dy, dx in taps)

    hh = jnp.arange(H)[:, None]
    ww = jnp.arange(W)[None, :]
    masks = []
    for dy, dx in taps:
        valid = ((hh + dy - 1 >= 0) & (hh + dy - 1 < H) &
                 (ww + dx - 1 >= 0) & (ww + dx - 1 < W))              # (H, W)
        masks.append(valid.astype(f32).reshape(HW))
    mask9 = jnp.tile(jnp.stack(masks), (1, N))                        # (9, L)

    # Pre-broadcast weights along lanes with the SAME-padding mask folded in.
    w1b = w1.astype(f32).reshape(9, C, HD)[:, :, :, None] * mask9[:, None, None, :]
    w2b = w2.astype(f32).reshape(9, HD, C)[:, :, :, None] * mask9[:, None, None, :]

    # Hoisted time embedding table: ttab[s] = b1 + tb + (s * dt) * tw.
    tvals = jnp.arange(NSTEPS, dtype=f32) * jnp.float32(EULER_DT)     # (S,)
    ttab = (b1 + tb).reshape(1, HD).astype(f32) + tvals[:, None] * tw.reshape(1, HD).astype(f32)
    ttab = jnp.broadcast_to(ttab[:, :, None], (NSTEPS, HD, L))
    b2b = jnp.broadcast_to(b2.astype(f32).reshape(C, 1), (C, L))

    kernel = functools.partial(_flow_kernel, shifts=shifts, c_in=C, c_hid=HD)
    out = pl.pallas_call(
        kernel,
        out_shape=jax.ShapeDtypeStruct((C, L), f32),
        in_specs=[pl.BlockSpec(memory_space=pltpu.MemorySpace.VMEM)] * 5,
        out_specs=pl.BlockSpec(memory_space=pltpu.MemorySpace.VMEM),
    )(x0, w1b, w2b, ttab, b2b)

    # (C, N*H*W) -> NCHW
    return jnp.transpose(out.reshape(C, N, H, W), (1, 0, 2, 3))


# ------------------------- pure-JAX reference ------------------------- #
def _conv3x3_ref(x_nhwc, w):
    n, h, wd, cin = x_nhwc.shape
    cout = w.shape[-1]
    xp = jnp.pad(x_nhwc, ((0, 0), (1, 1), (1, 1), (0, 0)))
    acc = jnp.zeros((n, h, wd, cout), jnp.float32)
    for dy in range(3):
        for dx in range(3):
            acc = acc + jnp.einsum('nhwc,cd->nhwd',
                                   xp[:, dy:dy + h, dx:dx + wd, :], w[dy, dx])
    return acc


def _vector_net_ref(x_nhwc, t, params):
    w1, b1, tw, tb, w2, b2 = params
    h = _conv3x3_ref(x_nhwc, w1) + b1 + (t * tw + tb)
    h = jnp.maximum(h, 0.0)
    return _conv3x3_ref(h, w2) + b2


@jax.jit
def flow_matching_ref(x_nchw, params):
    x = jnp.transpose(x_nchw, (0, 2, 3, 1)).astype(jnp.float32)

    def body(step, xc):
        t = step.astype(jnp.float32) * jnp.float32(EULER_DT)
        return xc + jnp.float32(EULER_DT) * _vector_net_ref(xc, t, params)

    x = lax.fori_loop(0, NSTEPS, body, x)
    return jnp.transpose(x, (0, 3, 1, 2))


if __name__ == "__main__":
    N, C, H, W, HD = 2, 4, 16, 16, 8

    # Deterministic synthetic "unet" parameters + input, all from PRNGKey(0).
    k0, k1, k2, k3, k4, k5, k6 = jax.random.split(jax.random.PRNGKey(0), 7)
    w1 = 0.05 * jax.random.normal(k1, (3, 3, C, HD), jnp.float32)
    b1 = 0.05 * jax.random.normal(k2, (1, HD), jnp.float32)
    tw = 0.05 * jax.random.normal(k3, (1, HD), jnp.float32)
    tb = 0.05 * jax.random.normal(k4, (1, HD), jnp.float32)
    w2 = 0.05 * jax.random.normal(k5, (3, 3, HD, C), jnp.float32)
    b2 = 0.05 * jax.random.normal(k6, (1, C), jnp.float32)
    params = (w1, b1, tw, tb, w2, b2)

    # Input x_0 in PyTorch NCHW convention.
    x0 = jax.random.normal(k0, (N, C, H, W), jnp.float32)

    out = jax.block_until_ready(flow_matching_forward(x0, params))
    ref = jax.block_until_ready(flow_matching_ref(x0, params))

    max_diff = float(jnp.max(jnp.abs(out - ref)))
    assert out.shape == (N, C, H, W)
    assert max_diff < 5e-2, f"mismatch vs reference: {max_diff}"

    print("KERNEL_OK")
</pallas_src>

<mosaic_0001>
module attributes {stable_mosaic.version = 11 : i64} {
  func.func @_flow_kernel(%arg0: memref<4x512xf32, #tpu.memory_space<vmem>>, %arg1: memref<9x4x8x512xf32, #tpu.memory_space<vmem>>, %arg2: memref<9x8x4x512xf32, #tpu.memory_space<vmem>>, %arg3: memref<100x8x512xf32, #tpu.memory_space<vmem>>, %arg4: memref<4x512xf32, #tpu.memory_space<vmem>>, %arg5: memref<4x512xf32, #tpu.memory_space<vmem>>) attributes {dimension_semantics = [], scalar_prefetch = 0 : i64, scratch_operands = 0 : i64, tpu.core_type = #tpu.core_type<tc>} {
    %c0 = arith.constant 0 : index
    %c0_0 = arith.constant 0 : index
    %0 = vector.load %arg4[%c0, %c0_0] : memref<4x512xf32, #tpu.memory_space<vmem>>, vector<4x512xf32>
    %c0_1 = arith.constant 0 : index
    %c0_2 = arith.constant 0 : index
    %1 = vector.load %arg0[%c0_1, %c0_2] : memref<4x512xf32, #tpu.memory_space<vmem>>, vector<4x512xf32>
    %c0_i32 = arith.constant 0 : i32
    %c100_i32 = arith.constant 100 : i32
    %2 = arith.addi %c0_i32, %c100_i32 : i32
    %c1_i32 = arith.constant 1 : i32
    %3 = scf.for %arg6 = %c0_i32 to %2 step %c1_i32 iter_args(%arg7 = %1) -> (vector<4x512xf32>)  : i32 {
      %5 = arith.index_cast %arg6 : i32 to index
      %c0_6 = arith.constant 0 : index
      %c0_7 = arith.constant 0 : index
      %6 = vector.load %arg3[%5, %c0_6, %c0_7] : memref<100x8x512xf32, #tpu.memory_space<vmem>>, vector<1x8x512xf32>
      %7 = vector.shape_cast %6 : vector<1x8x512xf32> to vector<8x512xf32>
      %8 = vector.extract_strided_slice %arg7 {offsets = [0, 495], sizes = [4, 17], strides = [1, 1]} : vector<4x512xf32> to vector<4x17xf32>
      %9 = vector.extract_strided_slice %arg7 {offsets = [0, 0], sizes = [4, 495], strides = [1, 1]} : vector<4x512xf32> to vector<4x495xf32>
      %10 = tpu.concatenate %8, %9 in 1 : vector<4x17xf32>, vector<4x495xf32> -> vector<4x512xf32>
      %11 = vector.extract_strided_slice %10 {offsets = [0, 0], sizes = [1, 512], strides = [1, 1]} : vector<4x512xf32> to vector<1x512xf32>
      %12 = vector.shape_cast %11 : vector<1x512xf32> to vector<1x512xf32>
      %13 = vector.broadcast %12 : vector<1x512xf32> to vector<8x512xf32>
      %c0_8 = arith.constant 0 : index
      %c0_9 = arith.constant 0 : index
      %c0_10 = arith.constant 0 : index
      %c0_11 = arith.constant 0 : index
      %14 = vector.load %arg1[%c0_8, %c0_9, %c0_10, %c0_11] : memref<9x4x8x512xf32, #tpu.memory_space<vmem>>, vector<1x1x8x512xf32>
      %15 = vector.shape_cast %14 : vector<1x1x8x512xf32> to vector<8x512xf32>
      %16 = arith.mulf %15, %13 : vector<8x512xf32>
      %17 = vector.extract_strided_slice %10 {offsets = [1, 0], sizes = [1, 512], strides = [1, 1]} : vector<4x512xf32> to vector<1x512xf32>
      %18 = vector.shape_cast %17 : vector<1x512xf32> to vector<1x512xf32>
      %19 = vector.broadcast %18 : vector<1x512xf32> to vector<8x512xf32>
      %c0_12 = arith.constant 0 : index
      %c1 = arith.constant 1 : index
      %c0_13 = arith.constant 0 : index
      %c0_14 = arith.constant 0 : index
      %20 = vector.load %arg1[%c0_12, %c1, %c0_13, %c0_14] : memref<9x4x8x512xf32, #tpu.memory_space<vmem>>, vector<1x1x8x512xf32>
      %21 = vector.shape_cast %20 : vector<1x1x8x512xf32> to vector<8x512xf32>
      %22 = arith.mulf %21, %19 : vector<8x512xf32>
      %23 = arith.addf %16, %22 : vector<8x512xf32>
      %24 = vector.extract_strided_slice %10 {offsets = [2, 0], sizes = [1, 512], strides = [1, 1]} : vector<4x512xf32> to vector<1x512xf32>
      %25 = vector.shape_cast %24 : vector<1x512xf32> to vector<1x512xf32>
      %26 = vector.broadcast %25 : vector<1x512xf32> to vector<8x512xf32>
      %c0_15 = arith.constant 0 : index
      %c2 = arith.constant 2 : index
      %c0_16 = arith.constant 0 : index
      %c0_17 = arith.constant 0 : index
      %27 = vector.load %arg1[%c0_15, %c2, %c0_16, %c0_17] : memref<9x4x8x512xf32, #tpu.memory_space<vmem>>, vector<1x1x8x512xf32>
      %28 = vector.shape_cast %27 : vector<1x1x8x512xf32> to vector<8x512xf32>
      %29 = arith.mulf %28, %26 : vector<8x512xf32>
      %30 = arith.addf %23, %29 : vector<8x512xf32>
      %31 = vector.extract_strided_slice %10 {offsets = [3, 0], sizes = [1, 512], strides = [1, 1]} : vector<4x512xf32> to vector<1x512xf32>
      %32 = vector.shape_cast %31 : vector<1x512xf32> to vector<1x512xf32>
      %33 = vector.broadcast %32 : vector<1x512xf32> to vector<8x512xf32>
      %c0_18 = arith.constant 0 : index
      %c3 = arith.constant 3 : index
      %c0_19 = arith.constant 0 : index
      %c0_20 = arith.constant 0 : index
      %34 = vector.load %arg1[%c0_18, %c3, %c0_19, %c0_20] : memref<9x4x8x512xf32, #tpu.memory_space<vmem>>, vector<1x1x8x512xf32>
      %35 = vector.shape_cast %34 : vector<1x1x8x512xf32> to vector<8x512xf32>
      %36 = arith.mulf %35, %33 : vector<8x512xf32>
      %37 = arith.addf %30, %36 : vector<8x512xf32>
      %38 = vector.extract_strided_slice %arg7 {offsets = [0, 496], sizes = [4, 16], strides = [1, 1]} : vector<4x512xf32> to vector<4x16xf32>
      %39 = vector.extract_strided_slice %arg7 {offsets = [0, 0], sizes = [4, 496], strides = [1, 1]} : vector<4x512xf32> to vector<4x496xf32>
      %40 = tpu.concatenate %38, %39 in 1 : vector<4x16xf32>, vector<4x496xf32> -> vector<4x512xf32>
      %41 = vector.extract_strided_slice %40 {offsets = [0, 0], sizes = [1, 512], strides = [1, 1]} : vector<4x512xf32> to vector<1x512xf32>
      %42 = vector.shape_cast %41 : vector<1x512xf32> to vector<1x512xf32>
      %43 = vector.broadcast %42 : vector<1x512xf32> to vector<8x512xf32>
      %c1_21 = arith.constant 1 : index
      %c0_22 = arith.constant 0 : index
      %c0_23 = arith.constant 0 : index
      %c0_24 = arith.constant 0 : index
      %44 = vector.load %arg1[%c1_21, %c0_22, %c0_23, %c0_24] : memref<9x4x8x512xf32, #tpu.memory_space<vmem>>, vector<1x1x8x512xf32>
      %45 = vector.shape_cast %44 : vector<1x1x8x512xf32> to vector<8x512xf32>
      %46 = arith.mulf %45, %43 : vector<8x512xf32>
      %47 = vector.extract_strided_slice %40 {offsets = [1, 0], sizes = [1, 512], strides = [1, 1]} : vector<4x512xf32> to vector<1x512xf32>
      %48 = vector.shape_cast %47 : vector<1x512xf32> to vector<1x512xf32>
      %49 = vector.broadcast %48 : vector<1x512xf32> to vector<8x512xf32>
      %c1_25 = arith.constant 1 : index
      %c1_26 = arith.constant 1 : index
      %c0_27 = arith.constant 0 : index
      %c0_28 = arith.constant 0 : index
      %50 = vector.load %arg1[%c1_25, %c1_26, %c0_27, %c0_28] : memref<9x4x8x512xf32, #tpu.memory_space<vmem>>, vector<1x1x8x512xf32>
      %51 = vector.shape_cast %50 : vector<1x1x8x512xf32> to vector<8x512xf32>
      %52 = arith.mulf %51, %49 : vector<8x512xf32>
      %53 = arith.addf %46, %52 : vector<8x512xf32>
      %54 = vector.extract_strided_slice %40 {offsets = [2, 0], sizes = [1, 512], strides = [1, 1]} : vector<4x512xf32> to vector<1x512xf32>
      %55 = vector.shape_cast %54 : vector<1x512xf32> to vector<1x512xf32>
      %56 = vector.broadcast %55 : vector<1x512xf32> to vector<8x512xf32>
      %c1_29 = arith.constant 1 : index
      %c2_30 = arith.constant 2 : index
      %c0_31 = arith.constant 0 : index
      %c0_32 = arith.constant 0 : index
      %57 = vector.load %arg1[%c1_29, %c2_30, %c0_31, %c0_32] : memref<9x4x8x512xf32, #tpu.memory_space<vmem>>, vector<1x1x8x512xf32>
      %58 = vector.shape_cast %57 : vector<1x1x8x512xf32> to vector<8x512xf32>
      %59 = arith.mulf %58, %56 : vector<8x512xf32>
      %60 = arith.addf %53, %59 : vector<8x512xf32>
      %61 = vector.extract_strided_slice %40 {offsets = [3, 0], sizes = [1, 512], strides = [1, 1]} : vector<4x512xf32> to vector<1x512xf32>
      %62 = vector.shape_cast %61 : vector<1x512xf32> to vector<1x512xf32>
      %63 = vector.broadcast %62 : vector<1x512xf32> to vector<8x512xf32>
      %c1_33 = arith.constant 1 : index
      %c3_34 = arith.constant 3 : index
      %c0_35 = arith.constant 0 : index
      %c0_36 = arith.constant 0 : index
      %64 = vector.load %arg1[%c1_33, %c3_34, %c0_35, %c0_36] : memref<9x4x8x512xf32, #tpu.memory_space<vmem>>, vector<1x1x8x512xf32>
      %65 = vector.shape_cast %64 : vector<1x1x8x512xf32> to vector<8x512xf32>
      %66 = arith.mulf %65, %63 : vector<8x512xf32>
      %67 = arith.addf %60, %66 : vector<8x512xf32>
      %68 = vector.extract_strided_slice %arg7 {offsets = [0, 497], sizes = [4, 15], strides = [1, 1]} : vector<4x512xf32> to vector<4x15xf32>
      %69 = vector.extract_strided_slice %arg7 {offsets = [0, 0], sizes = [4, 497], strides = [1, 1]} : vector<4x512xf32> to vector<4x497xf32>
      %70 = tpu.concatenate %68, %69 in 1 : vector<4x15xf32>, vector<4x497xf32> -> vector<4x512xf32>
      %71 = vector.extract_strided_slice %70 {offsets = [0, 0], sizes = [1, 512], strides = [1, 1]} : vector<4x512xf32> to vector<1x512xf32>
      %72 = vector.shape_cast %71 : vector<1x512xf32> to vector<1x512xf32>
      %73 = vector.broadcast %72 : vector<1x512xf32> to vector<8x512xf32>
      %c2_37 = arith.constant 2 : index
      %c0_38 = arith.constant 0 : index
      %c0_39 = arith.constant 0 : index
      %c0_40 = arith.constant 0 : index
      %74 = vector.load %arg1[%c2_37, %c0_38, %c0_39, %c0_40] : memref<9x4x8x512xf32, #tpu.memory_space<vmem>>, vector<1x1x8x512xf32>
      %75 = vector.shape_cast %74 : vector<1x1x8x512xf32> to vector<8x512xf32>
      %76 = arith.mulf %75, %73 : vector<8x512xf32>
      %77 = vector.extract_strided_slice %70 {offsets = [1, 0], sizes = [1, 512], strides = [1, 1]} : vector<4x512xf32> to vector<1x512xf32>
      %78 = vector.shape_cast %77 : vector<1x512xf32> to vector<1x512xf32>
      %79 = vector.broadcast %78 : vector<1x512xf32> to vector<8x512xf32>
      %c2_41 = arith.constant 2 : index
      %c1_42 = arith.constant 1 : index
      %c0_43 = arith.constant 0 : index
      %c0_44 = arith.constant 0 : index
      %80 = vector.load %arg1[%c2_41, %c1_42, %c0_43, %c0_44] : memref<9x4x8x512xf32, #tpu.memory_space<vmem>>, vector<1x1x8x512xf32>
      %81 = vector.shape_cast %80 : vector<1x1x8x512xf32> to vector<8x512xf32>
      %82 = arith.mulf %81, %79 : vector<8x512xf32>
      %83 = arith.addf %76, %82 : vector<8x512xf32>
      %84 = vector.extract_strided_slice %70 {offsets = [2, 0], sizes = [1, 512], strides = [1, 1]} : vector<4x512xf32> to vector<1x512xf32>
      %85 = vector.shape_cast %84 : vector<1x512xf32> to vector<1x512xf32>
      %86 = vector.broadcast %85 : vector<1x512xf32> to vector<8x512xf32>
      %c2_45 = arith.constant 2 : index
      %c2_46 = arith.constant 2 : index
      %c0_47 = arith.constant 0 : index
      %c0_48 = arith.constant 0 : index
      %87 = vector.load %arg1[%c2_45, %c2_46, %c0_47, %c0_48] : memref<9x4x8x512xf32, #tpu.memory_space<vmem>>, vector<1x1x8x512xf32>
      %88 = vector.shape_cast %87 : vector<1x1x8x512xf32> to vector<8x512xf32>
      %89 = arith.mulf %88, %86 : vector<8x512xf32>
      %90 = arith.addf %83, %89 : vector<8x512xf32>
      %91 = vector.extract_strided_slice %70 {offsets = [3, 0], sizes = [1, 512], strides = [1, 1]} : vector<4x512xf32> to vector<1x512xf32>
      %92 = vector.shape_cast %91 : vector<1x512xf32> to vector<1x512xf32>
      %93 = vector.broadcast %92 : vector<1x512xf32> to vector<8x512xf32>
      %c2_49 = arith.constant 2 : index
      %c3_50 = arith.constant 3 : index
      %c0_51 = arith.constant 0 : index
      %c0_52 = arith.constant 0 : index
      %94 = vector.load %arg1[%c2_49, %c3_50, %c0_51, %c0_52] : memref<9x4x8x512xf32, #tpu.memory_space<vmem>>, vector<1x1x8x512xf32>
      %95 = vector.shape_cast %94 : vector<1x1x8x512xf32> to vector<8x512xf32>
      %96 = arith.mulf %95, %93 : vector<8x512xf32>
      %97 = arith.addf %90, %96 : vector<8x512xf32>
      %98 = vector.extract_strided_slice %arg7 {offsets = [0, 511], sizes = [4, 1], strides = [1, 1]} : vector<4x512xf32> to vector<4x1xf32>
      %99 = vector.extract_strided_slice %arg7 {offsets = [0, 0], sizes = [4, 511], strides = [1, 1]} : vector<4x512xf32> to vector<4x511xf32>
      %100 = tpu.concatenate %98, %99 in 1 : vector<4x1xf32>, vector<4x511xf32> -> vector<4x512xf32>
      %101 = vector.extract_strided_slice %100 {offsets = [0, 0], sizes = [1, 512], strides = [1, 1]} : vector<4x512xf32> to vector<1x512xf32>
      %102 = vector.shape_cast %101 : vector<1x512xf32> to vector<1x512xf32>
      %103 = vector.broadcast %102 : vector<1x512xf32> to vector<8x512xf32>
      %c3_53 = arith.constant 3 : index
      %c0_54 = arith.constant 0 : index
      %c0_55 = arith.constant 0 : index
      %c0_56 = arith.constant 0 : index
      %104 = vector.load %arg1[%c3_53, %c0_54, %c0_55, %c0_56] : memref<9x4x8x512xf32, #tpu.memory_space<vmem>>, vector<1x1x8x512xf32>
      %105 = vector.shape_cast %104 : vector<1x1x8x512xf32> to vector<8x512xf32>
      %106 = arith.mulf %105, %103 : vector<8x512xf32>
      %107 = vector.extract_strided_slice %100 {offsets = [1, 0], sizes = [1, 512], strides = [1, 1]} : vector<4x512xf32> to vector<1x512xf32>
      %108 = vector.shape_cast %107 : vector<1x512xf32> to vector<1x512xf32>
      %109 = vector.broadcast %108 : vector<1x512xf32> to vector<8x512xf32>
      %c3_57 = arith.constant 3 : index
      %c1_58 = arith.constant 1 : index
      %c0_59 = arith.constant 0 : index
      %c0_60 = arith.constant 0 : index
      %110 = vector.load %arg1[%c3_57, %c1_58, %c0_59, %c0_60] : memref<9x4x8x512xf32, #tpu.memory_space<vmem>>, vector<1x1x8x512xf32>
      %111 = vector.shape_cast %110 : vector<1x1x8x512xf32> to vector<8x512xf32>
      %112 = arith.mulf %111, %109 : vector<8x512xf32>
      %113 = arith.addf %106, %112 : vector<8x512xf32>
      %114 = vector.extract_strided_slice %100 {offsets = [2, 0], sizes = [1, 512], strides = [1, 1]} : vector<4x512xf32> to vector<1x512xf32>
      %115 = vector.shape_cast %114 : vector<1x512xf32> to vector<1x512xf32>
      %116 = vector.broadcast %115 : vector<1x512xf32> to vector<8x512xf32>
      %c3_61 = arith.constant 3 : index
      %c2_62 = arith.constant 2 : index
      %c0_63 = arith.constant 0 : index
      %c0_64 = arith.constant 0 : index
      %117 = vector.load %arg1[%c3_61, %c2_62, %c0_63, %c0_64] : memref<9x4x8x512xf32, #tpu.memory_space<vmem>>, vector<1x1x8x512xf32>
      %118 = vector.shape_cast %117 : vector<1x1x8x512xf32> to vector<8x512xf32>
      %119 = arith.mulf %118, %116 : vector<8x512xf32>
      %120 = arith.addf %113, %119 : vector<8x512xf32>
      %121 = vector.extract_strided_slice %100 {offsets = [3, 0], sizes = [1, 512], strides = [1, 1]} : vector<4x512xf32> to vector<1x512xf32>
      %122 = vector.shape_cast %121 : vector<1x512xf32> to vector<1x512xf32>
      %123 = vector.broadcast %122 : vector<1x512xf32> to vector<8x512xf32>
      %c3_65 = arith.constant 3 : index
      %c3_66 = arith.constant 3 : index
      %c0_67 = arith.constant 0 : index
      %c0_68 = arith.constant 0 : index
      %124 = vector.load %arg1[%c3_65, %c3_66, %c0_67, %c0_68] : memref<9x4x8x512xf32, #tpu.memory_space<vmem>>, vector<1x1x8x512xf32>
      %125 = vector.shape_cast %124 : vector<1x1x8x512xf32> to vector<8x512xf32>
      %126 = arith.mulf %125, %123 : vector<8x512xf32>
      %127 = arith.addf %120, %126 : vector<8x512xf32>
      %128 = vector.extract_strided_slice %arg7 {offsets = [0, 0], sizes = [1, 512], strides = [1, 1]} : vector<4x512xf32> to vector<1x512xf32>
      %129 = vector.shape_cast %128 : vector<1x512xf32> to vector<1x512xf32>
      %130 = vector.broadcast %129 : vector<1x512xf32> to vector<8x512xf32>
      %c4 = arith.constant 4 : index
      %c0_69 = arith.constant 0 : index
      %c0_70 = arith.constant 0 : index
      %c0_71 = arith.constant 0 : index
      %131 = vector.load %arg1[%c4, %c0_69, %c0_70, %c0_71] : memref<9x4x8x512xf32, #tpu.memory_space<vmem>>, vector<1x1x8x512xf32>
      %132 = vector.shape_cast %131 : vector<1x1x8x512xf32> to vector<8x512xf32>
      %133 = arith.mulf %132, %130 : vector<8x512xf32>
      %134 = vector.extract_strided_slice %arg7 {offsets = [1, 0], sizes = [1, 512], strides = [1, 1]} : vector<4x512xf32> to vector<1x512xf32>
      %135 = vector.shape_cast %134 : vector<1x512xf32> to vector<1x512xf32>
      %136 = vector.broadcast %135 : vector<1x512xf32> to vector<8x512xf32>
      %c4_72 = arith.constant 4 : index
      %c1_73 = arith.constant 1 : index
      %c0_74 = arith.constant 0 : index
      %c0_75 = arith.constant 0 : index
      %137 = vector.load %arg1[%c4_72, %c1_73, %c0_74, %c0_75] : memref<9x4x8x512xf32, #tpu.memory_space<vmem>>, vector<1x1x8x512xf32>
      %138 = vector.shape_cast %137 : vector<1x1x8x512xf32> to vector<8x512xf32>
      %139 = arith.mulf %138, %136 : vector<8x512xf32>
      %140 = arith.addf %133, %139 : vector<8x512xf32>
      %141 = vector.extract_strided_slice %arg7 {offsets = [2, 0], sizes = [1, 512], strides = [1, 1]} : vector<4x512xf32> to vector<1x512xf32>
      %142 = vector.shape_cast %141 : vector<1x512xf32> to vector<1x512xf32>
      %143 = vector.broadcast %142 : vector<1x512xf32> to vector<8x512xf32>
      %c4_76 = arith.constant 4 : index
      %c2_77 = arith.constant 2 : index
      %c0_78 = arith.constant 0 : index
      %c0_79 = arith.constant 0 : index
      %144 = vector.load %arg1[%c4_76, %c2_77, %c0_78, %c0_79] : memref<9x4x8x512xf32, #tpu.memory_space<vmem>>, vector<1x1x8x512xf32>
      %145 = vector.shape_cast %144 : vector<1x1x8x512xf32> to vector<8x512xf32>
      %146 = arith.mulf %145, %143 : vector<8x512xf32>
      %147 = arith.addf %140, %146 : vector<8x512xf32>
      %148 = vector.extract_strided_slice %arg7 {offsets = [3, 0], sizes = [1, 512], strides = [1, 1]} : vector<4x512xf32> to vector<1x512xf32>
      %149 = vector.shape_cast %148 : vector<1x512xf32> to vector<1x512xf32>
      %150 = vector.broadcast %149 : vector<1x512xf32> to vector<8x512xf32>
      %c4_80 = arith.constant 4 : index
      %c3_81 = arith.constant 3 : index
      %c0_82 = arith.constant 0 : index
      %c0_83 = arith.constant 0 : index
      %151 = vector.load %arg1[%c4_80, %c3_81, %c0_82, %c0_83] : memref<9x4x8x512xf32, #tpu.memory_space<vmem>>, vector<1x1x8x512xf32>
      %152 = vector.shape_cast %151 : vector<1x1x8x512xf32> to vector<8x512xf32>
      %153 = arith.mulf %152, %150 : vector<8x512xf32>
      %154 = arith.addf %147, %153 : vector<8x512xf32>
      %155 = vector.extract_strided_slice %arg7 {offsets = [0, 1], sizes = [4, 511], strides = [1, 1]} : vector<4x512xf32> to vector<4x511xf32>
      %156 = vector.extract_strided_slice %arg7 {offsets = [0, 0], sizes = [4, 1], strides = [1, 1]} : vector<4x512xf32> to vector<4x1xf32>
      %157 = tpu.concatenate %155, %156 in 1 : vector<4x511xf32>, vector<4x1xf32> -> vector<4x512xf32>
      %158 = vector.extract_strided_slice %157 {offsets = [0, 0], sizes = [1, 512], strides = [1, 1]} : vector<4x512xf32> to vector<1x512xf32>
      %159 = vector.shape_cast %158 : vector<1x512xf32> to vector<1x512xf32>
      %160 = vector.broadcast %159 : vector<1x512xf32> to vector<8x512xf32>
      %c5 = arith.constant 5 : index
      %c0_84 = arith.constant 0 : index
      %c0_85 = arith.constant 0 : index
      %c0_86 = arith.constant 0 : index
      %161 = vector.load %arg1[%c5, %c0_84, %c0_85, %c0_86] : memref<9x4x8x512xf32, #tpu.memory_space<vmem>>, vector<1x1x8x512xf32>
      %162 = vector.shape_cast %161 : vector<1x1x8x512xf32> to vector<8x512xf32>
      %163 = arith.mulf %162, %160 : vector<8x512xf32>
      %164 = vector.extract_strided_slice %157 {offsets = [1, 0], sizes = [1, 512], strides = [1, 1]} : vector<4x512xf32> to vector<1x512xf32>
      %165 = vector.shape_cast %164 : vector<1x512xf32> to vector<1x512xf32>
      %166 = vector.broadcast %165 : vector<1x512xf32> to vector<8x512xf32>
      %c5_87 = arith.constant 5 : index
      %c1_88 = arith.constant 1 : index
      %c0_89 = arith.constant 0 : index
      %c0_90 = arith.constant 0 : index
      %167 = vector.load %arg1[%c5_87, %c1_88, %c0_89, %c0_90] : memref<9x4x8x512xf32, #tpu.memory_space<vmem>>, vector<1x1x8x512xf32>
      %168 = vector.shape_cast %167 : vector<1x1x8x512xf32> to vector<8x512xf32>
      %169 = arith.mulf %168, %166 : vector<8x512xf32>
      %170 = arith.addf %163, %169 : vector<8x512xf32>
      %171 = vector.extract_strided_slice %157 {offsets = [2, 0], sizes = [1, 512], strides = [1, 1]} : vector<4x512xf32> to vector<1x512xf32>
      %172 = vector.shape_cast %171 : vector<1x512xf32> to vector<1x512xf32>
      %173 = vector.broadcast %172 : vector<1x512xf32> to vector<8x512xf32>
      %c5_91 = arith.constant 5 : index
      %c2_92 = arith.constant 2 : index
      %c0_93 = arith.constant 0 : index
      %c0_94 = arith.constant 0 : index
      %174 = vector.load %arg1[%c5_91, %c2_92, %c0_93, %c0_94] : memref<9x4x8x512xf32, #tpu.memory_space<vmem>>, vector<1x1x8x512xf32>
      %175 = vector.shape_cast %174 : vector<1x1x8x512xf32> to vector<8x512xf32>
      %176 = arith.mulf %175, %173 : vector<8x512xf32>
      %177 = arith.addf %170, %176 : vector<8x512xf32>
      %178 = vector.extract_strided_slice %157 {offsets = [3, 0], sizes = [1, 512], strides = [1, 1]} : vector<4x512xf32> to vector<1x512xf32>
      %179 = vector.shape_cast %178 : vector<1x512xf32> to vector<1x512xf32>
      %180 = vector.broadcast %179 : vector<1x512xf32> to vector<8x512xf32>
      %c5_95 = arith.constant 5 : index
      %c3_96 = arith.constant 3 : index
      %c0_97 = arith.constant 0 : index
      %c0_98 = arith.constant 0 : index
      %181 = vector.load %arg1[%c5_95, %c3_96, %c0_97, %c0_98] : memref<9x4x8x512xf32, #tpu.memory_space<vmem>>, vector<1x1x8x512xf32>
      %182 = vector.shape_cast %181 : vector<1x1x8x512xf32> to vector<8x512xf32>
      %183 = arith.mulf %182, %180 : vector<8x512xf32>
      %184 = arith.addf %177, %183 : vector<8x512xf32>
      %185 = vector.extract_strided_slice %arg7 {offsets = [0, 15], sizes = [4, 497], strides = [1, 1]} : vector<4x512xf32> to vector<4x497xf32>
      %186 = vector.extract_strided_slice %arg7 {offsets = [0, 0], sizes = [4, 15], strides = [1, 1]} : vector<4x512xf32> to vector<4x15xf32>
      %187 = tpu.concatenate %185, %186 in 1 : vector<4x497xf32>, vector<4x15xf32> -> vector<4x512xf32>
      %188 = vector.extract_strided_slice %187 {offsets = [0, 0], sizes = [1, 512], strides = [1, 1]} : vector<4x512xf32> to vector<1x512xf32>
      %189 = vector.shape_cast %188 : vector<1x512xf32> to vector<1x512xf32>
      %190 = vector.broadcast %189 : vector<1x512xf32> to vector<8x512xf32>
      %c6 = arith.constant 6 : index
      %c0_99 = arith.constant 0 : index
      %c0_100 = arith.constant 0 : index
      %c0_101 = arith.constant 0 : index
      %191 = vector.load %arg1[%c6, %c0_99, %c0_100, %c0_101] : memref<9x4x8x512xf32, #tpu.memory_space<vmem>>, vector<1x1x8x512xf32>
      %192 = vector.shape_cast %191 : vector<1x1x8x512xf32> to vector<8x512xf32>
      %193 = arith.mulf %192, %190 : vector<8x512xf32>
      %194 = vector.extract_strided_slice %187 {offsets = [1, 0], sizes = [1, 512], strides = [1, 1]} : vector<4x512xf32> to vector<1x512xf32>
      %195 = vector.shape_cast %194 : vector<1x512xf32> to vector<1x512xf32>
      %196 = vector.broadcast %195 : vector<1x512xf32> to vector<8x512xf32>
      %c6_102 = arith.constant 6 : index
      %c1_103 = arith.constant 1 : index
      %c0_104 = arith.constant 0 : index
      %c0_105 = arith.constant 0 : index
      %197 = vector.load %arg1[%c6_102, %c1_103, %c0_104, %c0_105] : memref<9x4x8x512xf32, #tpu.memory_space<vmem>>, vector<1x1x8x512xf32>
      %198 = vector.shape_cast %197 : vector<1x1x8x512xf32> to vector<8x512xf32>
      %199 = arith.mulf %198, %196 : vector<8x512xf32>
      %200 = arith.addf %193, %199 : vector<8x512xf32>
      %201 = vector.extract_strided_slice %187 {offsets = [2, 0], sizes = [1, 512], strides = [1, 1]} : vector<4x512xf32> to vector<1x512xf32>
      %202 = vector.shape_cast %201 : vector<1x512xf32> to vector<1x512xf32>
      %203 = vector.broadcast %202 : vector<1x512xf32> to vector<8x512xf32>
      %c6_106 = arith.constant 6 : index
      %c2_107 = arith.constant 2 : index
      %c0_108 = arith.constant 0 : index
      %c0_109 = arith.constant 0 : index
      %204 = vector.load %arg1[%c6_106, %c2_107, %c0_108, %c0_109] : memref<9x4x8x512xf32, #tpu.memory_space<vmem>>, vector<1x1x8x512xf32>
      %205 = vector.shape_cast %204 : vector<1x1x8x512xf32> to vector<8x512xf32>
      %206 = arith.mulf %205, %203 : vector<8x512xf32>
      %207 = arith.addf %200, %206 : vector<8x512xf32>
      %208 = vector.extract_strided_slice %187 {offsets = [3, 0], sizes = [1, 512], strides = [1, 1]} : vector<4x512xf32> to vector<1x512xf32>
      %209 = vector.shape_cast %208 : vector<1x512xf32> to vector<1x512xf32>
      %210 = vector.broadcast %209 : vector<1x512xf32> to vector<8x512xf32>
      %c6_110 = arith.constant 6 : index
      %c3_111 = arith.constant 3 : index
      %c0_112 = arith.constant 0 : index
      %c0_113 = arith.constant 0 : index
      %211 = vector.load %arg1[%c6_110, %c3_111, %c0_112, %c0_113] : memref<9x4x8x512xf32, #tpu.memory_space<vmem>>, vector<1x1x8x512xf32>
      %212 = vector.shape_cast %211 : vector<1x1x8x512xf32> to vector<8x512xf32>
      %213 = arith.mulf %212, %210 : vector<8x512xf32>
      %214 = arith.addf %207, %213 : vector<8x512xf32>
      %215 = vector.extract_strided_slice %arg7 {offsets = [0, 16], sizes = [4, 496], strides = [1, 1]} : vector<4x512xf32> to vector<4x496xf32>
      %216 = vector.extract_strided_slice %arg7 {offsets = [0, 0], sizes = [4, 16], strides = [1, 1]} : vector<4x512xf32> to vector<4x16xf32>
      %217 = tpu.concatenate %215, %216 in 1 : vector<4x496xf32>, vector<4x16xf32> -> vector<4x512xf32>
      %218 = vector.extract_strided_slice %217 {offsets = [0, 0], sizes = [1, 512], strides = [1, 1]} : vector<4x512xf32> to vector<1x512xf32>
      %219 = vector.shape_cast %218 : vector<1x512xf32> to vector<1x512xf32>
      %220 = vector.broadcast %219 : vector<1x512xf32> to vector<8x512xf32>
      %c7 = arith.constant 7 : index
      %c0_114 = arith.constant 0 : index
      %c0_115 = arith.constant 0 : index
      %c0_116 = arith.constant 0 : index
      %221 = vector.load %arg1[%c7, %c0_114, %c0_115, %c0_116] : memref<9x4x8x512xf32, #tpu.memory_space<vmem>>, vector<1x1x8x512xf32>
      %222 = vector.shape_cast %221 : vector<1x1x8x512xf32> to vector<8x512xf32>
      %223 = arith.mulf %222, %220 : vector<8x512xf32>
      %224 = vector.extract_strided_slice %217 {offsets = [1, 0], sizes = [1, 512], strides = [1, 1]} : vector<4x512xf32> to vector<1x512xf32>
      %225 = vector.shape_cast %224 : vector<1x512xf32> to vector<1x512xf32>
      %226 = vector.broadcast %225 : vector<1x512xf32> to vector<8x512xf32>
      %c7_117 = arith.constant 7 : index
      %c1_118 = arith.constant 1 : index
      %c0_119 = arith.constant 0 : index
      %c0_120 = arith.constant 0 : index
      %227 = vector.load %arg1[%c7_117, %c1_118, %c0_119, %c0_120] : memref<9x4x8x512xf32, #tpu.memory_space<vmem>>, vector<1x1x8x512xf32>
      %228 = vector.shape_cast %227 : vector<1x1x8x512xf32> to vector<8x512xf32>
      %229 = arith.mulf %228, %226 : vector<8x512xf32>
      %230 = arith.addf %223, %229 : vector<8x512xf32>
      %231 = vector.extract_strided_slice %217 {offsets = [2, 0], sizes = [1, 512], strides = [1, 1]} : vector<4x512xf32> to vector<1x512xf32>
      %232 = vector.shape_cast %231 : vector<1x512xf32> to vector<1x512xf32>
      %233 = vector.broadcast %232 : vector<1x512xf32> to vector<8x512xf32>
      %c7_121 = arith.constant 7 : index
      %c2_122 = arith.constant 2 : index
      %c0_123 = arith.constant 0 : index
      %c0_124 = arith.constant 0 : index
      %234 = vector.load %arg1[%c7_121, %c2_122, %c0_123, %c0_124] : memref<9x4x8x512xf32, #tpu.memory_space<vmem>>, vector<1x1x8x512xf32>
      %235 = vector.shape_cast %234 : vector<1x1x8x512xf32> to vector<8x512xf32>
      %236 = arith.mulf %235, %233 : vector<8x512xf32>
      %237 = arith.addf %230, %236 : vector<8x512xf32>
      %238 = vector.extract_strided_slice %217 {offsets = [3, 0], sizes = [1, 512], strides = [1, 1]} : vector<4x512xf32> to vector<1x512xf32>
      %239 = vector.shape_cast %238 : vector<1x512xf32> to vector<1x512xf32>
      %240 = vector.broadcast %239 : vector<1x512xf32> to vector<8x512xf32>
      %c7_125 = arith.constant 7 : index
      %c3_126 = arith.constant 3 : index
      %c0_127 = arith.constant 0 : index
      %c0_128 = arith.constant 0 : index
      %241 = vector.load %arg1[%c7_125, %c3_126, %c0_127, %c0_128] : memref<9x4x8x512xf32, #tpu.memory_space<vmem>>, vector<1x1x8x512xf32>
      %242 = vector.shape_cast %241 : vector<1x1x8x512xf32> to vector<8x512xf32>
      %243 = arith.mulf %242, %240 : vector<8x512xf32>
      %244 = arith.addf %237, %243 : vector<8x512xf32>
      %245 = vector.extract_strided_slice %arg7 {offsets = [0, 17], sizes = [4, 495], strides = [1, 1]} : vector<4x512xf32> to vector<4x495xf32>
      %246 = vector.extract_strided_slice %arg7 {offsets = [0, 0], sizes = [4, 17], strides = [1, 1]} : vector<4x512xf32> to vector<4x17xf32>
      %247 = tpu.concatenate %245, %246 in 1 : vector<4x495xf32>, vector<4x17xf32> -> vector<4x512xf32>
      %248 = vector.extract_strided_slice %247 {offsets = [0, 0], sizes = [1, 512], strides = [1, 1]} : vector<4x512xf32> to vector<1x512xf32>
      %249 = vector.shape_cast %248 : vector<1x512xf32> to vector<1x512xf32>
      %250 = vector.broadcast %249 : vector<1x512xf32> to vector<8x512xf32>
      %c8 = arith.constant 8 : index
      %c0_129 = arith.constant 0 : index
      %c0_130 = arith.constant 0 : index
      %c0_131 = arith.constant 0 : index
      %251 = vector.load %arg1[%c8, %c0_129, %c0_130, %c0_131] : memref<9x4x8x512xf32, #tpu.memory_space<vmem>>, vector<1x1x8x512xf32>
      %252 = vector.shape_cast %251 : vector<1x1x8x512xf32> to vector<8x512xf32>
      %253 = arith.mulf %252, %250 : vector<8x512xf32>
      %254 = vector.extract_strided_slice %247 {offsets = [1, 0], sizes = [1, 512], strides = [1, 1]} : vector<4x512xf32> to vector<1x512xf32>
      %255 = vector.shape_cast %254 : vector<1x512xf32> to vector<1x512xf32>
      %256 = vector.broadcast %255 : vector<1x512xf32> to vector<8x512xf32>
      %c8_132 = arith.constant 8 : index
      %c1_133 = arith.constant 1 : index
      %c0_134 = arith.constant 0 : index
      %c0_135 = arith.constant 0 : index
      %257 = vector.load %arg1[%c8_132, %c1_133, %c0_134, %c0_135] : memref<9x4x8x512xf32, #tpu.memory_space<vmem>>, vector<1x1x8x512xf32>
      %258 = vector.shape_cast %257 : vector<1x1x8x512xf32> to vector<8x512xf32>
      %259 = arith.mulf %258, %256 : vector<8x512xf32>
      %260 = arith.addf %253, %259 : vector<8x512xf32>
      %261 = vector.extract_strided_slice %247 {offsets = [2, 0], sizes = [1, 512], strides = [1, 1]} : vector<4x512xf32> to vector<1x512xf32>
      %262 = vector.shape_cast %261 : vector<1x512xf32> to vector<1x512xf32>
      %263 = vector.broadcast %262 : vector<1x512xf32> to vector<8x512xf32>
      %c8_136 = arith.constant 8 : index
      %c2_137 = arith.constant 2 : index
      %c0_138 = arith.constant 0 : index
      %c0_139 = arith.constant 0 : index
      %264 = vector.load %arg1[%c8_136, %c2_137, %c0_138, %c0_139] : memref<9x4x8x512xf32, #tpu.memory_space<vmem>>, vector<1x1x8x512xf32>
      %265 = vector.shape_cast %264 : vector<1x1x8x512xf32> to vector<8x512xf32>
      %266 = arith.mulf %265, %263 : vector<8x512xf32>
      %267 = arith.addf %260, %266 : vector<8x512xf32>
      %268 = vector.extract_strided_slice %247 {offsets = [3, 0], sizes = [1, 512], strides = [1, 1]} : vector<4x512xf32> to vector<1x512xf32>
      %269 = vector.shape_cast %268 : vector<1x512xf32> to vector<1x512xf32>
      %270 = vector.broadcast %269 : vector<1x512xf32> to vector<8x512xf32>
      %c8_140 = arith.constant 8 : index
      %c3_141 = arith.constant 3 : index
      %c0_142 = arith.constant 0 : index
      %c0_143 = arith.constant 0 : index
      %271 = vector.load %arg1[%c8_140, %c3_141, %c0_142, %c0_143] : memref<9x4x8x512xf32, #tpu.memory_space<vmem>>, vector<1x1x8x512xf32>
      %272 = vector.shape_cast %271 : vector<1x1x8x512xf32> to vector<8x512xf32>
      %273 = arith.mulf %272, %270 : vector<8x512xf32>
      %274 = arith.addf %267, %273 : vector<8x512xf32>
      %275 = arith.addf %7, %37 : vector<8x512xf32>
      %276 = arith.addf %67, %97 : vector<8x512xf32>
      %277 = arith.addf %127, %154 : vector<8x512xf32>
      %278 = arith.addf %184, %214 : vector<8x512xf32>
      %279 = arith.addf %244, %274 : vector<8x512xf32>
      %280 = arith.addf %275, %276 : vector<8x512xf32>
      %281 = arith.addf %277, %278 : vector<8x512xf32>
      %282 = arith.addf %280, %281 : vector<8x512xf32>
      %283 = arith.addf %282, %279 : vector<8x512xf32>
      %cst = arith.constant 0.000000e+00 : f32
      %284 = vector.broadcast %cst : f32 to vector<8x512xf32>
      %285 = arith.maximumf %283, %284 : vector<8x512xf32>
      %286 = vector.extract_strided_slice %285 {offsets = [0, 495], sizes = [8, 17], strides = [1, 1]} : vector<8x512xf32> to vector<8x17xf32>
      %287 = vector.extract_strided_slice %285 {offsets = [0, 0], sizes = [8, 495], strides = [1, 1]} : vector<8x512xf32> to vector<8x495xf32>
      %288 = tpu.concatenate %286, %287 in 1 : vector<8x17xf32>, vector<8x495xf32> -> vector<8x512xf32>
      %289 = vector.extract_strided_slice %288 {offsets = [0, 0], sizes = [1, 512], strides = [1, 1]} : vector<8x512xf32> to vector<1x512xf32>
      %290 = vector.shape_cast %289 : vector<1x512xf32> to vector<1x512xf32>
      %291 = vector.broadcast %290 : vector<1x512xf32> to vector<4x512xf32>
      %c0_144 = arith.constant 0 : index
      %c0_145 = arith.constant 0 : index
      %c0_146 = arith.constant 0 : index
      %c0_147 = arith.constant 0 : index
      %292 = vector.load %arg2[%c0_144, %c0_145, %c0_146, %c0_147] : memref<9x8x4x512xf32, #tpu.memory_space<vmem>>, vector<1x1x4x512xf32>
      %293 = vector.shape_cast %292 : vector<1x1x4x512xf32> to vector<4x512xf32>
      %294 = arith.mulf %293, %291 : vector<4x512xf32>
      %295 = vector.extract_strided_slice %288 {offsets = [1, 0], sizes = [1, 512], strides = [1, 1]} : vector<8x512xf32> to vector<1x512xf32>
      %296 = vector.shape_cast %295 : vector<1x512xf32> to vector<1x512xf32>
      %297 = vector.broadcast %296 : vector<1x512xf32> to vector<4x512xf32>
      %c0_148 = arith.constant 0 : index
      %c1_149 = arith.constant 1 : index
      %c0_150 = arith.constant 0 : index
      %c0_151 = arith.constant 0 : index
      %298 = vector.load %arg2[%c0_148, %c1_149, %c0_150, %c0_151] : memref<9x8x4x512xf32, #tpu.memory_space<vmem>>, vector<1x1x4x512xf32>
      %299 = vector.shape_cast %298 : vector<1x1x4x512xf32> to vector<4x512xf32>
      %300 = arith.mulf %299, %297 : vector<4x512xf32>
      %301 = arith.addf %294, %300 : vector<4x512xf32>
      %302 = vector.extract_strided_slice %288 {offsets = [2, 0], sizes = [1, 512], strides = [1, 1]} : vector<8x512xf32> to vector<1x512xf32>
      %303 = vector.shape_cast %302 : vector<1x512xf32> to vector<1x512xf32>
      %304 = vector.broadcast %303 : vector<1x512xf32> to vector<4x512xf32>
      %c0_152 = arith.constant 0 : index
      %c2_153 = arith.constant 2 : index
      %c0_154 = arith.constant 0 : index
      %c0_155 = arith.constant 0 : index
      %305 = vector.load %arg2[%c0_152, %c2_153, %c0_154, %c0_155] : memref<9x8x4x512xf32, #tpu.memory_space<vmem>>, vector<1x1x4x512xf32>
      %306 = vector.shape_cast %305 : vector<1x1x4x512xf32> to vector<4x512xf32>
      %307 = arith.mulf %306, %304 : vector<4x512xf32>
      %308 = arith.addf %301, %307 : vector<4x512xf32>
      %309 = vector.extract_strided_slice %288 {offsets = [3, 0], sizes = [1, 512], strides = [1, 1]} : vector<8x512xf32> to vector<1x512xf32>
      %310 = vector.shape_cast %309 : vector<1x512xf32> to vector<1x512xf32>
      %311 = vector.broadcast %310 : vector<1x512xf32> to vector<4x512xf32>
      %c0_156 = arith.constant 0 : index
      %c3_157 = arith.constant 3 : index
      %c0_158 = arith.constant 0 : index
      %c0_159 = arith.constant 0 : index
      %312 = vector.load %arg2[%c0_156, %c3_157, %c0_158, %c0_159] : memref<9x8x4x512xf32, #tpu.memory_space<vmem>>, vector<1x1x4x512xf32>
      %313 = vector.shape_cast %312 : vector<1x1x4x512xf32> to vector<4x512xf32>
      %314 = arith.mulf %313, %311 : vector<4x512xf32>
      %315 = arith.addf %308, %314 : vector<4x512xf32>
      %316 = vector.extract_strided_slice %288 {offsets = [4, 0], sizes = [1, 512], strides = [1, 1]} : vector<8x512xf32> to vector<1x512xf32>
      %317 = vector.shape_cast %316 : vector<1x512xf32> to vector<1x512xf32>
      %318 = vector.broadcast %317 : vector<1x512xf32> to vector<4x512xf32>
      %c0_160 = arith.constant 0 : index
      %c4_161 = arith.constant 4 : index
      %c0_162 = arith.constant 0 : index
      %c0_163 = arith.constant 0 : index
      %319 = vector.load %arg2[%c0_160, %c4_161, %c0_162, %c0_163] : memref<9x8x4x512xf32, #tpu.memory_space<vmem>>, vector<1x1x4x512xf32>
      %320 = vector.shape_cast %319 : vector<1x1x4x512xf32> to vector<4x512xf32>
      %321 = arith.mulf %320, %318 : vector<4x512xf32>
      %322 = arith.addf %315, %321 : vector<4x512xf32>
      %323 = vector.extract_strided_slice %288 {offsets = [5, 0], sizes = [1, 512], strides = [1, 1]} : vector<8x512xf32> to vector<1x512xf32>
      %324 = vector.shape_cast %323 : vector<1x512xf32> to vector<1x512xf32>
      %325 = vector.broadcast %324 : vector<1x512xf32> to vector<4x512xf32>
      %c0_164 = arith.constant 0 : index
      %c5_165 = arith.constant 5 : index
      %c0_166 = arith.constant 0 : index
      %c0_167 = arith.constant 0 : index
      %326 = vector.load %arg2[%c0_164, %c5_165, %c0_166, %c0_167] : memref<9x8x4x512xf32, #tpu.memory_space<vmem>>, vector<1x1x4x512xf32>
      %327 = vector.shape_cast %326 : vector<1x1x4x512xf32> to vector<4x512xf32>
      %328 = arith.mulf %327, %325 : vector<4x512xf32>
      %329 = arith.addf %322, %328 : vector<4x512xf32>
      %330 = vector.extract_strided_slice %288 {offsets = [6, 0], sizes = [1, 512], strides = [1, 1]} : vector<8x512xf32> to vector<1x512xf32>
      %331 = vector.shape_cast %330 : vector<1x512xf32> to vector<1x512xf32>
      %332 = vector.broadcast %331 : vector<1x512xf32> to vector<4x512xf32>
      %c0_168 = arith.constant 0 : index
      %c6_169 = arith.constant 6 : index
      %c0_170 = arith.constant 0 : index
      %c0_171 = arith.constant 0 : index
      %333 = vector.load %arg2[%c0_168, %c6_169, %c0_170, %c0_171] : memref<9x8x4x512xf32, #tpu.memory_space<vmem>>, vector<1x1x4x512xf32>
      %334 = vector.shape_cast %333 : vector<1x1x4x512xf32> to vector<4x512xf32>
      %335 = arith.mulf %334, %332 : vector<4x512xf32>
      %336 = arith.addf %329, %335 : vector<4x512xf32>
      %337 = vector.extract_strided_slice %288 {offsets = [7, 0], sizes = [1, 512], strides = [1, 1]} : vector<8x512xf32> to vector<1x512xf32>
      %338 = vector.shape_cast %337 : vector<1x512xf32> to vector<1x512xf32>
      %339 = vector.broadcast %338 : vector<1x512xf32> to vector<4x512xf32>
      %c0_172 = arith.constant 0 : index
      %c7_173 = arith.constant 7 : index
      %c0_174 = arith.constant 0 : index
      %c0_175 = arith.constant 0 : index
      %340 = vector.load %arg2[%c0_172, %c7_173, %c0_174, %c0_175] : memref<9x8x4x512xf32, #tpu.memory_space<vmem>>, vector<1x1x4x512xf32>
      %341 = vector.shape_cast %340 : vector<1x1x4x512xf32> to vector<4x512xf32>
      %342 = arith.mulf %341, %339 : vector<4x512xf32>
      %343 = arith.addf %336, %342 : vector<4x512xf32>
      %344 = vector.extract_strided_slice %285 {offsets = [0, 496], sizes = [8, 16], strides = [1, 1]} : vector<8x512xf32> to vector<8x16xf32>
      %345 = vector.extract_strided_slice %285 {offsets = [0, 0], sizes = [8, 496], strides = [1, 1]} : vector<8x512xf32> to vector<8x496xf32>
      %346 = tpu.concatenate %344, %345 in 1 : vector<8x16xf32>, vector<8x496xf32> -> vector<8x512xf32>
      %347 = vector.extract_strided_slice %346 {offsets = [0, 0], sizes = [1, 512], strides = [1, 1]} : vector<8x512xf32> to vector<1x512xf32>
      %348 = vector.shape_cast %347 : vector<1x512xf32> to vector<1x512xf32>
      %349 = vector.broadcast %348 : vector<1x512xf32> to vector<4x512xf32>
      %c1_176 = arith.constant 1 : index
      %c0_177 = arith.constant 0 : index
      %c0_178 = arith.constant 0 : index
      %c0_179 = arith.constant 0 : index
      %350 = vector.load %arg2[%c1_176, %c0_177, %c0_178, %c0_179] : memref<9x8x4x512xf32, #tpu.memory_space<vmem>>, vector<1x1x4x512xf32>
      %351 = vector.shape_cast %350 : vector<1x1x4x512xf32> to vector<4x512xf32>
      %352 = arith.mulf %351, %349 : vector<4x512xf32>
      %353 = vector.extract_strided_slice %346 {offsets = [1, 0], sizes = [1, 512], strides = [1, 1]} : vector<8x512xf32> to vector<1x512xf32>
      %354 = vector.shape_cast %353 : vector<1x512xf32> to vector<1x512xf32>
      %355 = vector.broadcast %354 : vector<1x512xf32> to vector<4x512xf32>
      %c1_180 = arith.constant 1 : index
      %c1_181 = arith.constant 1 : index
      %c0_182 = arith.constant 0 : index
      %c0_183 = arith.constant 0 : index
      %356 = vector.load %arg2[%c1_180, %c1_181, %c0_182, %c0_183] : memref<9x8x4x512xf32, #tpu.memory_space<vmem>>, vector<1x1x4x512xf32>
      %357 = vector.shape_cast %356 : vector<1x1x4x512xf32> to vector<4x512xf32>
      %358 = arith.mulf %357, %355 : vector<4x512xf32>
      %359 = arith.addf %352, %358 : vector<4x512xf32>
      %360 = vector.extract_strided_slice %346 {offsets = [2, 0], sizes = [1, 512], strides = [1, 1]} : vector<8x512xf32> to vector<1x512xf32>
      %361 = vector.shape_cast %360 : vector<1x512xf32> to vector<1x512xf32>
      %362 = vector.broadcast %361 : vector<1x512xf32> to vector<4x512xf32>
      %c1_184 = arith.constant 1 : index
      %c2_185 = arith.constant 2 : index
      %c0_186 = arith.constant 0 : index
      %c0_187 = arith.constant 0 : index
      %363 = vector.load %arg2[%c1_184, %c2_185, %c0_186, %c0_187] : memref<9x8x4x512xf32, #tpu.memory_space<vmem>>, vector<1x1x4x512xf32>
      %364 = vector.shape_cast %363 : vector<1x1x4x512xf32> to vector<4x512xf32>
      %365 = arith.mulf %364, %362 : vector<4x512xf32>
      %366 = arith.addf %359, %365 : vector<4x512xf32>
      %367 = vector.extract_strided_slice %346 {offsets = [3, 0], sizes = [1, 512], strides = [1, 1]} : vector<8x512xf32> to vector<1x512xf32>
      %368 = vector.shape_cast %367 : vector<1x512xf32> to vector<1x512xf32>
      %369 = vector.broadcast %368 : vector<1x512xf32> to vector<4x512xf32>
      %c1_188 = arith.constant 1 : index
      %c3_189 = arith.constant 3 : index
      %c0_190 = arith.constant 0 : index
      %c0_191 = arith.constant 0 : index
      %370 = vector.load %arg2[%c1_188, %c3_189, %c0_190, %c0_191] : memref<9x8x4x512xf32, #tpu.memory_space<vmem>>, vector<1x1x4x512xf32>
      %371 = vector.shape_cast %370 : vector<1x1x4x512xf32> to vector<4x512xf32>
      %372 = arith.mulf %371, %369 : vector<4x512xf32>
      %373 = arith.addf %366, %372 : vector<4x512xf32>
      %374 = vector.extract_strided_slice %346 {offsets = [4, 0], sizes = [1, 512], strides = [1, 1]} : vector<8x512xf32> to vector<1x512xf32>
      %375 = vector.shape_cast %374 : vector<1x512xf32> to vector<1x512xf32>
      %376 = vector.broadcast %375 : vector<1x512xf32> to vector<4x512xf32>
      %c1_192 = arith.constant 1 : index
      %c4_193 = arith.constant 4 : index
      %c0_194 = arith.constant 0 : index
      %c0_195 = arith.constant 0 : index
      %377 = vector.load %arg2[%c1_192, %c4_193, %c0_194, %c0_195] : memref<9x8x4x512xf32, #tpu.memory_space<vmem>>, vector<1x1x4x512xf32>
      %378 = vector.shape_cast %377 : vector<1x1x4x512xf32> to vector<4x512xf32>
      %379 = arith.mulf %378, %376 : vector<4x512xf32>
      %380 = arith.addf %373, %379 : vector<4x512xf32>
      %381 = vector.extract_strided_slice %346 {offsets = [5, 0], sizes = [1, 512], strides = [1, 1]} : vector<8x512xf32> to vector<1x512xf32>
      %382 = vector.shape_cast %381 : vector<1x512xf32> to vector<1x512xf32>
      %383 = vector.broadcast %382 : vector<1x512xf32> to vector<4x512xf32>
      %c1_196 = arith.constant 1 : index
      %c5_197 = arith.constant 5 : index
      %c0_198 = arith.constant 0 : index
      %c0_199 = arith.constant 0 : index
      %384 = vector.load %arg2[%c1_196, %c5_197, %c0_198, %c0_199] : memref<9x8x4x512xf32, #tpu.memory_space<vmem>>, vector<1x1x4x512xf32>
      %385 = vector.shape_cast %384 : vector<1x1x4x512xf32> to vector<4x512xf32>
      %386 = arith.mulf %385, %383 : vector<4x512xf32>
      %387 = arith.addf %380, %386 : vector<4x512xf32>
      %388 = vector.extract_strided_slice %346 {offsets = [6, 0], sizes = [1, 512], strides = [1, 1]} : vector<8x512xf32> to vector<1x512xf32>
      %389 = vector.shape_cast %388 : vector<1x512xf32> to vector<1x512xf32>
      %390 = vector.broadcast %389 : vector<1x512xf32> to vector<4x512xf32>
      %c1_200 = arith.constant 1 : index
      %c6_201 = arith.constant 6 : index
      %c0_202 = arith.constant 0 : index
      %c0_203 = arith.constant 0 : index
      %391 = vector.load %arg2[%c1_200, %c6_201, %c0_202, %c0_203] : memref<9x8x4x512xf32, #tpu.memory_space<vmem>>, vector<1x1x4x512xf32>
      %392 = vector.shape_cast %391 : vector<1x1x4x512xf32> to vector<4x512xf32>
      %393 = arith.mulf %392, %390 : vector<4x512xf32>
      %394 = arith.addf %387, %393 : vector<4x512xf32>
      %395 = vector.extract_strided_slice %346 {offsets = [7, 0], sizes = [1, 512], strides = [1, 1]} : vector<8x512xf32> to vector<1x512xf32>
      %396 = vector.shape_cast %395 : vector<1x512xf32> to vector<1x512xf32>
      %397 = vector.broadcast %396 : vector<1x512xf32> to vector<4x512xf32>
      %c1_204 = arith.constant 1 : index
      %c7_205 = arith.constant 7 : index
      %c0_206 = arith.constant 0 : index
      %c0_207 = arith.constant 0 : index
      %398 = vector.load %arg2[%c1_204, %c7_205, %c0_206, %c0_207] : memref<9x8x4x512xf32, #tpu.memory_space<vmem>>, vector<1x1x4x512xf32>
      %399 = vector.shape_cast %398 : vector<1x1x4x512xf32> to vector<4x512xf32>
      %400 = arith.mulf %399, %397 : vector<4x512xf32>
      %401 = arith.addf %394, %400 : vector<4x512xf32>
      %402 = vector.extract_strided_slice %285 {offsets = [0, 497], sizes = [8, 15], strides = [1, 1]} : vector<8x512xf32> to vector<8x15xf32>
      %403 = vector.extract_strided_slice %285 {offsets = [0, 0], sizes = [8, 497], strides = [1, 1]} : vector<8x512xf32> to vector<8x497xf32>
      %404 = tpu.concatenate %402, %403 in 1 : vector<8x15xf32>, vector<8x497xf32> -> vector<8x512xf32>
      %405 = vector.extract_strided_slice %404 {offsets = [0, 0], sizes = [1, 512], strides = [1, 1]} : vector<8x512xf32> to vector<1x512xf32>
      %406 = vector.shape_cast %405 : vector<1x512xf32> to vector<1x512xf32>
      %407 = vector.broadcast %406 : vector<1x512xf32> to vector<4x512xf32>
      %c2_208 = arith.constant 2 : index
      %c0_209 = arith.constant 0 : index
      %c0_210 = arith.constant 0 : index
      %c0_211 = arith.constant 0 : index
      %408 = vector.load %arg2[%c2_208, %c0_209, %c0_210, %c0_211] : memref<9x8x4x512xf32, #tpu.memory_space<vmem>>, vector<1x1x4x512xf32>
      %409 = vector.shape_cast %408 : vector<1x1x4x512xf32> to vector<4x512xf32>
      %410 = arith.mulf %409, %407 : vector<4x512xf32>
      %411 = vector.extract_strided_slice %404 {offsets = [1, 0], sizes = [1, 512], strides = [1, 1]} : vector<8x512xf32> to vector<1x512xf32>
      %412 = vector.shape_cast %411 : vector<1x512xf32> to vector<1x512xf32>
      %413 = vector.broadcast %412 : vector<1x512xf32> to vector<4x512xf32>
      %c2_212 = arith.constant 2 : index
      %c1_213 = arith.constant 1 : index
      %c0_214 = arith.constant 0 : index
      %c0_215 = arith.constant 0 : index
      %414 = vector.load %arg2[%c2_212, %c1_213, %c0_214, %c0_215] : memref<9x8x4x512xf32, #tpu.memory_space<vmem>>, vector<1x1x4x512xf32>
      %415 = vector.shape_cast %414 : vector<1x1x4x512xf32> to vector<4x512xf32>
      %416 = arith.mulf %415, %413 : vector<4x512xf32>
      %417 = arith.addf %410, %416 : vector<4x512xf32>
      %418 = vector.extract_strided_slice %404 {offsets = [2, 0], sizes = [1, 512], strides = [1, 1]} : vector<8x512xf32> to vector<1x512xf32>
      %419 = vector.shape_cast %418 : vector<1x512xf32> to vector<1x512xf32>
      %420 = vector.broadcast %419 : vector<1x512xf32> to vector<4x512xf32>
      %c2_216 = arith.constant 2 : index
      %c2_217 = arith.constant 2 : index
      %c0_218 = arith.constant 0 : index
      %c0_219 = arith.constant 0 : index
      %421 = vector.load %arg2[%c2_216, %c2_217, %c0_218, %c0_219] : memref<9x8x4x512xf32, #tpu.memory_space<vmem>>, vector<1x1x4x512xf32>
      %422 = vector.shape_cast %421 : vector<1x1x4x512xf32> to vector<4x512xf32>
      %423 = arith.mulf %422, %420 : vector<4x512xf32>
      %424 = arith.addf %417, %423 : vector<4x512xf32>
      %425 = vector.extract_strided_slice %404 {offsets = [3, 0], sizes = [1, 512], strides = [1, 1]} : vector<8x512xf32> to vector<1x512xf32>
      %426 = vector.shape_cast %425 : vector<1x512xf32> to vector<1x512xf32>
      %427 = vector.broadcast %426 : vector<1x512xf32> to vector<4x512xf32>
      %c2_220 = arith.constant 2 : index
      %c3_221 = arith.constant 3 : index
      %c0_222 = arith.constant 0 : index
      %c0_223 = arith.constant 0 : index
      %428 = vector.load %arg2[%c2_220, %c3_221, %c0_222, %c0_223] : memref<9x8x4x512xf32, #tpu.memory_space<vmem>>, vector<1x1x4x512xf32>
      %429 = vector.shape_cast %428 : vector<1x1x4x512xf32> to vector<4x512xf32>
      %430 = arith.mulf %429, %427 : vector<4x512xf32>
      %431 = arith.addf %424, %430 : vector<4x512xf32>
      %432 = vector.extract_strided_slice %404 {offsets = [4, 0], sizes = [1, 512], strides = [1, 1]} : vector<8x512xf32> to vector<1x512xf32>
      %433 = vector.shape_cast %432 : vector<1x512xf32> to vector<1x512xf32>
      %434 = vector.broadcast %433 : vector<1x512xf32> to vector<4x512xf32>
      %c2_224 = arith.constant 2 : index
      %c4_225 = arith.constant 4 : index
      %c0_226 = arith.constant 0 : index
      %c0_227 = arith.constant 0 : index
      %435 = vector.load %arg2[%c2_224, %c4_225, %c0_226, %c0_227] : memref<9x8x4x512xf32, #tpu.memory_space<vmem>>, vector<1x1x4x512xf32>
      %436 = vector.shape_cast %435 : vector<1x1x4x512xf32> to vector<4x512xf32>
      %437 = arith.mulf %436, %434 : vector<4x512xf32>
      %438 = arith.addf %431, %437 : vector<4x512xf32>
      %439 = vector.extract_strided_slice %404 {offsets = [5, 0], sizes = [1, 512], strides = [1, 1]} : vector<8x512xf32> to vector<1x512xf32>
      %440 = vector.shape_cast %439 : vector<1x512xf32> to vector<1x512xf32>
      %441 = vector.broadcast %440 : vector<1x512xf32> to vector<4x512xf32>
      %c2_228 = arith.constant 2 : index
      %c5_229 = arith.constant 5 : index
      %c0_230 = arith.constant 0 : index
      %c0_231 = arith.constant 0 : index
      %442 = vector.load %arg2[%c2_228, %c5_229, %c0_230, %c0_231] : memref<9x8x4x512xf32, #tpu.memory_space<vmem>>, vector<1x1x4x512xf32>
      %443 = vector.shape_cast %442 : vector<1x1x4x512xf32> to vector<4x512xf32>
      %444 = arith.mulf %443, %441 : vector<4x512xf32>
      %445 = arith.addf %438, %444 : vector<4x512xf32>
      %446 = vector.extract_strided_slice %404 {offsets = [6, 0], sizes = [1, 512], strides = [1, 1]} : vector<8x512xf32> to vector<1x512xf32>
      %447 = vector.shape_cast %446 : vector<1x512xf32> to vector<1x512xf32>
      %448 = vector.broadcast %447 : vector<1x512xf32> to vector<4x512xf32>
      %c2_232 = arith.constant 2 : index
      %c6_233 = arith.constant 6 : index
      %c0_234 = arith.constant 0 : index
      %c0_235 = arith.constant 0 : index
      %449 = vector.load %arg2[%c2_232, %c6_233, %c0_234, %c0_235] : memref<9x8x4x512xf32, #tpu.memory_space<vmem>>, vector<1x1x4x512xf32>
      %450 = vector.shape_cast %449 : vector<1x1x4x512xf32> to vector<4x512xf32>
      %451 = arith.mulf %450, %448 : vector<4x512xf32>
      %452 = arith.addf %445, %451 : vector<4x512xf32>
      %453 = vector.extract_strided_slice %404 {offsets = [7, 0], sizes = [1, 512], strides = [1, 1]} : vector<8x512xf32> to vector<1x512xf32>
      %454 = vector.shape_cast %453 : vector<1x512xf32> to vector<1x512xf32>
      %455 = vector.broadcast %454 : vector<1x512xf32> to vector<4x512xf32>
      %c2_236 = arith.constant 2 : index
      %c7_237 = arith.constant 7 : index
      %c0_238 = arith.constant 0 : index
      %c0_239 = arith.constant 0 : index
      %456 = vector.load %arg2[%c2_236, %c7_237, %c0_238, %c0_239] : memref<9x8x4x512xf32, #tpu.memory_space<vmem>>, vector<1x1x4x512xf32>
      %457 = vector.shape_cast %456 : vector<1x1x4x512xf32> to vector<4x512xf32>
      %458 = arith.mulf %457, %455 : vector<4x512xf32>
      %459 = arith.addf %452, %458 : vector<4x512xf32>
      %460 = vector.extract_strided_slice %285 {offsets = [0, 511], sizes = [8, 1], strides = [1, 1]} : vector<8x512xf32> to vector<8x1xf32>
      %461 = vector.extract_strided_slice %285 {offsets = [0, 0], sizes = [8, 511], strides = [1, 1]} : vector<8x512xf32> to vector<8x511xf32>
      %462 = tpu.concatenate %460, %461 in 1 : vector<8x1xf32>, vector<8x511xf32> -> vector<8x512xf32>
      %463 = vector.extract_strided_slice %462 {offsets = [0, 0], sizes = [1, 512], strides = [1, 1]} : vector<8x512xf32> to vector<1x512xf32>
      %464 = vector.shape_cast %463 : vector<1x512xf32> to vector<1x512xf32>
      %465 = vector.broadcast %464 : vector<1x512xf32> to vector<4x512xf32>
      %c3_240 = arith.constant 3 : index
      %c0_241 = arith.constant 0 : index
      %c0_242 = arith.constant 0 : index
      %c0_243 = arith.constant 0 : index
      %466 = vector.load %arg2[%c3_240, %c0_241, %c0_242, %c0_243] : memref<9x8x4x512xf32, #tpu.memory_space<vmem>>, vector<1x1x4x512xf32>
      %467 = vector.shape_cast %466 : vector<1x1x4x512xf32> to vector<4x512xf32>
      %468 = arith.mulf %467, %465 : vector<4x512xf32>
      %469 = vector.extract_strided_slice %462 {offsets = [1, 0], sizes = [1, 512], strides = [1, 1]} : vector<8x512xf32> to vector<1x512xf32>
      %470 = vector.shape_cast %469 : vector<1x512xf32> to vector<1x512xf32>
      %471 = vector.broadcast %470 : vector<1x512xf32> to vector<4x512xf32>
      %c3_244 = arith.constant 3 : index
      %c1_245 = arith.constant 1 : index
      %c0_246 = arith.constant 0 : index
      %c0_247 = arith.constant 0 : index
      %472 = vector.load %arg2[%c3_244, %c1_245, %c0_246, %c0_247] : memref<9x8x4x512xf32, #tpu.memory_space<vmem>>, vector<1x1x4x512xf32>
      %473 = vector.shape_cast %472 : vector<1x1x4x512xf32> to vector<4x512xf32>
      %474 = arith.mulf %473, %471 : vector<4x512xf32>
      %475 = arith.addf %468, %474 : vector<4x512xf32>
      %476 = vector.extract_strided_slice %462 {offsets = [2, 0], sizes = [1, 512], strides = [1, 1]} : vector<8x512xf32> to vector<1x512xf32>
      %477 = vector.shape_cast %476 : vector<1x512xf32> to vector<1x512xf32>
      %478 = vector.broadcast %477 : vector<1x512xf32> to vector<4x512xf32>
      %c3_248 = arith.constant 3 : index
      %c2_249 = arith.constant 2 : index
      %c0_250 = arith.constant 0 : index
      %c0_251 = arith.constant 0 : index
      %479 = vector.load %arg2[%c3_248, %c2_249, %c0_250, %c0_251] : memref<9x8x4x512xf32, #tpu.memory_space<vmem>>, vector<1x1x4x512xf32>
      %480 = vector.shape_cast %479 : vector<1x1x4x512xf32> to vector<4x512xf32>
      %481 = arith.mulf %480, %478 : vector<4x512xf32>
      %482 = arith.addf %475, %481 : vector<4x512xf32>
      %483 = vector.extract_strided_slice %462 {offsets = [3, 0], sizes = [1, 512], strides = [1, 1]} : vector<8x512xf32> to vector<1x512xf32>
      %484 = vector.shape_cast %483 : vector<1x512xf32> to vector<1x512xf32>
      %485 = vector.broadcast %484 : vector<1x512xf32> to vector<4x512xf32>
      %c3_252 = arith.constant 3 : index
      %c3_253 = arith.constant 3 : index
      %c0_254 = arith.constant 0 : index
      %c0_255 = arith.constant 0 : index
      %486 = vector.load %arg2[%c3_252, %c3_253, %c0_254, %c0_255] : memref<9x8x4x512xf32, #tpu.memory_space<vmem>>, vector<1x1x4x512xf32>
      %487 = vector.shape_cast %486 : vector<1x1x4x512xf32> to vector<4x512xf32>
      %488 = arith.mulf %487, %485 : vector<4x512xf32>
      %489 = arith.addf %482, %488 : vector<4x512xf32>
      %490 = vector.extract_strided_slice %462 {offsets = [4, 0], sizes = [1, 512], strides = [1, 1]} : vector<8x512xf32> to vector<1x512xf32>
      %491 = vector.shape_cast %490 : vector<1x512xf32> to vector<1x512xf32>
      %492 = vector.broadcast %491 : vector<1x512xf32> to vector<4x512xf32>
      %c3_256 = arith.constant 3 : index
      %c4_257 = arith.constant 4 : index
      %c0_258 = arith.constant 0 : index
      %c0_259 = arith.constant 0 : index
      %493 = vector.load %arg2[%c3_256, %c4_257, %c0_258, %c0_259] : memref<9x8x4x512xf32, #tpu.memory_space<vmem>>, vector<1x1x4x512xf32>
      %494 = vector.shape_cast %493 : vector<1x1x4x512xf32> to vector<4x512xf32>
      %495 = arith.mulf %494, %492 : vector<4x512xf32>
      %496 = arith.addf %489, %495 : vector<4x512xf32>
      %497 = vector.extract_strided_slice %462 {offsets = [5, 0], sizes = [1, 512], strides = [1, 1]} : vector<8x512xf32> to vector<1x512xf32>
      %498 = vector.shape_cast %497 : vector<1x512xf32> to vector<1x512xf32>
      %499 = vector.broadcast %498 : vector<1x512xf32> to vector<4x512xf32>
      %c3_260 = arith.constant 3 : index
      %c5_261 = arith.constant 5 : index
      %c0_262 = arith.constant 0 : index
      %c0_263 = arith.constant 0 : index
      %500 = vector.load %arg2[%c3_260, %c5_261, %c0_262, %c0_263] : memref<9x8x4x512xf32, #tpu.memory_space<vmem>>, vector<1x1x4x512xf32>
      %501 = vector.shape_cast %500 : vector<1x1x4x512xf32> to vector<4x512xf32>
      %502 = arith.mulf %501, %499 : vector<4x512xf32>
      %503 = arith.addf %496, %502 : vector<4x512xf32>
      %504 = vector.extract_strided_slice %462 {offsets = [6, 0], sizes = [1, 512], strides = [1, 1]} : vector<8x512xf32> to vector<1x512xf32>
      %505 = vector.shape_cast %504 : vector<1x512xf32> to vector<1x512xf32>
      %506 = vector.broadcast %505 : vector<1x512xf32> to vector<4x512xf32>
      %c3_264 = arith.constant 3 : index
      %c6_265 = arith.constant 6 : index
      %c0_266 = arith.constant 0 : index
      %c0_267 = arith.constant 0 : index
      %507 = vector.load %arg2[%c3_264, %c6_265, %c0_266, %c0_267] : memref<9x8x4x512xf32, #tpu.memory_space<vmem>>, vector<1x1x4x512xf32>
      %508 = vector.shape_cast %507 : vector<1x1x4x512xf32> to vector<4x512xf32>
      %509 = arith.mulf %508, %506 : vector<4x512xf32>
      %510 = arith.addf %503, %509 : vector<4x512xf32>
      %511 = vector.extract_strided_slice %462 {offsets = [7, 0], sizes = [1, 512], strides = [1, 1]} : vector<8x512xf32> to vector<1x512xf32>
      %512 = vector.shape_cast %511 : vector<1x512xf32> to vector<1x512xf32>
      %513 = vector.broadcast %512 : vector<1x512xf32> to vector<4x512xf32>
      %c3_268 = arith.constant 3 : index
      %c7_269 = arith.constant 7 : index
      %c0_270 = arith.constant 0 : index
      %c0_271 = arith.constant 0 : index
      %514 = vector.load %arg2[%c3_268, %c7_269, %c0_270, %c0_271] : memref<9x8x4x512xf32, #tpu.memory_space<vmem>>, vector<1x1x4x512xf32>
      %515 = vector.shape_cast %514 : vector<1x1x4x512xf32> to vector<4x512xf32>
      %516 = arith.mulf %515, %513 : vector<4x512xf32>
      %517 = arith.addf %510, %516 : vector<4x512xf32>
      %518 = vector.extract_strided_slice %285 {offsets = [0, 0], sizes = [1, 512], strides = [1, 1]} : vector<8x512xf32> to vector<1x512xf32>
      %519 = vector.shape_cast %518 : vector<1x512xf32> to vector<1x512xf32>
      %520 = vector.broadcast %519 : vector<1x512xf32> to vector<4x512xf32>
      %c4_272 = arith.constant 4 : index
      %c0_273 = arith.constant 0 : index
      %c0_274 = arith.constant 0 : index
      %c0_275 = arith.constant 0 : index
      %521 = vector.load %arg2[%c4_272, %c0_273, %c0_274, %c0_275] : memref<9x8x4x512xf32, #tpu.memory_space<vmem>>, vector<1x1x4x512xf32>
      %522 = vector.shape_cast %521 : vector<1x1x4x512xf32> to vector<4x512xf32>
      %523 = arith.mulf %522, %520 : vector<4x512xf32>
      %524 = vector.extract_strided_slice %285 {offsets = [1, 0], sizes = [1, 512], strides = [1, 1]} : vector<8x512xf32> to vector<1x512xf32>
      %525 = vector.shape_cast %524 : vector<1x512xf32> to vector<1x512xf32>
      %526 = vector.broadcast %525 : vector<1x512xf32> to vector<4x512xf32>
      %c4_276 = arith.constant 4 : index
      %c1_277 = arith.constant 1 : index
      %c0_278 = arith.constant 0 : index
      %c0_279 = arith.constant 0 : index
      %527 = vector.load %arg2[%c4_276, %c1_277, %c0_278, %c0_279] : memref<9x8x4x512xf32, #tpu.memory_space<vmem>>, vector<1x1x4x512xf32>
      %528 = vector.shape_cast %527 : vector<1x1x4x512xf32> to vector<4x512xf32>
      %529 = arith.mulf %528, %526 : vector<4x512xf32>
      %530 = arith.addf %523, %529 : vector<4x512xf32>
      %531 = vector.extract_strided_slice %285 {offsets = [2, 0], sizes = [1, 512], strides = [1, 1]} : vector<8x512xf32> to vector<1x512xf32>
      %532 = vector.shape_cast %531 : vector<1x512xf32> to vector<1x512xf32>
      %533 = vector.broadcast %532 : vector<1x512xf32> to vector<4x512xf32>
      %c4_280 = arith.constant 4 : index
      %c2_281 = arith.constant 2 : index
      %c0_282 = arith.constant 0 : index
      %c0_283 = arith.constant 0 : index
      %534 = vector.load %arg2[%c4_280, %c2_281, %c0_282, %c0_283] : memref<9x8x4x512xf32, #tpu.memory_space<vmem>>, vector<1x1x4x512xf32>
      %535 = vector.shape_cast %534 : vector<1x1x4x512xf32> to vector<4x512xf32>
      %536 = arith.mulf %535, %533 : vector<4x512xf32>
      %537 = arith.addf %530, %536 : vector<4x512xf32>
      %538 = vector.extract_strided_slice %285 {offsets = [3, 0], sizes = [1, 512], strides = [1, 1]} : vector<8x512xf32> to vector<1x512xf32>
      %539 = vector.shape_cast %538 : vector<1x512xf32> to vector<1x512xf32>
      %540 = vector.broadcast %539 : vector<1x512xf32> to vector<4x512xf32>
      %c4_284 = arith.constant 4 : index
      %c3_285 = arith.constant 3 : index
      %c0_286 = arith.constant 0 : index
      %c0_287 = arith.constant 0 : index
      %541 = vector.load %arg2[%c4_284, %c3_285, %c0_286, %c0_287] : memref<9x8x4x512xf32, #tpu.memory_space<vmem>>, vector<1x1x4x512xf32>
      %542 = vector.shape_cast %541 : vector<1x1x4x512xf32> to vector<4x512xf32>
      %543 = arith.mulf %542, %540 : vector<4x512xf32>
      %544 = arith.addf %537, %543 : vector<4x512xf32>
      %545 = vector.extract_strided_slice %285 {offsets = [4, 0], sizes = [1, 512], strides = [1, 1]} : vector<8x512xf32> to vector<1x512xf32>
      %546 = vector.shape_cast %545 : vector<1x512xf32> to vector<1x512xf32>
      %547 = vector.broadcast %546 : vector<1x512xf32> to vector<4x512xf32>
      %c4_288 = arith.constant 4 : index
      %c4_289 = arith.constant 4 : index
      %c0_290 = arith.constant 0 : index
      %c0_291 = arith.constant 0 : index
      %548 = vector.load %arg2[%c4_288, %c4_289, %c0_290, %c0_291] : memref<9x8x4x512xf32, #tpu.memory_space<vmem>>, vector<1x1x4x512xf32>
      %549 = vector.shape_cast %548 : vector<1x1x4x512xf32> to vector<4x512xf32>
      %550 = arith.mulf %549, %547 : vector<4x512xf32>
      %551 = arith.addf %544, %550 : vector<4x512xf32>
      %552 = vector.extract_strided_slice %285 {offsets = [5, 0], sizes = [1, 512], strides = [1, 1]} : vector<8x512xf32> to vector<1x512xf32>
      %553 = vector.shape_cast %552 : vector<1x512xf32> to vector<1x512xf32>
      %554 = vector.broadcast %553 : vector<1x512xf32> to vector<4x512xf32>
      %c4_292 = arith.constant 4 : index
      %c5_293 = arith.constant 5 : index
      %c0_294 = arith.constant 0 : index
      %c0_295 = arith.constant 0 : index
      %555 = vector.load %arg2[%c4_292, %c5_293, %c0_294, %c0_295] : memref<9x8x4x512xf32, #tpu.memory_space<vmem>>, vector<1x1x4x512xf32>
      %556 = vector.shape_cast %555 : vector<1x1x4x512xf32> to vector<4x512xf32>
      %557 = arith.mulf %556, %554 : vector<4x512xf32>
      %558 = arith.addf %551, %557 : vector<4x512xf32>
      %559 = vector.extract_strided_slice %285 {offsets = [6, 0], sizes = [1, 512], strides = [1, 1]} : vector<8x512xf32> to vector<1x512xf32>
      %560 = vector.shape_cast %559 : vector<1x512xf32> to vector<1x512xf32>
      %561 = vector.broadcast %560 : vector<1x512xf32> to vector<4x512xf32>
      %c4_296 = arith.constant 4 : index
      %c6_297 = arith.constant 6 : index
      %c0_298 = arith.constant 0 : index
      %c0_299 = arith.constant 0 : index
      %562 = vector.load %arg2[%c4_296, %c6_297, %c0_298, %c0_299] : memref<9x8x4x512xf32, #tpu.memory_space<vmem>>, vector<1x1x4x512xf32>
      %563 = vector.shape_cast %562 : vector<1x1x4x512xf32> to vector<4x512xf32>
      %564 = arith.mulf %563, %561 : vector<4x512xf32>
      %565 = arith.addf %558, %564 : vector<4x512xf32>
      %566 = vector.extract_strided_slice %285 {offsets = [7, 0], sizes = [1, 512], strides = [1, 1]} : vector<8x512xf32> to vector<1x512xf32>
      %567 = vector.shape_cast %566 : vector<1x512xf32> to vector<1x512xf32>
      %568 = vector.broadcast %567 : vector<1x512xf32> to vector<4x512xf32>
      %c4_300 = arith.constant 4 : index
      %c7_301 = arith.constant 7 : index
      %c0_302 = arith.constant 0 : index
      %c0_303 = arith.constant 0 : index
      %569 = vector.load %arg2[%c4_300, %c7_301, %c0_302, %c0_303] : memref<9x8x4x512xf32, #tpu.memory_space<vmem>>, vector<1x1x4x512xf32>
      %570 = vector.shape_cast %569 : vector<1x1x4x512xf32> to vector<4x512xf32>
      %571 = arith.mulf %570, %568 : vector<4x512xf32>
      %572 = arith.addf %565, %571 : vector<4x512xf32>
      %573 = vector.extract_strided_slice %285 {offsets = [0, 1], sizes = [8, 511], strides = [1, 1]} : vector<8x512xf32> to vector<8x511xf32>
      %574 = vector.extract_strided_slice %285 {offsets = [0, 0], sizes = [8, 1], strides = [1, 1]} : vector<8x512xf32> to vector<8x1xf32>
      %575 = tpu.concatenate %573, %574 in 1 : vector<8x511xf32>, vector<8x1xf32> -> vector<8x512xf32>
      %576 = vector.extract_strided_slice %575 {offsets = [0, 0], sizes = [1, 512], strides = [1, 1]} : vector<8x512xf32> to vector<1x512xf32>
      %577 = vector.shape_cast %576 : vector<1x512xf32> to vector<1x512xf32>
      %578 = vector.broadcast %577 : vector<1x512xf32> to vector<4x512xf32>
      %c5_304 = arith.constant 5 : index
      %c0_305 = arith.constant 0 : index
      %c0_306 = arith.constant 0 : index
      %c0_307 = arith.constant 0 : index
      %579 = vector.load %arg2[%c5_304, %c0_305, %c0_306, %c0_307] : memref<9x8x4x512xf32, #tpu.memory_space<vmem>>, vector<1x1x4x512xf32>
      %580 = vector.shape_cast %579 : vector<1x1x4x512xf32> to vector<4x512xf32>
      %581 = arith.mulf %580, %578 : vector<4x512xf32>
      %582 = vector.extract_strided_slice %575 {offsets = [1, 0], sizes = [1, 512], strides = [1, 1]} : vector<8x512xf32> to vector<1x512xf32>
      %583 = vector.shape_cast %582 : vector<1x512xf32> to vector<1x512xf32>
      %584 = vector.broadcast %583 : vector<1x512xf32> to vector<4x512xf32>
      %c5_308 = arith.constant 5 : index
      %c1_309 = arith.constant 1 : index
      %c0_310 = arith.constant 0 : index
      %c0_311 = arith.constant 0 : index
      %585 = vector.load %arg2[%c5_308, %c1_309, %c0_310, %c0_311] : memref<9x8x4x512xf32, #tpu.memory_space<vmem>>, vector<1x1x4x512xf32>
      %586 = vector.shape_cast %585 : vector<1x1x4x512xf32> to vector<4x512xf32>
      %587 = arith.mulf %586, %584 : vector<4x512xf32>
      %588 = arith.addf %581, %587 : vector<4x512xf32>
      %589 = vector.extract_strided_slice %575 {offsets = [2, 0], sizes = [1, 512], strides = [1, 1]} : vector<8x512xf32> to vector<1x512xf32>
      %590 = vector.shape_cast %589 : vector<1x512xf32> to vector<1x512xf32>
      %591 = vector.broadcast %590 : vector<1x512xf32> to vector<4x512xf32>
      %c5_312 = arith.constant 5 : index
      %c2_313 = arith.constant 2 : index
      %c0_314 = arith.constant 0 : index
      %c0_315 = arith.constant 0 : index
      %592 = vector.load %arg2[%c5_312, %c2_313, %c0_314, %c0_315] : memref<9x8x4x512xf32, #tpu.memory_space<vmem>>, vector<1x1x4x512xf32>
      %593 = vector.shape_cast %592 : vector<1x1x4x512xf32> to vector<4x512xf32>
      %594 = arith.mulf %593, %591 : vector<4x512xf32>
      %595 = arith.addf %588, %594 : vector<4x512xf32>
      %596 = vector.extract_strided_slice %575 {offsets = [3, 0], sizes = [1, 512], strides = [1, 1]} : vector<8x512xf32> to vector<1x512xf32>
      %597 = vector.shape_cast %596 : vector<1x512xf32> to vector<1x512xf32>
      %598 = vector.broadcast %597 : vector<1x512xf32> to vector<4x512xf32>
      %c5_316 = arith.constant 5 : index
      %c3_317 = arith.constant 3 : index
      %c0_318 = arith.constant 0 : index
      %c0_319 = arith.constant 0 : index
      %599 = vector.load %arg2[%c5_316, %c3_317, %c0_318, %c0_319] : memref<9x8x4x512xf32, #tpu.memory_space<vmem>>, vector<1x1x4x512xf32>
      %600 = vector.shape_cast %599 : vector<1x1x4x512xf32> to vector<4x512xf32>
      %601 = arith.mulf %600, %598 : vector<4x512xf32>
      %602 = arith.addf %595, %601 : vector<4x512xf32>
      %603 = vector.extract_strided_slice %575 {offsets = [4, 0], sizes = [1, 512], strides = [1, 1]} : vector<8x512xf32> to vector<1x512xf32>
      %604 = vector.shape_cast %603 : vector<1x512xf32> to vector<1x512xf32>
      %605 = vector.broadcast %604 : vector<1x512xf32> to vector<4x512xf32>
      %c5_320 = arith.constant 5 : index
      %c4_321 = arith.constant 4 : index
      %c0_322 = arith.constant 0 : index
      %c0_323 = arith.constant 0 : index
      %606 = vector.load %arg2[%c5_320, %c4_321, %c0_322, %c0_323] : memref<9x8x4x512xf32, #tpu.memory_space<vmem>>, vector<1x1x4x512xf32>
      %607 = vector.shape_cast %606 : vector<1x1x4x512xf32> to vector<4x512xf32>
      %608 = arith.mulf %607, %605 : vector<4x512xf32>
      %609 = arith.addf %602, %608 : vector<4x512xf32>
      %610 = vector.extract_strided_slice %575 {offsets = [5, 0], sizes = [1, 512], strides = [1, 1]} : vector<8x512xf32> to vector<1x512xf32>
      %611 = vector.shape_cast %610 : vector<1x512xf32> to vector<1x512xf32>
      %612 = vector.broadcast %611 : vector<1x512xf32> to vector<4x512xf32>
      %c5_324 = arith.constant 5 : index
      %c5_325 = arith.constant 5 : index
      %c0_326 = arith.constant 0 : index
      %c0_327 = arith.constant 0 : index
      %613 = vector.load %arg2[%c5_324, %c5_325, %c0_326, %c0_327] : memref<9x8x4x512xf32, #tpu.memory_space<vmem>>, vector<1x1x4x512xf32>
      %614 = vector.shape_cast %613 : vector<1x1x4x512xf32> to vector<4x512xf32>
      %615 = arith.mulf %614, %612 : vector<4x512xf32>
      %616 = arith.addf %609, %615 : vector<4x512xf32>
      %617 = vector.extract_strided_slice %575 {offsets = [6, 0], sizes = [1, 512], strides = [1, 1]} : vector<8x512xf32> to vector<1x512xf32>
      %618 = vector.shape_cast %617 : vector<1x512xf32> to vector<1x512xf32>
      %619 = vector.broadcast %618 : vector<1x512xf32> to vector<4x512xf32>
      %c5_328 = arith.constant 5 : index
      %c6_329 = arith.constant 6 : index
      %c0_330 = arith.constant 0 : index
      %c0_331 = arith.constant 0 : index
      %620 = vector.load %arg2[%c5_328, %c6_329, %c0_330, %c0_331] : memref<9x8x4x512xf32, #tpu.memory_space<vmem>>, vector<1x1x4x512xf32>
      %621 = vector.shape_cast %620 : vector<1x1x4x512xf32> to vector<4x512xf32>
      %622 = arith.mulf %621, %619 : vector<4x512xf32>
      %623 = arith.addf %616, %622 : vector<4x512xf32>
      %624 = vector.extract_strided_slice %575 {offsets = [7, 0], sizes = [1, 512], strides = [1, 1]} : vector<8x512xf32> to vector<1x512xf32>
      %625 = vector.shape_cast %624 : vector<1x512xf32> to vector<1x512xf32>
      %626 = vector.broadcast %625 : vector<1x512xf32> to vector<4x512xf32>
      %c5_332 = arith.constant 5 : index
      %c7_333 = arith.constant 7 : index
      %c0_334 = arith.constant 0 : index
      %c0_335 = arith.constant 0 : index
      %627 = vector.load %arg2[%c5_332, %c7_333, %c0_334, %c0_335] : memref<9x8x4x512xf32, #tpu.memory_space<vmem>>, vector<1x1x4x512xf32>
      %628 = vector.shape_cast %627 : vector<1x1x4x512xf32> to vector<4x512xf32>
      %629 = arith.mulf %628, %626 : vector<4x512xf32>
      %630 = arith.addf %623, %629 : vector<4x512xf32>
      %631 = vector.extract_strided_slice %285 {offsets = [0, 15], sizes = [8, 497], strides = [1, 1]} : vector<8x512xf32> to vector<8x497xf32>
      %632 = vector.extract_strided_slice %285 {offsets = [0, 0], sizes = [8, 15], strides = [1, 1]} : vector<8x512xf32> to vector<8x15xf32>
      %633 = tpu.concatenate %631, %632 in 1 : vector<8x497xf32>, vector<8x15xf32> -> vector<8x512xf32>
      %634 = vector.extract_strided_slice %633 {offsets = [0, 0], sizes = [1, 512], strides = [1, 1]} : vector<8x512xf32> to vector<1x512xf32>
      %635 = vector.shape_cast %634 : vector<1x512xf32> to vector<1x512xf32>
      %636 = vector.broadcast %635 : vector<1x512xf32> to vector<4x512xf32>
      %c6_336 = arith.constant 6 : index
      %c0_337 = arith.constant 0 : index
      %c0_338 = arith.constant 0 : index
      %c0_339 = arith.constant 0 : index
      %637 = vector.load %arg2[%c6_336, %c0_337, %c0_338, %c0_339] : memref<9x8x4x512xf32, #tpu.memory_space<vmem>>, vector<1x1x4x512xf32>
      %638 = vector.shape_cast %637 : vector<1x1x4x512xf32> to vector<4x512xf32>
      %639 = arith.mulf %638, %636 : vector<4x512xf32>
      %640 = vector.extract_strided_slice %633 {offsets = [1, 0], sizes = [1, 512], strides = [1, 1]} : vector<8x512xf32> to vector<1x512xf32>
      %641 = vector.shape_cast %640 : vector<1x512xf32> to vector<1x512xf32>
      %642 = vector.broadcast %641 : vector<1x512xf32> to vector<4x512xf32>
      %c6_340 = arith.constant 6 : index
      %c1_341 = arith.constant 1 : index
      %c0_342 = arith.constant 0 : index
      %c0_343 = arith.constant 0 : index
      %643 = vector.load %arg2[%c6_340, %c1_341, %c0_342, %c0_343] : memref<9x8x4x512xf32, #tpu.memory_space<vmem>>, vector<1x1x4x512xf32>
      %644 = vector.shape_cast %643 : vector<1x1x4x512xf32> to vector<4x512xf32>
      %645 = arith.mulf %644, %642 : vector<4x512xf32>
      %646 = arith.addf %639, %645 : vector<4x512xf32>
      %647 = vector.extract_strided_slice %633 {offsets = [2, 0], sizes = [1, 512], strides = [1, 1]} : vector<8x512xf32> to vector<1x512xf32>
      %648 = vector.shape_cast %647 : vector<1x512xf32> to vector<1x512xf32>
      %649 = vector.broadcast %648 : vector<1x512xf32> to vector<4x512xf32>
      %c6_344 = arith.constant 6 : index
      %c2_345 = arith.constant 2 : index
      %c0_346 = arith.constant 0 : index
      %c0_347 = arith.constant 0 : index
      %650 = vector.load %arg2[%c6_344, %c2_345, %c0_346, %c0_347] : memref<9x8x4x512xf32, #tpu.memory_space<vmem>>, vector<1x1x4x512xf32>
      %651 = vector.shape_cast %650 : vector<1x1x4x512xf32> to vector<4x512xf32>
      %652 = arith.mulf %651, %649 : vector<4x512xf32>
      %653 = arith.addf %646, %652 : vector<4x512xf32>
      %654 = vector.extract_strided_slice %633 {offsets = [3, 0], sizes = [1, 512], strides = [1, 1]} : vector<8x512xf32> to vector<1x512xf32>
      %655 = vector.shape_cast %654 : vector<1x512xf32> to vector<1x512xf32>
      %656 = vector.broadcast %655 : vector<1x512xf32> to vector<4x512xf32>
      %c6_348 = arith.constant 6 : index
      %c3_349 = arith.constant 3 : index
      %c0_350 = arith.constant 0 : index
      %c0_351 = arith.constant 0 : index
      %657 = vector.load %arg2[%c6_348, %c3_349, %c0_350, %c0_351] : memref<9x8x4x512xf32, #tpu.memory_space<vmem>>, vector<1x1x4x512xf32>
      %658 = vector.shape_cast %657 : vector<1x1x4x512xf32> to vector<4x512xf32>
      %659 = arith.mulf %658, %656 : vector<4x512xf32>
      %660 = arith.addf %653, %659 : vector<4x512xf32>
      %661 = vector.extract_strided_slice %633 {offsets = [4, 0], sizes = [1, 512], strides = [1, 1]} : vector<8x512xf32> to vector<1x512xf32>
      %662 = vector.shape_cast %661 : vector<1x512xf32> to vector<1x512xf32>
      %663 = vector.broadcast %662 : vector<1x512xf32> to vector<4x512xf32>
      %c6_352 = arith.constant 6 : index
      %c4_353 = arith.constant 4 : index
      %c0_354 = arith.constant 0 : index
      %c0_355 = arith.constant 0 : index
      %664 = vector.load %arg2[%c6_352, %c4_353, %c0_354, %c0_355] : memref<9x8x4x512xf32, #tpu.memory_space<vmem>>, vector<1x1x4x512xf32>
      %665 = vector.shape_cast %664 : vector<1x1x4x512xf32> to vector<4x512xf32>
      %666 = arith.mulf %665, %663 : vector<4x512xf32>
      %667 = arith.addf %660, %666 : vector<4x512xf32>
      %668 = vector.extract_strided_slice %633 {offsets = [5, 0], sizes = [1, 512], strides = [1, 1]} : vector<8x512xf32> to vector<1x512xf32>
      %669 = vector.shape_cast %668 : vector<1x512xf32> to vector<1x512xf32>
      %670 = vector.broadcast %669 : vector<1x512xf32> to vector<4x512xf32>
      %c6_356 = arith.constant 6 : index
      %c5_357 = arith.constant 5 : index
      %c0_358 = arith.constant 0 : index
      %c0_359 = arith.constant 0 : index
      %671 = vector.load %arg2[%c6_356, %c5_357, %c0_358, %c0_359] : memref<9x8x4x512xf32, #tpu.memory_space<vmem>>, vector<1x1x4x512xf32>
      %672 = vector.shape_cast %671 : vector<1x1x4x512xf32> to vector<4x512xf32>
      %673 = arith.mulf %672, %670 : vector<4x512xf32>
      %674 = arith.addf %667, %673 : vector<4x512xf32>
      %675 = vector.extract_strided_slice %633 {offsets = [6, 0], sizes = [1, 512], strides = [1, 1]} : vector<8x512xf32> to vector<1x512xf32>
      %676 = vector.shape_cast %675 : vector<1x512xf32> to vector<1x512xf32>
      %677 = vector.broadcast %676 : vector<1x512xf32> to vector<4x512xf32>
      %c6_360 = arith.constant 6 : index
      %c6_361 = arith.constant 6 : index
      %c0_362 = arith.constant 0 : index
      %c0_363 = arith.constant 0 : index
      %678 = vector.load %arg2[%c6_360, %c6_361, %c0_362, %c0_363] : memref<9x8x4x512xf32, #tpu.memory_space<vmem>>, vector<1x1x4x512xf32>
      %679 = vector.shape_cast %678 : vector<1x1x4x512xf32> to vector<4x512xf32>
      %680 = arith.mulf %679, %677 : vector<4x512xf32>
      %681 = arith.addf %674, %680 : vector<4x512xf32>
      %682 = vector.extract_strided_slice %633 {offsets = [7, 0], sizes = [1, 512], strides = [1, 1]} : vector<8x512xf32> to vector<1x512xf32>
      %683 = vector.shape_cast %682 : vector<1x512xf32> to vector<1x512xf32>
      %684 = vector.broadcast %683 : vector<1x512xf32> to vector<4x512xf32>
      %c6_364 = arith.constant 6 : index
      %c7_365 = arith.constant 7 : index
      %c0_366 = arith.constant 0 : index
      %c0_367 = arith.constant 0 : index
      %685 = vector.load %arg2[%c6_364, %c7_365, %c0_366, %c0_367] : memref<9x8x4x512xf32, #tpu.memory_space<vmem>>, vector<1x1x4x512xf32>
      %686 = vector.shape_cast %685 : vector<1x1x4x512xf32> to vector<4x512xf32>
      %687 = arith.mulf %686, %684 : vector<4x512xf32>
      %688 = arith.addf %681, %687 : vector<4x512xf32>
      %689 = vector.extract_strided_slice %285 {offsets = [0, 16], sizes = [8, 496], strides = [1, 1]} : vector<8x512xf32> to vector<8x496xf32>
      %690 = vector.extract_strided_slice %285 {offsets = [0, 0], sizes = [8, 16], strides = [1, 1]} : vector<8x512xf32> to vector<8x16xf32>
      %691 = tpu.concatenate %689, %690 in 1 : vector<8x496xf32>, vector<8x16xf32> -> vector<8x512xf32>
      %692 = vector.extract_strided_slice %691 {offsets = [0, 0], sizes = [1, 512], strides = [1, 1]} : vector<8x512xf32> to vector<1x512xf32>
      %693 = vector.shape_cast %692 : vector<1x512xf32> to vector<1x512xf32>
      %694 = vector.broadcast %693 : vector<1x512xf32> to vector<4x512xf32>
      %c7_368 = arith.constant 7 : index
      %c0_369 = arith.constant 0 : index
      %c0_370 = arith.constant 0 : index
      %c0_371 = arith.constant 0 : index
      %695 = vector.load %arg2[%c7_368, %c0_369, %c0_370, %c0_371] : memref<9x8x4x512xf32, #tpu.memory_space<vmem>>, vector<1x1x4x512xf32>
      %696 = vector.shape_cast %695 : vector<1x1x4x512xf32> to vector<4x512xf32>
      %697 = arith.mulf %696, %694 : vector<4x512xf32>
      %698 = vector.extract_strided_slice %691 {offsets = [1, 0], sizes = [1, 512], strides = [1, 1]} : vector<8x512xf32> to vector<1x512xf32>
      %699 = vector.shape_cast %698 : vector<1x512xf32> to vector<1x512xf32>
      %700 = vector.broadcast %699 : vector<1x512xf32> to vector<4x512xf32>
      %c7_372 = arith.constant 7 : index
      %c1_373 = arith.constant 1 : index
      %c0_374 = arith.constant 0 : index
      %c0_375 = arith.constant 0 : index
      %701 = vector.load %arg2[%c7_372, %c1_373, %c0_374, %c0_375] : memref<9x8x4x512xf32, #tpu.memory_space<vmem>>, vector<1x1x4x512xf32>
      %702 = vector.shape_cast %701 : vector<1x1x4x512xf32> to vector<4x512xf32>
      %703 = arith.mulf %702, %700 : vector<4x512xf32>
      %704 = arith.addf %697, %703 : vector<4x512xf32>
      %705 = vector.extract_strided_slice %691 {offsets = [2, 0], sizes = [1, 512], strides = [1, 1]} : vector<8x512xf32> to vector<1x512xf32>
      %706 = vector.shape_cast %705 : vector<1x512xf32> to vector<1x512xf32>
      %707 = vector.broadcast %706 : vector<1x512xf32> to vector<4x512xf32>
      %c7_376 = arith.constant 7 : index
      %c2_377 = arith.constant 2 : index
      %c0_378 = arith.constant 0 : index
      %c0_379 = arith.constant 0 : index
      %708 = vector.load %arg2[%c7_376, %c2_377, %c0_378, %c0_379] : memref<9x8x4x512xf32, #tpu.memory_space<vmem>>, vector<1x1x4x512xf32>
      %709 = vector.shape_cast %708 : vector<1x1x4x512xf32> to vector<4x512xf32>
      %710 = arith.mulf %709, %707 : vector<4x512xf32>
      %711 = arith.addf %704, %710 : vector<4x512xf32>
      %712 = vector.extract_strided_slice %691 {offsets = [3, 0], sizes = [1, 512], strides = [1, 1]} : vector<8x512xf32> to vector<1x512xf32>
      %713 = vector.shape_cast %712 : vector<1x512xf32> to vector<1x512xf32>
      %714 = vector.broadcast %713 : vector<1x512xf32> to vector<4x512xf32>
      %c7_380 = arith.constant 7 : index
      %c3_381 = arith.constant 3 : index
      %c0_382 = arith.constant 0 : index
      %c0_383 = arith.constant 0 : index
      %715 = vector.load %arg2[%c7_380, %c3_381, %c0_382, %c0_383] : memref<9x8x4x512xf32, #tpu.memory_space<vmem>>, vector<1x1x4x512xf32>
      %716 = vector.shape_cast %715 : vector<1x1x4x512xf32> to vector<4x512xf32>
      %717 = arith.mulf %716, %714 : vector<4x512xf32>
      %718 = arith.addf %711, %717 : vector<4x512xf32>
      %719 = vector.extract_strided_slice %691 {offsets = [4, 0], sizes = [1, 512], strides = [1, 1]} : vector<8x512xf32> to vector<1x512xf32>
      %720 = vector.shape_cast %719 : vector<1x512xf32> to vector<1x512xf32>
      %721 = vector.broadcast %720 : vector<1x512xf32> to vector<4x512xf32>
      %c7_384 = arith.constant 7 : index
      %c4_385 = arith.constant 4 : index
      %c0_386 = arith.constant 0 : index
      %c0_387 = arith.constant 0 : index
      %722 = vector.load %arg2[%c7_384, %c4_385, %c0_386, %c0_387] : memref<9x8x4x512xf32, #tpu.memory_space<vmem>>, vector<1x1x4x512xf32>
      %723 = vector.shape_cast %722 : vector<1x1x4x512xf32> to vector<4x512xf32>
      %724 = arith.mulf %723, %721 : vector<4x512xf32>
      %725 = arith.addf %718, %724 : vector<4x512xf32>
      %726 = vector.extract_strided_slice %691 {offsets = [5, 0], sizes = [1, 512], strides = [1, 1]} : vector<8x512xf32> to vector<1x512xf32>
      %727 = vector.shape_cast %726 : vector<1x512xf32> to vector<1x512xf32>
      %728 = vector.broadcast %727 : vector<1x512xf32> to vector<4x512xf32>
      %c7_388 = arith.constant 7 : index
      %c5_389 = arith.constant 5 : index
      %c0_390 = arith.constant 0 : index
      %c0_391 = arith.constant 0 : index
      %729 = vector.load %arg2[%c7_388, %c5_389, %c0_390, %c0_391] : memref<9x8x4x512xf32, #tpu.memory_space<vmem>>, vector<1x1x4x512xf32>
      %730 = vector.shape_cast %729 : vector<1x1x4x512xf32> to vector<4x512xf32>
      %731 = arith.mulf %730, %728 : vector<4x512xf32>
      %732 = arith.addf %725, %731 : vector<4x512xf32>
      %733 = vector.extract_strided_slice %691 {offsets = [6, 0], sizes = [1, 512], strides = [1, 1]} : vector<8x512xf32> to vector<1x512xf32>
      %734 = vector.shape_cast %733 : vector<1x512xf32> to vector<1x512xf32>
      %735 = vector.broadcast %734 : vector<1x512xf32> to vector<4x512xf32>
      %c7_392 = arith.constant 7 : index
      %c6_393 = arith.constant 6 : index
      %c0_394 = arith.constant 0 : index
      %c0_395 = arith.constant 0 : index
      %736 = vector.load %arg2[%c7_392, %c6_393, %c0_394, %c0_395] : memref<9x8x4x512xf32, #tpu.memory_space<vmem>>, vector<1x1x4x512xf32>
      %737 = vector.shape_cast %736 : vector<1x1x4x512xf32> to vector<4x512xf32>
      %738 = arith.mulf %737, %735 : vector<4x512xf32>
      %739 = arith.addf %732, %738 : vector<4x512xf32>
      %740 = vector.extract_strided_slice %691 {offsets = [7, 0], sizes = [1, 512], strides = [1, 1]} : vector<8x512xf32> to vector<1x512xf32>
      %741 = vector.shape_cast %740 : vector<1x512xf32> to vector<1x512xf32>
      %742 = vector.broadcast %741 : vector<1x512xf32> to vector<4x512xf32>
      %c7_396 = arith.constant 7 : index
      %c7_397 = arith.constant 7 : index
      %c0_398 = arith.constant 0 : index
      %c0_399 = arith.constant 0 : index
      %743 = vector.load %arg2[%c7_396, %c7_397, %c0_398, %c0_399] : memref<9x8x4x512xf32, #tpu.memory_space<vmem>>, vector<1x1x4x512xf32>
      %744 = vector.shape_cast %743 : vector<1x1x4x512xf32> to vector<4x512xf32>
      %745 = arith.mulf %744, %742 : vector<4x512xf32>
      %746 = arith.addf %739, %745 : vector<4x512xf32>
      %747 = vector.extract_strided_slice %285 {offsets = [0, 17], sizes = [8, 495], strides = [1, 1]} : vector<8x512xf32> to vector<8x495xf32>
      %748 = vector.extract_strided_slice %285 {offsets = [0, 0], sizes = [8, 17], strides = [1, 1]} : vector<8x512xf32> to vector<8x17xf32>
      %749 = tpu.concatenate %747, %748 in 1 : vector<8x495xf32>, vector<8x17xf32> -> vector<8x512xf32>
      %750 = vector.extract_strided_slice %749 {offsets = [0, 0], sizes = [1, 512], strides = [1, 1]} : vector<8x512xf32> to vector<1x512xf32>
      %751 = vector.shape_cast %750 : vector<1x512xf32> to vector<1x512xf32>
      %752 = vector.broadcast %751 : vector<1x512xf32> to vector<4x512xf32>
      %c8_400 = arith.constant 8 : index
      %c0_401 = arith.constant 0 : index
      %c0_402 = arith.constant 0 : index
      %c0_403 = arith.constant 0 : index
      %753 = vector.load %arg2[%c8_400, %c0_401, %c0_402, %c0_403] : memref<9x8x4x512xf32, #tpu.memory_space<vmem>>, vector<1x1x4x512xf32>
      %754 = vector.shape_cast %753 : vector<1x1x4x512xf32> to vector<4x512xf32>
      %755 = arith.mulf %754, %752 : vector<4x512xf32>
      %756 = vector.extract_strided_slice %749 {offsets = [1, 0], sizes = [1, 512], strides = [1, 1]} : vector<8x512xf32> to vector<1x512xf32>
      %757 = vector.shape_cast %756 : vector<1x512xf32> to vector<1x512xf32>
      %758 = vector.broadcast %757 : vector<1x512xf32> to vector<4x512xf32>
      %c8_404 = arith.constant 8 : index
      %c1_405 = arith.constant 1 : index
      %c0_406 = arith.constant 0 : index
      %c0_407 = arith.constant 0 : index
      %759 = vector.load %arg2[%c8_404, %c1_405, %c0_406, %c0_407] : memref<9x8x4x512xf32, #tpu.memory_space<vmem>>, vector<1x1x4x512xf32>
      %760 = vector.shape_cast %759 : vector<1x1x4x512xf32> to vector<4x512xf32>
      %761 = arith.mulf %760, %758 : vector<4x512xf32>
      %762 = arith.addf %755, %761 : vector<4x512xf32>
      %763 = vector.extract_strided_slice %749 {offsets = [2, 0], sizes = [1, 512], strides = [1, 1]} : vector<8x512xf32> to vector<1x512xf32>
      %764 = vector.shape_cast %763 : vector<1x512xf32> to vector<1x512xf32>
      %765 = vector.broadcast %764 : vector<1x512xf32> to vector<4x512xf32>
      %c8_408 = arith.constant 8 : index
      %c2_409 = arith.constant 2 : index
      %c0_410 = arith.constant 0 : index
      %c0_411 = arith.constant 0 : index
      %766 = vector.load %arg2[%c8_408, %c2_409, %c0_410, %c0_411] : memref<9x8x4x512xf32, #tpu.memory_space<vmem>>, vector<1x1x4x512xf32>
      %767 = vector.shape_cast %766 : vector<1x1x4x512xf32> to vector<4x512xf32>
      %768 = arith.mulf %767, %765 : vector<4x512xf32>
      %769 = arith.addf %762, %768 : vector<4x512xf32>
      %770 = vector.extract_strided_slice %749 {offsets = [3, 0], sizes = [1, 512], strides = [1, 1]} : vector<8x512xf32> to vector<1x512xf32>
      %771 = vector.shape_cast %770 : vector<1x512xf32> to vector<1x512xf32>
      %772 = vector.broadcast %771 : vector<1x512xf32> to vector<4x512xf32>
      %c8_412 = arith.constant 8 : index
      %c3_413 = arith.constant 3 : index
      %c0_414 = arith.constant 0 : index
      %c0_415 = arith.constant 0 : index
      %773 = vector.load %arg2[%c8_412, %c3_413, %c0_414, %c0_415] : memref<9x8x4x512xf32, #tpu.memory_space<vmem>>, vector<1x1x4x512xf32>
      %774 = vector.shape_cast %773 : vector<1x1x4x512xf32> to vector<4x512xf32>
      %775 = arith.mulf %774, %772 : vector<4x512xf32>
      %776 = arith.addf %769, %775 : vector<4x512xf32>
      %777 = vector.extract_strided_slice %749 {offsets = [4, 0], sizes = [1, 512], strides = [1, 1]} : vector<8x512xf32> to vector<1x512xf32>
      %778 = vector.shape_cast %777 : vector<1x512xf32> to vector<1x512xf32>
      %779 = vector.broadcast %778 : vector<1x512xf32> to vector<4x512xf32>
      %c8_416 = arith.constant 8 : index
      %c4_417 = arith.constant 4 : index
      %c0_418 = arith.constant 0 : index
      %c0_419 = arith.constant 0 : index
      %780 = vector.load %arg2[%c8_416, %c4_417, %c0_418, %c0_419] : memref<9x8x4x512xf32, #tpu.memory_space<vmem>>, vector<1x1x4x512xf32>
      %781 = vector.shape_cast %780 : vector<1x1x4x512xf32> to vector<4x512xf32>
      %782 = arith.mulf %781, %779 : vector<4x512xf32>
      %783 = arith.addf %776, %782 : vector<4x512xf32>
      %784 = vector.extract_strided_slice %749 {offsets = [5, 0], sizes = [1, 512], strides = [1, 1]} : vector<8x512xf32> to vector<1x512xf32>
      %785 = vector.shape_cast %784 : vector<1x512xf32> to vector<1x512xf32>
      %786 = vector.broadcast %785 : vector<1x512xf32> to vector<4x512xf32>
      %c8_420 = arith.constant 8 : index
      %c5_421 = arith.constant 5 : index
      %c0_422 = arith.constant 0 : index
      %c0_423 = arith.constant 0 : index
      %787 = vector.load %arg2[%c8_420, %c5_421, %c0_422, %c0_423] : memref<9x8x4x512xf32, #tpu.memory_space<vmem>>, vector<1x1x4x512xf32>
      %788 = vector.shape_cast %787 : vector<1x1x4x512xf32> to vector<4x512xf32>
      %789 = arith.mulf %788, %786 : vector<4x512xf32>
      %790 = arith.addf %783, %789 : vector<4x512xf32>
      %791 = vector.extract_strided_slice %749 {offsets = [6, 0], sizes = [1, 512], strides = [1, 1]} : vector<8x512xf32> to vector<1x512xf32>
      %792 = vector.shape_cast %791 : vector<1x512xf32> to vector<1x512xf32>
      %793 = vector.broadcast %792 : vector<1x512xf32> to vector<4x512xf32>
      %c8_424 = arith.constant 8 : index
      %c6_425 = arith.constant 6 : index
      %c0_426 = arith.constant 0 : index
      %c0_427 = arith.constant 0 : index
      %794 = vector.load %arg2[%c8_424, %c6_425, %c0_426, %c0_427] : memref<9x8x4x512xf32, #tpu.memory_space<vmem>>, vector<1x1x4x512xf32>
      %795 = vector.shape_cast %794 : vector<1x1x4x512xf32> to vector<4x512xf32>
      %796 = arith.mulf %795, %793 : vector<4x512xf32>
      %797 = arith.addf %790, %796 : vector<4x512xf32>
      %798 = vector.extract_strided_slice %749 {offsets = [7, 0], sizes = [1, 512], strides = [1, 1]} : vector<8x512xf32> to vector<1x512xf32>
      %799 = vector.shape_cast %798 : vector<1x512xf32> to vector<1x512xf32>
      %800 = vector.broadcast %799 : vector<1x512xf32> to vector<4x512xf32>
      %c8_428 = arith.constant 8 : index
      %c7_429 = arith.constant 7 : index
      %c0_430 = arith.constant 0 : index
      %c0_431 = arith.constant 0 : index
      %801 = vector.load %arg2[%c8_428, %c7_429, %c0_430, %c0_431] : memref<9x8x4x512xf32, #tpu.memory_space<vmem>>, vector<1x1x4x512xf32>
      %802 = vector.shape_cast %801 : vector<1x1x4x512xf32> to vector<4x512xf32>
      %803 = arith.mulf %802, %800 : vector<4x512xf32>
      %804 = arith.addf %797, %803 : vector<4x512xf32>
      %805 = arith.addf %0, %343 : vector<4x512xf32>
      %806 = arith.addf %401, %459 : vector<4x512xf32>
      %807 = arith.addf %517, %572 : vector<4x512xf32>
      %808 = arith.addf %630, %688 : vector<4x512xf32>
      %809 = arith.addf %746, %804 : vector<4x512xf32>
      %810 = arith.addf %805, %806 : vector<4x512xf32>
      %811 = arith.addf %807, %808 : vector<4x512xf32>
      %812 = arith.addf %810, %811 : vector<4x512xf32>
      %813 = arith.addf %812, %809 : vector<4x512xf32>
      %cst_432 = arith.constant 0.00999999977 : f32
      %814 = vector.broadcast %cst_432 : f32 to vector<4x512xf32>
      %815 = arith.mulf %814, %813 : vector<4x512xf32>
      %816 = arith.addf %arg7, %815 : vector<4x512xf32>
      scf.yield %816 : vector<4x512xf32>
    }
    %c100_i32_3 = arith.constant 100 : i32
    %c0_4 = arith.constant 0 : index
    %c0_5 = arith.constant 0 : index
    %4 = vector.load %arg5[%c0_4, %c0_5] : memref<4x512xf32, #tpu.memory_space<vmem>>, vector<4x512xf32>
    tpu.vector_store %arg5[%c0_4, %c0_5], %3 {strides = array<i32>} : memref<4x512xf32, #tpu.memory_space<vmem>>, vector<4x512xf32>,
    return
  }
}

</mosaic_0001>

<llo_original>
// kernel: tpu_custom_call.1
$region0: #{tpu_custom_call.1}
  #allocation0 [shape = 'u32[]', space=smem, size = 0x4, offset = 0x4, fixed_abs, tag = 'smem constant byte address 0x4 - core index']
  #allocation1 [shape = 'u32[144,128]{1,0:T(1,128)}', space=vmem, size = 0x12000, scoped, tag = 'internal scratch']
  %s0 = inlined_call_operand.hbm [shape: f32[4,512], index: 0, kind: input, shape index: {}]
  %s1 = inlined_call_operand.hbm [shape: f32[9,4,8,512], index: 1, kind: input, shape index: {}]
  %s2 = inlined_call_operand.hbm [shape: f32[9,8,4,512], index: 2, kind: input, shape index: {}]
  %s3 = inlined_call_operand.hbm [shape: f32[100,8,512], index: 3, kind: input, shape index: {}]
  %s4 = inlined_call_operand.hbm [shape: f32[4,512], index: 4, kind: input, shape index: {}]
  %s5 = inlined_call_operand.hbm [shape: f32[4,512], index: 5, kind: output, shape index: {}]
  %s6 = sld [smem:[#allocation0]]
  $region57: #{tpu_custom_call.1} parent=0
    _
  %s8 = ssub.s32 1, %s6
  %s9 = scalar_select 0, %s8, %s6
  $region1: #{tpu_custom_call.1} parent=0
    #allocation2 [shape = 'u8[8192]{0}', space=vmem, size = 0x2000, scoped, tag = 'input window, operand 0, single buffered']
    #allocation3 [shape = 's32[1]{0}', space=sflag, size = 0x4, scoped, tag = 'scoped memory for tpu_custom_call.1']
    #allocation4 [shape = 's32[1]{0}', space=sflag, size = 0x4, scoped, tag = 'scoped memory for tpu_custom_call.1']
    #allocation5 [shape = 'u8[589824]{0}', space=vmem, size = 0x90000, scoped, tag = 'input window, operand 1, single buffered']
    #allocation6 [shape = 's32[1]{0}', space=sflag, size = 0x4, scoped, tag = 'scoped memory for tpu_custom_call.1']
    #allocation7 [shape = 'u8[589824]{0}', space=vmem, size = 0x90000, scoped, tag = 'input window, operand 2, single buffered']
    #allocation8 [shape = 'u8[1638400]{0}', space=vmem, size = 0x190000, scoped, tag = 'input window, operand 3, single buffered']
    #allocation9 [shape = 's32[1]{0}', space=sflag, size = 0x4, scoped, tag = 'scoped memory for tpu_custom_call.1']
    #allocation10 [shape = 'u8[8192]{0}', space=vmem, size = 0x2000, scoped, tag = 'input window, operand 4, single buffered']
    #allocation11 [shape = 'u8[8192]{0}', space=vmem, size = 0x2000, scoped, tag = 'output window, operand 0, single buffered']
    %10 = vsyncpa [#allocation3], 0
    %11 = vsyncpa [#allocation6], 0
    %12 = vsyncpa [#allocation9], 0
    %13 = vsyncpa [#allocation4], 0
    // Predicated region
    $region2: #{tpu_custom_call.1} parent=1 // pred_check
      _
    $region3: #{tpu_custom_call.1} parent=1 // pred_check_branch
      %15 = sbr.rel (0) target = $region5
    $region4: #{tpu_custom_call.1} parent=1 // pred_region
      %s17 = ssub.s32 256, 256
      %18 = vsyncadd [#allocation3], %s17
      %s20 = sshll.u32 [#allocation2], 4
      %s21 = int_to_ptr.vmem [resolvable:$true] %s20
      %23 = dma.hbm_to_vmem [thread:$0]  %s0, 256, %s21, [#allocation3]
    $region5: #{tpu_custom_call.1} parent=1 // pred_fallthru
      _
    // Predicated region
    $region6: #{tpu_custom_call.1} parent=1 // pred_check
      _
    $region7: #{tpu_custom_call.1} parent=1 // pred_check_branch
      %25 = sbr.rel (0) target = $region9
    $region8: #{tpu_custom_call.1} parent=1 // pred_region
      %s27 = ssub.s32 18432, 18432
      %28 = vsyncadd [#allocation6], %s27
      %s29 = sshll.u32 [#allocation5], 4
      %s30 = int_to_ptr.vmem [resolvable:$true] %s29
      %35 = dma.hbm_to_vmem [thread:$0]  %s1, 18432, %s30, [#allocation6], 512, 512, 32
    $region9: #{tpu_custom_call.1} parent=1 // pred_fallthru
      _
    // Predicated region
    $region10: #{tpu_custom_call.1} parent=1 // pred_check
      _
    $region11: #{tpu_custom_call.1} parent=1 // pred_check_branch
      %37 = sbr.rel (0) target = $region13
    $region12: #{tpu_custom_call.1} parent=1 // pred_region
      %s39 = ssub.s32 18432, 18432
      %40 = vsyncadd [#allocation6], %s39
      %s41 = sshll.u32 [#allocation7], 4
      %s42 = int_to_ptr.vmem [resolvable:$true] %s41
      %47 = dma.hbm_to_vmem [thread:$0]  %s2, 18432, %s42, [#allocation6], 256, 256, 16
    $region13: #{tpu_custom_call.1} parent=1 // pred_fallthru
      _
    // Predicated region
    $region14: #{tpu_custom_call.1} parent=1 // pred_check
      _
    $region15: #{tpu_custom_call.1} parent=1 // pred_check_branch
      %49 = sbr.rel (0) target = $region17
    $region16: #{tpu_custom_call.1} parent=1 // pred_region
      %s51 = ssub.s32 51200, 51200
      %52 = vsyncadd [#allocation9], %s51
      %s53 = sshll.u32 [#allocation8], 4
      %s54 = int_to_ptr.vmem [resolvable:$true] %s53
      %59 = dma.hbm_to_vmem [thread:$0]  %s3, 51200, %s54, [#allocation9], 512, 512, 32
    $region17: #{tpu_custom_call.1} parent=1 // pred_fallthru
      _
    // Predicated region
    $region18: #{tpu_custom_call.1} parent=1 // pred_check
      _
    $region19: #{tpu_custom_call.1} parent=1 // pred_check_branch
      %61 = sbr.rel (0) target = $region21
    $region20: #{tpu_custom_call.1} parent=1 // pred_region
      %s63 = ssub.s32 256, 256
      %64 = vsyncadd [#allocation9], %s63
      %s66 = sshll.u32 [#allocation10], 4
      %s67 = int_to_ptr.vmem [resolvable:$true] %s66
      %69 = dma.hbm_to_vmem [thread:$0]  %s4, 256, %s67, [#allocation9]
    $region21: #{tpu_custom_call.1} parent=1 // pred_fallthru
      _
    // Predicated region
    $region22: #{tpu_custom_call.1} parent=1 // pred_check
      _
    $region23: #{tpu_custom_call.1} parent=1 // pred_check_branch
      %71 = sbr.rel (0) target = $region25
    $region24: #{tpu_custom_call.1} parent=1 // pred_region
      %72 = dma.done [#allocation3], 256
    $region25: #{tpu_custom_call.1} parent=1 // pred_fallthru
      _
    // Predicated region
    $region26: #{tpu_custom_call.1} parent=1 // pred_check
      _
    $region27: #{tpu_custom_call.1} parent=1 // pred_check_branch
      %74 = sbr.rel (0) target = $region29
    $region28: #{tpu_custom_call.1} parent=1 // pred_region
      %75 = dma.done [#allocation6], 18432
    $region29: #{tpu_custom_call.1} parent=1 // pred_fallthru
      _
    // Predicated region
    $region30: #{tpu_custom_call.1} parent=1 // pred_check
      _
    $region31: #{tpu_custom_call.1} parent=1 // pred_check_branch
      %77 = sbr.rel (0) target = $region33
    $region32: #{tpu_custom_call.1} parent=1 // pred_region
      %78 = dma.done [#allocation6], 18432
    $region33: #{tpu_custom_call.1} parent=1 // pred_fallthru
      _
    // Predicated region
    $region34: #{tpu_custom_call.1} parent=1 // pred_check
      _
    $region35: #{tpu_custom_call.1} parent=1 // pred_check_branch
      %80 = sbr.rel (0) target = $region37
    $region36: #{tpu_custom_call.1} parent=1 // pred_region
      %81 = dma.done [#allocation9], 51200
    $region37: #{tpu_custom_call.1} parent=1 // pred_fallthru
      _
    // Predicated region
    $region38: #{tpu_custom_call.1} parent=1 // pred_check
      _
    $region39: #{tpu_custom_call.1} parent=1 // pred_check_branch
      %83 = sbr.rel (0) target = $region41
    $region40: #{tpu_custom_call.1} parent=1 // pred_region
      %84 = dma.done [#allocation9], 256
    $region41: #{tpu_custom_call.1} parent=1 // pred_fallthru
      _
    %v85 = vld [vmem:[#allocation10] sm:$0xff]
    %v86 = vld [vmem:[#allocation10 + $0x8] sm:$0xff]
    %v87 = vld [vmem:[#allocation2] sm:$0xff]
    %v88 = vld [vmem:[#allocation2 + $0x8] sm:$0xff]
    loop: start=0, step=1, limit=100
    $region42: #{tpu_custom_call.1} parent=1 // loop_pre_header
      _
    $region43: #{tpu_custom_call.1} parent=1 // loop_header
      %s90 = sphi 0, %s94
      %p91 = scmp.ge.s32.totalorder %s90, 100
      %v95 = vphi %v87, %v3752
      %v96 = vphi %v88, %v3753
    $region44: #{tpu_custom_call.1} parent=1 // loop_header_branch
      %93 = sbr.rel (%p91) target = $region48
    $region45: #{tpu_custom_call.1} parent=1 // loop_body
      %s97 = smul.u32 %s90, 4
      %s98 = smul.addr %s97, 8
      %s99 = scalar_lea.vmem [#allocation8], %s98
      %v100 = vld [vmem:[%s99] sm:$0xff]
      %v101 = vld [vmem:[%s99 + $0x8] sm:$0xff]
      %v102 = vld [vmem:[%s99 + $0x10] sm:$0xff]
      %v103 = vld [vmem:[%s99 + $0x18] sm:$0xff]
      %v105 = vcombine.high %v96, %v96
      %106 = vrot.lane.b32.xlu0 %v105, 17
      %v107 = vpop.permute.xlu0 %106
      %v110 = vcombine.high %v95, %v95
      %111 = vrot.lane.b32.xlu0 %v95, 17
      %v112 = vpop.permute.xlu0 %111
      %113 = vrot.lane.b32.xlu0 %v110, 17
      %v114 = vpop.permute.xlu0 %113
      %115 = vrot.lane.b32.xlu0 %v96, 17
      %v116 = vpop.permute.xlu0 %115
      %vm117 = vcmask 138240
      %v118 = vsel %vm117, %v112, %v114
      %v119 = vsel %vm117, %v114, %v116
      %v120 = vsel %vm117, %v116, %v107
      %v125 = vsel %vm117, %v107, %v112
      %v126 = vlaneseq
      %v127 = vshrl.u32 %v126, 7
      %v128 = vsub.s32 0, %v127
      %v129 = vrot.slane %v125, %v128
      %v130 = vlaneseq
      %v131 = vshrl.u32 %v130, 7
      %v132 = vsub.s32 0, %v131
      %v133 = vrot.slane %v118, %v132
      %v134 = vlaneseq
      %v135 = vshrl.u32 %v134, 7
      %v136 = vsub.s32 0, %v135
      %v137 = vrot.slane %v119, %v136
      %v138 = vlaneseq
      %v139 = vshrl.u32 %v138, 7
      %v140 = vsub.s32 0, %v139
      %v141 = vrot.slane %v120, %v140
      %v142 = vld [vmem:[#allocation5] sm:$0xff]
      %v143 = vld [vmem:[#allocation5 + $0x8] sm:$0xff]
      %v144 = vld [vmem:[#allocation5 + $0x10] sm:$0xff]
      %v145 = vld [vmem:[#allocation5 + $0x18] sm:$0xff]
      %v146 = vmul.f32 %v142, %v129
      %v147 = vmul.f32 %v143, %v133
      %v148 = vmul.f32 %v144, %v137
      %v149 = vmul.f32 %v145, %v141
      %v150 = vlaneseq
      %v151 = vshrl.u32 %v150, 7
      %v152 = vsub.s32 1, %v151
      %v153 = vrot.slane %v125, %v152
      %v154 = vlaneseq
      %v155 = vshrl.u32 %v154, 7
      %v156 = vsub.s32 1, %v155
      %v157 = vrot.slane %v118, %v156
      %v158 = vlaneseq
      %v159 = vshrl.u32 %v158, 7
      %v160 = vsub.s32 1, %v159
      %v161 = vrot.slane %v119, %v160
      %v162 = vlaneseq
      %v163 = vshrl.u32 %v162, 7
      %v164 = vsub.s32 1, %v163
      %v165 = vrot.slane %v120, %v164
      %s166 = scalar_lea.vmem [#allocation5], 32
      %v167 = vld [vmem:[%s166] sm:$0xff]
      %v168 = vld [vmem:[%s166 + $0x8] sm:$0xff]
      %v169 = vld [vmem:[%s166 + $0x10] sm:$0xff]
      %v170 = vld [vmem:[%s166 + $0x18] sm:$0xff]
      %v171 = vmul.f32 %v167, %v153
      %v172 = vmul.f32 %v168, %v157
      %v173 = vmul.f32 %v169, %v161
      %v174 = vmul.f32 %v170, %v165
      %v175 = vadd.f32 %v146, %v171
      %v176 = vadd.f32 %v147, %v172
      %v177 = vadd.f32 %v148, %v173
      %v178 = vadd.f32 %v149, %v174
      %v179 = vlaneseq
      %v180 = vshrl.u32 %v179, 7
      %v181 = vsub.s32 2, %v180
      %v182 = vrot.slane %v125, %v181
      %v183 = vlaneseq
      %v184 = vshrl.u32 %v183, 7
      %v185 = vsub.s32 2, %v184
      %v186 = vrot.slane %v118, %v185
      %v187 = vlaneseq
      %v188 = vshrl.u32 %v187, 7
      %v189 = vsub.s32 2, %v188
      %v190 = vrot.slane %v119, %v189
      %v191 = vlaneseq
      %v192 = vshrl.u32 %v191, 7
      %v193 = vsub.s32 2, %v192
      %v194 = vrot.slane %v120, %v193
      %s195 = scalar_lea.vmem [#allocation5], 64
      %v196 = vld [vmem:[%s195] sm:$0xff]
      %v197 = vld [vmem:[%s195 + $0x8] sm:$0xff]
      %v198 = vld [vmem:[%s195 + $0x10] sm:$0xff]
      %v199 = vld [vmem:[%s195 + $0x18] sm:$0xff]
      %v200 = vmul.f32 %v196, %v182
      %v201 = vmul.f32 %v197, %v186
      %v202 = vmul.f32 %v198, %v190
      %v203 = vmul.f32 %v199, %v194
      %v204 = vadd.f32 %v175, %v200
      %v205 = vadd.f32 %v176, %v201
      %v206 = vadd.f32 %v177, %v202
      %v207 = vadd.f32 %v178, %v203
      %v208 = vlaneseq
      %v209 = vshrl.u32 %v208, 7
      %v210 = vsub.s32 3, %v209
      %v211 = vrot.slane %v125, %v210
      %v212 = vlaneseq
      %v213 = vshrl.u32 %v212, 7
      %v214 = vsub.s32 3, %v213
      %v215 = vrot.slane %v118, %v214
      %v216 = vlaneseq
      %v217 = vshrl.u32 %v216, 7
      %v218 = vsub.s32 3, %v217
      %v219 = vrot.slane %v119, %v218
      %v220 = vlaneseq
      %v221 = vshrl.u32 %v220, 7
      %v222 = vsub.s32 3, %v221
      %v223 = vrot.slane %v120, %v222
      %s224 = scalar_lea.vmem [#allocation5], 96
      %v225 = vld [vmem:[%s224] sm:$0xff]
      %v226 = vld [vmem:[%s224 + $0x8] sm:$0xff]
      %v227 = vld [vmem:[%s224 + $0x10] sm:$0xff]
      %v228 = vld [vmem:[%s224 + $0x18] sm:$0xff]
      %v229 = vmul.f32 %v225, %v211
      %v230 = vmul.f32 %v226, %v215
      %v231 = vmul.f32 %v227, %v219
      %v232 = vmul.f32 %v228, %v223
      %v233 = vadd.f32 %v204, %v229
      %v234 = vadd.f32 %v205, %v230
      %v235 = vadd.f32 %v206, %v231
      %v236 = vadd.f32 %v207, %v232
      %237 = vrot.lane.b32.xlu0 %v105, 16
      %v238 = vpop.permute.xlu0 %237
      %240 = vrot.lane.b32.xlu0 %v95, 16
      %v241 = vpop.permute.xlu0 %240
      %242 = vrot.lane.b32.xlu0 %v110, 16
      %v243 = vpop.permute.xlu0 %242
      %244 = vrot.lane.b32.xlu0 %v96, 16
      %v245 = vpop.permute.xlu0 %244
      %vm246 = vcmask 130048
      %v247 = vsel %vm246, %v241, %v243
      %v248 = vsel %vm246, %v243, %v245
      %v249 = vsel %vm246, %v245, %v238
      %v254 = vsel %vm246, %v238, %v241
      %v255 = vlaneseq
      %v256 = vshrl.u32 %v255, 7
      %v257 = vsub.s32 0, %v256
      %v258 = vrot.slane %v254, %v257
      %v259 = vlaneseq
      %v260 = vshrl.u32 %v259, 7
      %v261 = vsub.s32 0, %v260
      %v262 = vrot.slane %v247, %v261
      %v263 = vlaneseq
      %v264 = vshrl.u32 %v263, 7
      %v265 = vsub.s32 0, %v264
      %v266 = vrot.slane %v248, %v265
      %v267 = vlaneseq
      %v268 = vshrl.u32 %v267, 7
      %v269 = vsub.s32 0, %v268
      %v270 = vrot.slane %v249, %v269
      %s271 = scalar_lea.vmem [#allocation5], 128
      %v272 = vld [vmem:[%s271] sm:$0xff]
      %v273 = vld [vmem:[%s271 + $0x8] sm:$0xff]
      %v274 = vld [vmem:[%s271 + $0x10] sm:$0xff]
      %v275 = vld [vmem:[%s271 + $0x18] sm:$0xff]
      %v276 = vmul.f32 %v272, %v258
      %v277 = vmul.f32 %v273, %v262
      %v278 = vmul.f32 %v274, %v266
      %v279 = vmul.f32 %v275, %v270
      %v280 = vlaneseq
      %v281 = vshrl.u32 %v280, 7
      %v282 = vsub.s32 1, %v281
      %v283 = vrot.slane %v254, %v282
      %v284 = vlaneseq
      %v285 = vshrl.u32 %v284, 7
      %v286 = vsub.s32 1, %v285
      %v287 = vrot.slane %v247, %v286
      %v288 = vlaneseq
      %v289 = vshrl.u32 %v288, 7
      %v290 = vsub.s32 1, %v289
      %v291 = vrot.slane %v248, %v290
      %v292 = vlaneseq
      %v293 = vshrl.u32 %v292, 7
      %v294 = vsub.s32 1, %v293
      %v295 = vrot.slane %v249, %v294
      %s296 = scalar_lea.vmem [#allocation5], 160
      %v297 = vld [vmem:[%s296] sm:$0xff]
      %v298 = vld [vmem:[%s296 + $0x8] sm:$0xff]
      %v299 = vld [vmem:[%s296 + $0x10] sm:$0xff]
      %v300 = vld [vmem:[%s296 + $0x18] sm:$0xff]
      %v301 = vmul.f32 %v297, %v283
      %v302 = vmul.f32 %v298, %v287
      %v303 = vmul.f32 %v299, %v291
      %v304 = vmul.f32 %v300, %v295
      %v305 = vadd.f32 %v276, %v301
      %v306 = vadd.f32 %v277, %v302
      %v307 = vadd.f32 %v278, %v303
      %v308 = vadd.f32 %v279, %v304
      %v309 = vlaneseq
      %v310 = vshrl.u32 %v309, 7
      %v311 = vsub.s32 2, %v310
      %v312 = vrot.slane %v254, %v311
      %v313 = vlaneseq
      %v314 = vshrl.u32 %v313, 7
      %v315 = vsub.s32 2, %v314
      %v316 = vrot.slane %v247, %v315
      %v317 = vlaneseq
      %v318 = vshrl.u32 %v317, 7
      %v319 = vsub.s32 2, %v318
      %v320 = vrot.slane %v248, %v319
      %v321 = vlaneseq
      %v322 = vshrl.u32 %v321, 7
      %v323 = vsub.s32 2, %v322
      %v324 = vrot.slane %v249, %v323
      %s325 = scalar_lea.vmem [#allocation5], 192
      %v326 = vld [vmem:[%s325] sm:$0xff]
      %v327 = vld [vmem:[%s325 + $0x8] sm:$0xff]
      %v328 = vld [vmem:[%s325 + $0x10] sm:$0xff]
      %v329 = vld [vmem:[%s325 + $0x18] sm:$0xff]
      %v330 = vmul.f32 %v326, %v312
      %v331 = vmul.f32 %v327, %v316
      %v332 = vmul.f32 %v328, %v320
      %v333 = vmul.f32 %v329, %v324
      %v334 = vadd.f32 %v305, %v330
      %v335 = vadd.f32 %v306, %v331
      %v336 = vadd.f32 %v307, %v332
      %v337 = vadd.f32 %v308, %v333
      %v338 = vlaneseq
      %v339 = vshrl.u32 %v338, 7
      %v340 = vsub.s32 3, %v339
      %v341 = vrot.slane %v254, %v340
      %v342 = vlaneseq
      %v343 = vshrl.u32 %v342, 7
      %v344 = vsub.s32 3, %v343
      %v345 = vrot.slane %v247, %v344
      %v346 = vlaneseq
      %v347 = vshrl.u32 %v346, 7
      %v348 = vsub.s32 3, %v347
      %v349 = vrot.slane %v248, %v348
      %v350 = vlaneseq
      %v351 = vshrl.u32 %v350, 7
      %v352 = vsub.s32 3, %v351
      %v353 = vrot.slane %v249, %v352
      %s354 = scalar_lea.vmem [#allocation5], 224
      %v355 = vld [vmem:[%s354] sm:$0xff]
      %v356 = vld [vmem:[%s354 + $0x8] sm:$0xff]
      %v357 = vld [vmem:[%s354 + $0x10] sm:$0xff]
      %v358 = vld [vmem:[%s354 + $0x18] sm:$0xff]
      %v359 = vmul.f32 %v355, %v341
      %v360 = vmul.f32 %v356, %v345
      %v361 = vmul.f32 %v357, %v349
      %v362 = vmul.f32 %v358, %v353
      %v363 = vadd.f32 %v334, %v359
      %v364 = vadd.f32 %v335, %v360
      %v365 = vadd.f32 %v336, %v361
      %v366 = vadd.f32 %v337, %v362
      %367 = vrot.lane.b32.xlu0 %v105, 15
      %v368 = vpop.permute.xlu0 %367
      %370 = vrot.lane.b32.xlu0 %v95, 15
      %v371 = vpop.permute.xlu0 %370
      %372 = vrot.lane.b32.xlu0 %v110, 15
      %v373 = vpop.permute.xlu0 %372
      %374 = vrot.lane.b32.xlu0 %v96, 15
      %v375 = vpop.permute.xlu0 %374
      %vm376 = vcmask 121856
      %v377 = vsel %vm376, %v371, %v373
      %v378 = vsel %vm376, %v373, %v375
      %v379 = vsel %vm376, %v375, %v368
      %v384 = vsel %vm376, %v368, %v371
      %v385 = vlaneseq
      %v386 = vshrl.u32 %v385, 7
      %v387 = vsub.s32 0, %v386
      %v388 = vrot.slane %v384, %v387
      %v389 = vlaneseq
      %v390 = vshrl.u32 %v389, 7
      %v391 = vsub.s32 0, %v390
      %v392 = vrot.slane %v377, %v391
      %v393 = vlaneseq
      %v394 = vshrl.u32 %v393, 7
      %v395 = vsub.s32 0, %v394
      %v396 = vrot.slane %v378, %v395
      %v397 = vlaneseq
      %v398 = vshrl.u32 %v397, 7
      %v399 = vsub.s32 0, %v398
      %v400 = vrot.slane %v379, %v399
      %s401 = scalar_lea.vmem [#allocation5], 256
      %v402 = vld [vmem:[%s401] sm:$0xff]
      %v403 = vld [vmem:[%s401 + $0x8] sm:$0xff]
      %v404 = vld [vmem:[%s401 + $0x10] sm:$0xff]
      %v405 = vld [vmem:[%s401 + $0x18] sm:$0xff]
      %v406 = vmul.f32 %v402, %v388
      %v407 = vmul.f32 %v403, %v392
      %v408 = vmul.f32 %v404, %v396
      %v409 = vmul.f32 %v405, %v400
      %v410 = vlaneseq
      %v411 = vshrl.u32 %v410, 7
      %v412 = vsub.s32 1, %v411
      %v413 = vrot.slane %v384, %v412
      %v414 = vlaneseq
      %v415 = vshrl.u32 %v414, 7
      %v416 = vsub.s32 1, %v415
      %v417 = vrot.slane %v377, %v416
      %v418 = vlaneseq
      %v419 = vshrl.u32 %v418, 7
      %v420 = vsub.s32 1, %v419
      %v421 = vrot.slane %v378, %v420
      %v422 = vlaneseq
      %v423 = vshrl.u32 %v422, 7
      %v424 = vsub.s32 1, %v423
      %v425 = vrot.slane %v379, %v424
      %s426 = scalar_lea.vmem [#allocation5], 288
      %v427 = vld [vmem:[%s426] sm:$0xff]
      %v428 = vld [vmem:[%s426 + $0x8] sm:$0xff]
      %v429 = vld [vmem:[%s426 + $0x10] sm:$0xff]
      %v430 = vld [vmem:[%s426 + $0x18] sm:$0xff]
      %v431 = vmul.f32 %v427, %v413
      %v432 = vmul.f32 %v428, %v417
      %v433 = vmul.f32 %v429, %v421
      %v434 = vmul.f32 %v430, %v425
      %v435 = vadd.f32 %v406, %v431
      %v436 = vadd.f32 %v407, %v432
      %v437 = vadd.f32 %v408, %v433
      %v438 = vadd.f32 %v409, %v434
      %v439 = vlaneseq
      %v440 = vshrl.u32 %v439, 7
      %v441 = vsub.s32 2, %v440
      %v442 = vrot.slane %v384, %v441
      %v443 = vlaneseq
      %v444 = vshrl.u32 %v443, 7
      %v445 = vsub.s32 2, %v444
      %v446 = vrot.slane %v377, %v445
      %v447 = vlaneseq
      %v448 = vshrl.u32 %v447, 7
      %v449 = vsub.s32 2, %v448
      %v450 = vrot.slane %v378, %v449
      %v451 = vlaneseq
      %v452 = vshrl.u32 %v451, 7
      %v453 = vsub.s32 2, %v452
      %v454 = vrot.slane %v379, %v453
      %s455 = scalar_lea.vmem [#allocation5], 320
      %v456 = vld [vmem:[%s455] sm:$0xff]
      %v457 = vld [vmem:[%s455 + $0x8] sm:$0xff]
      %v458 = vld [vmem:[%s455 + $0x10] sm:$0xff]
      %v459 = vld [vmem:[%s455 + $0x18] sm:$0xff]
      %v460 = vmul.f32 %v456, %v442
      %v461 = vmul.f32 %v457, %v446
      %v462 = vmul.f32 %v458, %v450
      %v463 = vmul.f32 %v459, %v454
      %v464 = vadd.f32 %v435, %v460
      %v465 = vadd.f32 %v436, %v461
      %v466 = vadd.f32 %v437, %v462
      %v467 = vadd.f32 %v438, %v463
      %v468 = vlaneseq
      %v469 = vshrl.u32 %v468, 7
      %v470 = vsub.s32 3, %v469
      %v471 = vrot.slane %v384, %v470
      %v472 = vlaneseq
      %v473 = vshrl.u32 %v472, 7
      %v474 = vsub.s32 3, %v473
      %v475 = vrot.slane %v377, %v474
      %v476 = vlaneseq
      %v477 = vshrl.u32 %v476, 7
      %v478 = vsub.s32 3, %v477
      %v479 = vrot.slane %v378, %v478
      %v480 = vlaneseq
      %v481 = vshrl.u32 %v480, 7
      %v482 = vsub.s32 3, %v481
      %v483 = vrot.slane %v379, %v482
      %s484 = scalar_lea.vmem [#allocation5], 352
      %v485 = vld [vmem:[%s484] sm:$0xff]
      %v486 = vld [vmem:[%s484 + $0x8] sm:$0xff]
      %v487 = vld [vmem:[%s484 + $0x10] sm:$0xff]
      %v488 = vld [vmem:[%s484 + $0x18] sm:$0xff]
      %v489 = vmul.f32 %v485, %v471
      %v490 = vmul.f32 %v486, %v475
      %v491 = vmul.f32 %v487, %v479
      %v492 = vmul.f32 %v488, %v483
      %v493 = vadd.f32 %v464, %v489
      %v494 = vadd.f32 %v465, %v490
      %v495 = vadd.f32 %v466, %v491
      %v496 = vadd.f32 %v467, %v492
      %497 = vrot.lane.b32.xlu0 %v105, 1
      %v498 = vpop.permute.xlu0 %497
      %500 = vrot.lane.b32.xlu0 %v95, 1
      %v501 = vpop.permute.xlu0 %500
      %502 = vrot.lane.b32.xlu0 %v110, 1
      %v503 = vpop.permute.xlu0 %502
      %504 = vrot.lane.b32.xlu0 %v96, 1
      %v505 = vpop.permute.xlu0 %504
      %vm506 = vcmask 7168
      %v507 = vsel %vm506, %v501, %v503
      %v508 = vsel %vm506, %v503, %v505
      %v509 = vsel %vm506, %v505, %v498
      %v514 = vsel %vm506, %v498, %v501
      %v515 = vlaneseq
      %v516 = vshrl.u32 %v515, 7
      %v517 = vsub.s32 0, %v516
      %v518 = vrot.slane %v514, %v517
      %v519 = vlaneseq
      %v520 = vshrl.u32 %v519, 7
      %v521 = vsub.s32 0, %v520
      %v522 = vrot.slane %v507, %v521
      %v523 = vlaneseq
      %v524 = vshrl.u32 %v523, 7
      %v525 = vsub.s32 0, %v524
      %v526 = vrot.slane %v508, %v525
      %v527 = vlaneseq
      %v528 = vshrl.u32 %v527, 7
      %v529 = vsub.s32 0, %v528
      %v530 = vrot.slane %v509, %v529
      %s531 = scalar_lea.vmem [#allocation5], 384
      %v532 = vld [vmem:[%s531] sm:$0xff]
      %v533 = vld [vmem:[%s531 + $0x8] sm:$0xff]
      %v534 = vld [vmem:[%s531 + $0x10] sm:$0xff]
      %v535 = vld [vmem:[%s531 + $0x18] sm:$0xff]
      %v536 = vmul.f32 %v532, %v518
      %v537 = vmul.f32 %v533, %v522
      %v538 = vmul.f32 %v534, %v526
      %v539 = vmul.f32 %v535, %v530
      %v540 = vlaneseq
      %v541 = vshrl.u32 %v540, 7
      %v542 = vsub.s32 1, %v541
      %v543 = vrot.slane %v514, %v542
      %v544 = vlaneseq
      %v545 = vshrl.u32 %v544, 7
      %v546 = vsub.s32 1, %v545
      %v547 = vrot.slane %v507, %v546
      %v548 = vlaneseq
      %v549 = vshrl.u32 %v548, 7
      %v550 = vsub.s32 1, %v549
      %v551 = vrot.slane %v508, %v550
      %v552 = vlaneseq
      %v553 = vshrl.u32 %v552, 7
      %v554 = vsub.s32 1, %v553
      %v555 = vrot.slane %v509, %v554
      %s556 = scalar_lea.vmem [#allocation5], 416
      %v557 = vld [vmem:[%s556] sm:$0xff]
      %v558 = vld [vmem:[%s556 + $0x8] sm:$0xff]
      %v559 = vld [vmem:[%s556 + $0x10] sm:$0xff]
      %v560 = vld [vmem:[%s556 + $0x18] sm:$0xff]
      %v561 = vmul.f32 %v557, %v543
      %v562 = vmul.f32 %v558, %v547
      %v563 = vmul.f32 %v559, %v551
      %v564 = vmul.f32 %v560, %v555
      %v565 = vadd.f32 %v536, %v561
      %v566 = vadd.f32 %v537, %v562
      %v567 = vadd.f32 %v538, %v563
      %v568 = vadd.f32 %v539, %v564
      %v569 = vlaneseq
      %v570 = vshrl.u32 %v569, 7
      %v571 = vsub.s32 2, %v570
      %v572 = vrot.slane %v514, %v571
      %v573 = vlaneseq
      %v574 = vshrl.u32 %v573, 7
      %v575 = vsub.s32 2, %v574
      %v576 = vrot.slane %v507, %v575
      %v577 = vlaneseq
      %v578 = vshrl.u32 %v577, 7
      %v579 = vsub.s32 2, %v578
      %v580 = vrot.slane %v508, %v579
      %v581 = vlaneseq
      %v582 = vshrl.u32 %v581, 7
      %v583 = vsub.s32 2, %v582
      %v584 = vrot.slane %v509, %v583
      %s585 = scalar_lea.vmem [#allocation5], 448
      %v586 = vld [vmem:[%s585] sm:$0xff]
      %v587 = vld [vmem:[%s585 + $0x8] sm:$0xff]
      %v588 = vld [vmem:[%s585 + $0x10] sm:$0xff]
      %v589 = vld [vmem:[%s585 + $0x18] sm:$0xff]
      %v590 = vmul.f32 %v586, %v572
      %v591 = vmul.f32 %v587, %v576
      %v592 = vmul.f32 %v588, %v580
      %v593 = vmul.f32 %v589, %v584
      %v594 = vadd.f32 %v565, %v590
      %v595 = vadd.f32 %v566, %v591
      %v596 = vadd.f32 %v567, %v592
      %v597 = vadd.f32 %v568, %v593
      %v598 = vlaneseq
      %v599 = vshrl.u32 %v598, 7
      %v600 = vsub.s32 3, %v599
      %v601 = vrot.slane %v514, %v600
      %v602 = vlaneseq
      %v603 = vshrl.u32 %v602, 7
      %v604 = vsub.s32 3, %v603
      %v605 = vrot.slane %v507, %v604
      %v606 = vlaneseq
      %v607 = vshrl.u32 %v606, 7
      %v608 = vsub.s32 3, %v607
      %v609 = vrot.slane %v508, %v608
      %v610 = vlaneseq
      %v611 = vshrl.u32 %v610, 7
      %v612 = vsub.s32 3, %v611
      %v613 = vrot.slane %v509, %v612
      %s614 = scalar_lea.vmem [#allocation5], 480
      %v615 = vld [vmem:[%s614] sm:$0xff]
      %v616 = vld [vmem:[%s614 + $0x8] sm:$0xff]
      %v617 = vld [vmem:[%s614 + $0x10] sm:$0xff]
      %v618 = vld [vmem:[%s614 + $0x18] sm:$0xff]
      %v619 = vmul.f32 %v615, %v601
      %v620 = vmul.f32 %v616, %v605
      %v621 = vmul.f32 %v617, %v609
      %v622 = vmul.f32 %v618, %v613
      %v623 = vadd.f32 %v594, %v619
      %v624 = vadd.f32 %v595, %v620
      %v625 = vadd.f32 %v596, %v621
      %v626 = vadd.f32 %v597, %v622
      %v627 = vlaneseq
      %v628 = vshrl.u32 %v627, 7
      %v629 = vsub.s32 0, %v628
      %v630 = vrot.slane %v95, %v629
      %v631 = vlaneseq
      %v632 = vshrl.u32 %v631, 7
      %v633 = vsub.s32 4, %v632
      %v634 = vrot.slane %v95, %v633
      %v635 = vlaneseq
      %v636 = vshrl.u32 %v635, 7
      %v637 = vsub.s32 0, %v636
      %v638 = vrot.slane %v96, %v637
      %v639 = vlaneseq
      %v640 = vshrl.u32 %v639, 7
      %v641 = vsub.s32 4, %v640
      %v642 = vrot.slane %v96, %v641
      %v647 = vlaneseq
      %v648 = vshrl.u32 %v647, 7
      %v649 = vsub.s32 0, %v648
      %v650 = vrot.slane %v630, %v649
      %v651 = vlaneseq
      %v652 = vshrl.u32 %v651, 7
      %v653 = vsub.s32 0, %v652
      %v654 = vrot.slane %v634, %v653
      %v655 = vlaneseq
      %v656 = vshrl.u32 %v655, 7
      %v657 = vsub.s32 0, %v656
      %v658 = vrot.slane %v638, %v657
      %v659 = vlaneseq
      %v660 = vshrl.u32 %v659, 7
      %v661 = vsub.s32 0, %v660
      %v662 = vrot.slane %v642, %v661
      %s663 = scalar_lea.vmem [#allocation5], 512
      %v664 = vld [vmem:[%s663] sm:$0xff]
      %v665 = vld [vmem:[%s663 + $0x8] sm:$0xff]
      %v666 = vld [vmem:[%s663 + $0x10] sm:$0xff]
      %v667 = vld [vmem:[%s663 + $0x18] sm:$0xff]
      %v668 = vmul.f32 %v664, %v650
      %v669 = vmul.f32 %v665, %v654
      %v670 = vmul.f32 %v666, %v658
      %v671 = vmul.f32 %v667, %v662
      %v672 = vlaneseq
      %v673 = vshrl.u32 %v672, 7
      %v674 = vsub.s32 1, %v673
      %v675 = vrot.slane %v95, %v674
      %v676 = vlaneseq
      %v677 = vshrl.u32 %v676, 7
      %v678 = vsub.s32 5, %v677
      %v679 = vrot.slane %v95, %v678
      %v680 = vlaneseq
      %v681 = vshrl.u32 %v680, 7
      %v682 = vsub.s32 1, %v681
      %v683 = vrot.slane %v96, %v682
      %v684 = vlaneseq
      %v685 = vshrl.u32 %v684, 7
      %v686 = vsub.s32 5, %v685
      %v687 = vrot.slane %v96, %v686
      %v692 = vlaneseq
      %v693 = vshrl.u32 %v692, 7
      %v694 = vsub.s32 1, %v693
      %v695 = vrot.slane %v675, %v694
      %v696 = vlaneseq
      %v697 = vshrl.u32 %v696, 7
      %v698 = vsub.s32 1, %v697
      %v699 = vrot.slane %v679, %v698
      %v700 = vlaneseq
      %v701 = vshrl.u32 %v700, 7
      %v702 = vsub.s32 1, %v701
      %v703 = vrot.slane %v683, %v702
      %v704 = vlaneseq
      %v705 = vshrl.u32 %v704, 7
      %v706 = vsub.s32 1, %v705
      %v707 = vrot.slane %v687, %v706
      %s708 = scalar_lea.vmem [#allocation5], 544
      %v709 = vld [vmem:[%s708] sm:$0xff]
      %v710 = vld [vmem:[%s708 + $0x8] sm:$0xff]
      %v711 = vld [vmem:[%s708 + $0x10] sm:$0xff]
      %v712 = vld [vmem:[%s708 + $0x18] sm:$0xff]
      %v713 = vmul.f32 %v709, %v695
      %v714 = vmul.f32 %v710, %v699
      %v715 = vmul.f32 %v711, %v703
      %v716 = vmul.f32 %v712, %v707
      %v717 = vadd.f32 %v668, %v713
      %v718 = vadd.f32 %v669, %v714
      %v719 = vadd.f32 %v670, %v715
      %v720 = vadd.f32 %v671, %v716
      %v721 = vlaneseq
      %v722 = vshrl.u32 %v721, 7
      %v723 = vsub.s32 2, %v722
      %v724 = vrot.slane %v95, %v723
      %v725 = vlaneseq
      %v726 = vshrl.u32 %v725, 7
      %v727 = vsub.s32 6, %v726
      %v728 = vrot.slane %v95, %v727
      %v729 = vlaneseq
      %v730 = vshrl.u32 %v729, 7
      %v731 = vsub.s32 2, %v730
      %v732 = vrot.slane %v96, %v731
      %v733 = vlaneseq
      %v734 = vshrl.u32 %v733, 7
      %v735 = vsub.s32 6, %v734
      %v736 = vrot.slane %v96, %v735
      %v741 = vlaneseq
      %v742 = vshrl.u32 %v741, 7
      %v743 = vsub.s32 2, %v742
      %v744 = vrot.slane %v724, %v743
      %v745 = vlaneseq
      %v746 = vshrl.u32 %v745, 7
      %v747 = vsub.s32 2, %v746
      %v748 = vrot.slane %v728, %v747
      %v749 = vlaneseq
      %v750 = vshrl.u32 %v749, 7
      %v751 = vsub.s32 2, %v750
      %v752 = vrot.slane %v732, %v751
      %v753 = vlaneseq
      %v754 = vshrl.u32 %v753, 7
      %v755 = vsub.s32 2, %v754
      %v756 = vrot.slane %v736, %v755
      %s757 = scalar_lea.vmem [#allocation5], 576
      %v758 = vld [vmem:[%s757] sm:$0xff]
      %v759 = vld [vmem:[%s757 + $0x8] sm:$0xff]
      %v760 = vld [vmem:[%s757 + $0x10] sm:$0xff]
      %v761 = vld [vmem:[%s757 + $0x18] sm:$0xff]
      %v762 = vmul.f32 %v758, %v744
      %v763 = vmul.f32 %v759, %v748
      %v764 = vmul.f32 %v760, %v752
      %v765 = vmul.f32 %v761, %v756
      %v766 = vadd.f32 %v717, %v762
      %v767 = vadd.f32 %v718, %v763
      %v768 = vadd.f32 %v719, %v764
      %v769 = vadd.f32 %v720, %v765
      %v770 = vlaneseq
      %v771 = vshrl.u32 %v770, 7
      %v772 = vsub.s32 3, %v771
      %v773 = vrot.slane %v95, %v772
      %v774 = vlaneseq
      %v775 = vshrl.u32 %v774, 7
      %v776 = vsub.s32 7, %v775
      %v777 = vrot.slane %v95, %v776
      %v778 = vlaneseq
      %v779 = vshrl.u32 %v778, 7
      %v780 = vsub.s32 3, %v779
      %v781 = vrot.slane %v96, %v780
      %v782 = vlaneseq
      %v783 = vshrl.u32 %v782, 7
      %v784 = vsub.s32 7, %v783
      %v785 = vrot.slane %v96, %v784
      %v790 = vlaneseq
      %v791 = vshrl.u32 %v790, 7
      %v792 = vsub.s32 3, %v791
      %v793 = vrot.slane %v773, %v792
      %v794 = vlaneseq
      %v795 = vshrl.u32 %v794, 7
      %v796 = vsub.s32 3, %v795
      %v797 = vrot.slane %v777, %v796
      %v798 = vlaneseq
      %v799 = vshrl.u32 %v798, 7
      %v800 = vsub.s32 3, %v799
      %v801 = vrot.slane %v781, %v800
      %v802 = vlaneseq
      %v803 = vshrl.u32 %v802, 7
      %v804 = vsub.s32 3, %v803
      %v805 = vrot.slane %v785, %v804
      %s806 = scalar_lea.vmem [#allocation5], 608
      %v807 = vld [vmem:[%s806] sm:$0xff]
      %v808 = vld [vmem:[%s806 + $0x8] sm:$0xff]
      %v809 = vld [vmem:[%s806 + $0x10] sm:$0xff]
      %v810 = vld [vmem:[%s806 + $0x18] sm:$0xff]
      %v811 = vmul.f32 %v807, %v793
      %v812 = vmul.f32 %v808, %v797
      %v813 = vmul.f32 %v809, %v801
      %v814 = vmul.f32 %v810, %v805
      %v815 = vadd.f32 %v766, %v811
      %v816 = vadd.f32 %v767, %v812
      %v817 = vadd.f32 %v768, %v813
      %v818 = vadd.f32 %v769, %v814
      %819 = vrot.lane.b32.xlu0 %v95, 127
      %v820 = vpop.permute.xlu0 %819
      %821 = vrot.lane.b32.xlu0 %v110, 127
      %v822 = vpop.permute.xlu0 %821
      %823 = vrot.lane.b32.xlu0 %v96, 127
      %v824 = vpop.permute.xlu0 %823
      %825 = vrot.lane.b32.xlu0 %v105, 127
      %v826 = vpop.permute.xlu0 %825
      %vm827 = vcmask 1039360
      %v828 = vsel %vm827, %v820, %v822
      %v829 = vsel %vm827, %v822, %v824
      %v830 = vsel %vm827, %v824, %v826
      %v836 = vsel %vm827, %v826, %v820
      %v837 = vlaneseq
      %v838 = vshrl.u32 %v837, 7
      %v839 = vsub.s32 0, %v838
      %v840 = vrot.slane %v828, %v839
      %v841 = vlaneseq
      %v842 = vshrl.u32 %v841, 7
      %v843 = vsub.s32 0, %v842
      %v844 = vrot.slane %v829, %v843
      %v845 = vlaneseq
      %v846 = vshrl.u32 %v845, 7
      %v847 = vsub.s32 0, %v846
      %v848 = vrot.slane %v830, %v847
      %v849 = vlaneseq
      %v850 = vshrl.u32 %v849, 7
      %v851 = vsub.s32 0, %v850
      %v852 = vrot.slane %v836, %v851
      %s853 = scalar_lea.vmem [#allocation5], 640
      %v854 = vld [vmem:[%s853] sm:$0xff]
      %v855 = vld [vmem:[%s853 + $0x8] sm:$0xff]
      %v856 = vld [vmem:[%s853 + $0x10] sm:$0xff]
      %v857 = vld [vmem:[%s853 + $0x18] sm:$0xff]
      %v858 = vmul.f32 %v854, %v840
      %v859 = vmul.f32 %v855, %v844
      %v860 = vmul.f32 %v856, %v848
      %v861 = vmul.f32 %v857, %v852
      %v862 = vlaneseq
      %v863 = vshrl.u32 %v862, 7
      %v864 = vsub.s32 1, %v863
      %v865 = vrot.slane %v828, %v864
      %v866 = vlaneseq
      %v867 = vshrl.u32 %v866, 7
      %v868 = vsub.s32 1, %v867
      %v869 = vrot.slane %v829, %v868
      %v870 = vlaneseq
      %v871 = vshrl.u32 %v870, 7
      %v872 = vsub.s32 1, %v871
      %v873 = vrot.slane %v830, %v872
      %v874 = vlaneseq
      %v875 = vshrl.u32 %v874, 7
      %v876 = vsub.s32 1, %v875
      %v877 = vrot.slane %v836, %v876
      %s878 = scalar_lea.vmem [#allocation5], 672
      %v879 = vld [vmem:[%s878] sm:$0xff]
      %v880 = vld [vmem:[%s878 + $0x8] sm:$0xff]
      %v881 = vld [vmem:[%s878 + $0x10] sm:$0xff]
      %v882 = vld [vmem:[%s878 + $0x18] sm:$0xff]
      %v883 = vmul.f32 %v879, %v865
      %v884 = vmul.f32 %v880, %v869
      %v885 = vmul.f32 %v881, %v873
      %v886 = vmul.f32 %v882, %v877
      %v887 = vadd.f32 %v858, %v883
      %v888 = vadd.f32 %v859, %v884
      %v889 = vadd.f32 %v860, %v885
      %v890 = vadd.f32 %v861, %v886
      %v891 = vlaneseq
      %v892 = vshrl.u32 %v891, 7
      %v893 = vsub.s32 2, %v892
      %v894 = vrot.slane %v828, %v893
      %v895 = vlaneseq
      %v896 = vshrl.u32 %v895, 7
      %v897 = vsub.s32 2, %v896
      %v898 = vrot.slane %v829, %v897
      %v899 = vlaneseq
      %v900 = vshrl.u32 %v899, 7
      %v901 = vsub.s32 2, %v900
      %v902 = vrot.slane %v830, %v901
      %v903 = vlaneseq
      %v904 = vshrl.u32 %v903, 7
      %v905 = vsub.s32 2, %v904
      %v906 = vrot.slane %v836, %v905
      %s907 = scalar_lea.vmem [#allocation5], 704
      %v908 = vld [vmem:[%s907] sm:$0xff]
      %v909 = vld [vmem:[%s907 + $0x8] sm:$0xff]
      %v910 = vld [vmem:[%s907 + $0x10] sm:$0xff]
      %v911 = vld [vmem:[%s907 + $0x18] sm:$0xff]
      %v912 = vmul.f32 %v908, %v894
      %v913 = vmul.f32 %v909, %v898
      %v914 = vmul.f32 %v910, %v902
      %v915 = vmul.f32 %v911, %v906
      %v916 = vadd.f32 %v887, %v912
      %v917 = vadd.f32 %v888, %v913
      %v918 = vadd.f32 %v889, %v914
      %v919 = vadd.f32 %v890, %v915
      %v920 = vlaneseq
      %v921 = vshrl.u32 %v920, 7
      %v922 = vsub.s32 3, %v921
      %v923 = vrot.slane %v828, %v922
      %v924 = vlaneseq
      %v925 = vshrl.u32 %v924, 7
      %v926 = vsub.s32 3, %v925
      %v927 = vrot.slane %v829, %v926
      %v928 = vlaneseq
      %v929 = vshrl.u32 %v928, 7
      %v930 = vsub.s32 3, %v929
      %v931 = vrot.slane %v830, %v930
      %v932 = vlaneseq
      %v933 = vshrl.u32 %v932, 7
      %v934 = vsub.s32 3, %v933
      %v935 = vrot.slane %v836, %v934
      %s936 = scalar_lea.vmem [#allocation5], 736
      %v937 = vld [vmem:[%s936] sm:$0xff]
      %v938 = vld [vmem:[%s936 + $0x8] sm:$0xff]
      %v939 = vld [vmem:[%s936 + $0x10] sm:$0xff]
      %v940 = vld [vmem:[%s936 + $0x18] sm:$0xff]
      %v941 = vmul.f32 %v937, %v923
      %v942 = vmul.f32 %v938, %v927
      %v943 = vmul.f32 %v939, %v931
      %v944 = vmul.f32 %v940, %v935
      %v945 = vadd.f32 %v916, %v941
      %v946 = vadd.f32 %v917, %v942
      %v947 = vadd.f32 %v918, %v943
      %v948 = vadd.f32 %v919, %v944
      %949 = vrot.lane.b32.xlu0 %v95, 113
      %v950 = vpop.permute.xlu0 %949
      %951 = vrot.lane.b32.xlu0 %v110, 113
      %v952 = vpop.permute.xlu0 %951
      %953 = vrot.lane.b32.xlu0 %v96, 113
      %v954 = vpop.permute.xlu0 %953
      %955 = vrot.lane.b32.xlu0 %v105, 113
      %v956 = vpop.permute.xlu0 %955
      %vm957 = vcmask 924672
      %v958 = vsel %vm957, %v950, %v952
      %v959 = vsel %vm957, %v952, %v954
      %v960 = vsel %vm957, %v954, %v956
      %v966 = vsel %vm957, %v956, %v950
      %v967 = vlaneseq
      %v968 = vshrl.u32 %v967, 7
      %v969 = vsub.s32 0, %v968
      %v970 = vrot.slane %v958, %v969
      %v971 = vlaneseq
      %v972 = vshrl.u32 %v971, 7
      %v973 = vsub.s32 0, %v972
      %v974 = vrot.slane %v959, %v973
      %v975 = vlaneseq
      %v976 = vshrl.u32 %v975, 7
      %v977 = vsub.s32 0, %v976
      %v978 = vrot.slane %v960, %v977
      %v979 = vlaneseq
      %v980 = vshrl.u32 %v979, 7
      %v981 = vsub.s32 0, %v980
      %v982 = vrot.slane %v966, %v981
      %s983 = scalar_lea.vmem [#allocation5], 768
      %v984 = vld [vmem:[%s983] sm:$0xff]
      %v985 = vld [vmem:[%s983 + $0x8] sm:$0xff]
      %v986 = vld [vmem:[%s983 + $0x10] sm:$0xff]
      %v987 = vld [vmem:[%s983 + $0x18] sm:$0xff]
      %v988 = vmul.f32 %v984, %v970
      %v989 = vmul.f32 %v985, %v974
      %v990 = vmul.f32 %v986, %v978
      %v991 = vmul.f32 %v987, %v982
      %v992 = vlaneseq
      %v993 = vshrl.u32 %v992, 7
      %v994 = vsub.s32 1, %v993
      %v995 = vrot.slane %v958, %v994
      %v996 = vlaneseq
      %v997 = vshrl.u32 %v996, 7
      %v998 = vsub.s32 1, %v997
      %v999 = vrot.slane %v959, %v998
      %v1000 = vlaneseq
      %v1001 = vshrl.u32 %v1000, 7
      %v1002 = vsub.s32 1, %v1001
      %v1003 = vrot.slane %v960, %v1002
      %v1004 = vlaneseq
      %v1005 = vshrl.u32 %v1004, 7
      %v1006 = vsub.s32 1, %v1005
      %v1007 = vrot.slane %v966, %v1006
      %s1008 = scalar_lea.vmem [#allocation5], 800
      %v1009 = vld [vmem:[%s1008] sm:$0xff]
      %v1010 = vld [vmem:[%s1008 + $0x8] sm:$0xff]
      %v1011 = vld [vmem:[%s1008 + $0x10] sm:$0xff]
      %v1012 = vld [vmem:[%s1008 + $0x18] sm:$0xff]
      %v1013 = vmul.f32 %v1009, %v995
      %v1014 = vmul.f32 %v1010, %v999
      %v1015 = vmul.f32 %v1011, %v1003
      %v1016 = vmul.f32 %v1012, %v1007
      %v1017 = vadd.f32 %v988, %v1013
      %v1018 = vadd.f32 %v989, %v1014
      %v1019 = vadd.f32 %v990, %v1015
      %v1020 = vadd.f32 %v991, %v1016
      %v1021 = vlaneseq
      %v1022 = vshrl.u32 %v1021, 7
      %v1023 = vsub.s32 2, %v1022
      %v1024 = vrot.slane %v958, %v1023
      %v1025 = vlaneseq
      %v1026 = vshrl.u32 %v1025, 7
      %v1027 = vsub.s32 2, %v1026
      %v1028 = vrot.slane %v959, %v1027
      %v1029 = vlaneseq
      %v1030 = vshrl.u32 %v1029, 7
      %v1031 = vsub.s32 2, %v1030
      %v1032 = vrot.slane %v960, %v1031
      %v1033 = vlaneseq
      %v1034 = vshrl.u32 %v1033, 7
      %v1035 = vsub.s32 2, %v1034
      %v1036 = vrot.slane %v966, %v1035
      %s1037 = scalar_lea.vmem [#allocation5], 832
      %v1038 = vld [vmem:[%s1037] sm:$0xff]
      %v1039 = vld [vmem:[%s1037 + $0x8] sm:$0xff]
      %v1040 = vld [vmem:[%s1037 + $0x10] sm:$0xff]
      %v1041 = vld [vmem:[%s1037 + $0x18] sm:$0xff]
      %v1042 = vmul.f32 %v1038, %v1024
      %v1043 = vmul.f32 %v1039, %v1028
      %v1044 = vmul.f32 %v1040, %v1032
      %v1045 = vmul.f32 %v1041, %v1036
      %v1046 = vadd.f32 %v1017, %v1042
      %v1047 = vadd.f32 %v1018, %v1043
      %v1048 = vadd.f32 %v1019, %v1044
      %v1049 = vadd.f32 %v1020, %v1045
      %v1050 = vlaneseq
      %v1051 = vshrl.u32 %v1050, 7
      %v1052 = vsub.s32 3, %v1051
      %v1053 = vrot.slane %v958, %v1052
      %v1054 = vlaneseq
      %v1055 = vshrl.u32 %v1054, 7
      %v1056 = vsub.s32 3, %v1055
      %v1057 = vrot.slane %v959, %v1056
      %v1058 = vlaneseq
      %v1059 = vshrl.u32 %v1058, 7
      %v1060 = vsub.s32 3, %v1059
      %v1061 = vrot.slane %v960, %v1060
      %v1062 = vlaneseq
      %v1063 = vshrl.u32 %v1062, 7
      %v1064 = vsub.s32 3, %v1063
      %v1065 = vrot.slane %v966, %v1064
      %s1066 = scalar_lea.vmem [#allocation5], 864
      %v1067 = vld [vmem:[%s1066] sm:$0xff]
      %v1068 = vld [vmem:[%s1066 + $0x8] sm:$0xff]
      %v1069 = vld [vmem:[%s1066 + $0x10] sm:$0xff]
      %v1070 = vld [vmem:[%s1066 + $0x18] sm:$0xff]
      %v1071 = vmul.f32 %v1067, %v1053
      %v1072 = vmul.f32 %v1068, %v1057
      %v1073 = vmul.f32 %v1069, %v1061
      %v1074 = vmul.f32 %v1070, %v1065
      %v1075 = vadd.f32 %v1046, %v1071
      %v1076 = vadd.f32 %v1047, %v1072
      %v1077 = vadd.f32 %v1048, %v1073
      %v1078 = vadd.f32 %v1049, %v1074
      %1079 = vrot.lane.b32.xlu0 %v95, 112
      %v1080 = vpop.permute.xlu0 %1079
      %1081 = vrot.lane.b32.xlu0 %v110, 112
      %v1082 = vpop.permute.xlu0 %1081
      %1083 = vrot.lane.b32.xlu0 %v96, 112
      %v1084 = vpop.permute.xlu0 %1083
      %1085 = vrot.lane.b32.xlu0 %v105, 112
      %v1086 = vpop.permute.xlu0 %1085
      %vm1087 = vcmask 916480
      %v1088 = vsel %vm1087, %v1080, %v1082
      %v1089 = vsel %vm1087, %v1082, %v1084
      %v1090 = vsel %vm1087, %v1084, %v1086
      %v1096 = vsel %vm1087, %v1086, %v1080
      %v1097 = vlaneseq
      %v1098 = vshrl.u32 %v1097, 7
      %v1099 = vsub.s32 0, %v1098
      %v1100 = vrot.slane %v1088, %v1099
      %v1101 = vlaneseq
      %v1102 = vshrl.u32 %v1101, 7
      %v1103 = vsub.s32 0, %v1102
      %v1104 = vrot.slane %v1089, %v1103
      %v1105 = vlaneseq
      %v1106 = vshrl.u32 %v1105, 7
      %v1107 = vsub.s32 0, %v1106
      %v1108 = vrot.slane %v1090, %v1107
      %v1109 = vlaneseq
      %v1110 = vshrl.u32 %v1109, 7
      %v1111 = vsub.s32 0, %v1110
      %v1112 = vrot.slane %v1096, %v1111
      %s1113 = scalar_lea.vmem [#allocation5], 896
      %v1114 = vld [vmem:[%s1113] sm:$0xff]
      %v1115 = vld [vmem:[%s1113 + $0x8] sm:$0xff]
      %v1116 = vld [vmem:[%s1113 + $0x10] sm:$0xff]
      %v1117 = vld [vmem:[%s1113 + $0x18] sm:$0xff]
      %v1118 = vmul.f32 %v1114, %v1100
      %v1119 = vmul.f32 %v1115, %v1104
      %v1120 = vmul.f32 %v1116, %v1108
      %v1121 = vmul.f32 %v1117, %v1112
      %v1122 = vlaneseq
      %v1123 = vshrl.u32 %v1122, 7
      %v1124 = vsub.s32 1, %v1123
      %v1125 = vrot.slane %v1088, %v1124
      %v1126 = vlaneseq
      %v1127 = vshrl.u32 %v1126, 7
      %v1128 = vsub.s32 1, %v1127
      %v1129 = vrot.slane %v1089, %v1128
      %v1130 = vlaneseq
      %v1131 = vshrl.u32 %v1130, 7
      %v1132 = vsub.s32 1, %v1131
      %v1133 = vrot.slane %v1090, %v1132
      %v1134 = vlaneseq
      %v1135 = vshrl.u32 %v1134, 7
      %v1136 = vsub.s32 1, %v1135
      %v1137 = vrot.slane %v1096, %v1136
      %s1138 = scalar_lea.vmem [#allocation5], 928
      %v1139 = vld [vmem:[%s1138] sm:$0xff]
      %v1140 = vld [vmem:[%s1138 + $0x8] sm:$0xff]
      %v1141 = vld [vmem:[%s1138 + $0x10] sm:$0xff]
      %v1142 = vld [vmem:[%s1138 + $0x18] sm:$0xff]
      %v1143 = vmul.f32 %v1139, %v1125
      %v1144 = vmul.f32 %v1140, %v1129
      %v1145 = vmul.f32 %v1141, %v1133
      %v1146 = vmul.f32 %v1142, %v1137
      %v1147 = vadd.f32 %v1118, %v1143
      %v1148 = vadd.f32 %v1119, %v1144
      %v1149 = vadd.f32 %v1120, %v1145
      %v1150 = vadd.f32 %v1121, %v1146
      %v1151 = vlaneseq
      %v1152 = vshrl.u32 %v1151, 7
      %v1153 = vsub.s32 2, %v1152
      %v1154 = vrot.slane %v1088, %v1153
      %v1155 = vlaneseq
      %v1156 = vshrl.u32 %v1155, 7
      %v1157 = vsub.s32 2, %v1156
      %v1158 = vrot.slane %v1089, %v1157
      %v1159 = vlaneseq
      %v1160 = vshrl.u32 %v1159, 7
      %v1161 = vsub.s32 2, %v1160
      %v1162 = vrot.slane %v1090, %v1161
      %v1163 = vlaneseq
      %v1164 = vshrl.u32 %v1163, 7
      %v1165 = vsub.s32 2, %v1164
      %v1166 = vrot.slane %v1096, %v1165
      %s1167 = scalar_lea.vmem [#allocation5], 960
      %v1168 = vld [vmem:[%s1167] sm:$0xff]
      %v1169 = vld [vmem:[%s1167 + $0x8] sm:$0xff]
      %v1170 = vld [vmem:[%s1167 + $0x10] sm:$0xff]
      %v1171 = vld [vmem:[%s1167 + $0x18] sm:$0xff]
      %v1172 = vmul.f32 %v1168, %v1154
      %v1173 = vmul.f32 %v1169, %v1158
      %v1174 = vmul.f32 %v1170, %v1162
      %v1175 = vmul.f32 %v1171, %v1166
      %v1176 = vadd.f32 %v1147, %v1172
      %v1177 = vadd.f32 %v1148, %v1173
      %v1178 = vadd.f32 %v1149, %v1174
      %v1179 = vadd.f32 %v1150, %v1175
      %v1180 = vlaneseq
      %v1181 = vshrl.u32 %v1180, 7
      %v1182 = vsub.s32 3, %v1181
      %v1183 = vrot.slane %v1088, %v1182
      %v1184 = vlaneseq
      %v1185 = vshrl.u32 %v1184, 7
      %v1186 = vsub.s32 3, %v1185
      %v1187 = vrot.slane %v1089, %v1186
      %v1188 = vlaneseq
      %v1189 = vshrl.u32 %v1188, 7
      %v1190 = vsub.s32 3, %v1189
      %v1191 = vrot.slane %v1090, %v1190
      %v1192 = vlaneseq
      %v1193 = vshrl.u32 %v1192, 7
      %v1194 = vsub.s32 3, %v1193
      %v1195 = vrot.slane %v1096, %v1194
      %s1196 = scalar_lea.vmem [#allocation5], 992
      %v1197 = vld [vmem:[%s1196] sm:$0xff]
      %v1198 = vld [vmem:[%s1196 + $0x8] sm:$0xff]
      %v1199 = vld [vmem:[%s1196 + $0x10] sm:$0xff]
      %v1200 = vld [vmem:[%s1196 + $0x18] sm:$0xff]
      %v1201 = vmul.f32 %v1197, %v1183
      %v1202 = vmul.f32 %v1198, %v1187
      %v1203 = vmul.f32 %v1199, %v1191
      %v1204 = vmul.f32 %v1200, %v1195
      %v1205 = vadd.f32 %v1176, %v1201
      %v1206 = vadd.f32 %v1177, %v1202
      %v1207 = vadd.f32 %v1178, %v1203
      %v1208 = vadd.f32 %v1179, %v1204
      %1209 = vrot.lane.b32.xlu0 %v95, 111
      %v1210 = vpop.permute.xlu0 %1209
      %1211 = vrot.lane.b32.xlu0 %v110, 111
      %v1212 = vpop.permute.xlu0 %1211
      %1213 = vrot.lane.b32.xlu0 %v96, 111
      %v1214 = vpop.permute.xlu0 %1213
      %1215 = vrot.lane.b32.xlu0 %v105, 111
      %v1216 = vpop.permute.xlu0 %1215
      %vm1217 = vcmask 908288
      %v1218 = vsel %vm1217, %v1210, %v1212
      %v1219 = vsel %vm1217, %v1212, %v1214
      %v1220 = vsel %vm1217, %v1214, %v1216
      %v1226 = vsel %vm1217, %v1216, %v1210
      %v1227 = vlaneseq
      %v1228 = vshrl.u32 %v1227, 7
      %v1229 = vsub.s32 0, %v1228
      %v1230 = vrot.slane %v1218, %v1229
      %v1231 = vlaneseq
      %v1232 = vshrl.u32 %v1231, 7
      %v1233 = vsub.s32 0, %v1232
      %v1234 = vrot.slane %v1219, %v1233
      %v1235 = vlaneseq
      %v1236 = vshrl.u32 %v1235, 7
      %v1237 = vsub.s32 0, %v1236
      %v1238 = vrot.slane %v1220, %v1237
      %v1239 = vlaneseq
      %v1240 = vshrl.u32 %v1239, 7
      %v1241 = vsub.s32 0, %v1240
      %v1242 = vrot.slane %v1226, %v1241
      %s1243 = scalar_lea.vmem [#allocation5], 1024
      %v1244 = vld [vmem:[%s1243] sm:$0xff]
      %v1245 = vld [vmem:[%s1243 + $0x8] sm:$0xff]
      %v1246 = vld [vmem:[%s1243 + $0x10] sm:$0xff]
      %v1247 = vld [vmem:[%s1243 + $0x18] sm:$0xff]
      %v1248 = vmul.f32 %v1244, %v1230
      %v1249 = vmul.f32 %v1245, %v1234
      %v1250 = vmul.f32 %v1246, %v1238
      %v1251 = vmul.f32 %v1247, %v1242
      %v1252 = vlaneseq
      %v1253 = vshrl.u32 %v1252, 7
      %v1254 = vsub.s32 1, %v1253
      %v1255 = vrot.slane %v1218, %v1254
      %v1256 = vlaneseq
      %v1257 = vshrl.u32 %v1256, 7
      %v1258 = vsub.s32 1, %v1257
      %v1259 = vrot.slane %v1219, %v1258
      %v1260 = vlaneseq
      %v1261 = vshrl.u32 %v1260, 7
      %v1262 = vsub.s32 1, %v1261
      %v1263 = vrot.slane %v1220, %v1262
      %v1264 = vlaneseq
      %v1265 = vshrl.u32 %v1264, 7
      %v1266 = vsub.s32 1, %v1265
      %v1267 = vrot.slane %v1226, %v1266
      %s1268 = scalar_lea.vmem [#allocation5], 1056
      %v1269 = vld [vmem:[%s1268] sm:$0xff]
      %v1270 = vld [vmem:[%s1268 + $0x8] sm:$0xff]
      %v1271 = vld [vmem:[%s1268 + $0x10] sm:$0xff]
      %v1272 = vld [vmem:[%s1268 + $0x18] sm:$0xff]
      %v1273 = vmul.f32 %v1269, %v1255
      %v1274 = vmul.f32 %v1270, %v1259
      %v1275 = vmul.f32 %v1271, %v1263
      %v1276 = vmul.f32 %v1272, %v1267
      %v1277 = vadd.f32 %v1248, %v1273
      %v1278 = vadd.f32 %v1249, %v1274
      %v1279 = vadd.f32 %v1250, %v1275
      %v1280 = vadd.f32 %v1251, %v1276
      %v1281 = vlaneseq
      %v1282 = vshrl.u32 %v1281, 7
      %v1283 = vsub.s32 2, %v1282
      %v1284 = vrot.slane %v1218, %v1283
      %v1285 = vlaneseq
      %v1286 = vshrl.u32 %v1285, 7
      %v1287 = vsub.s32 2, %v1286
      %v1288 = vrot.slane %v1219, %v1287
      %v1289 = vlaneseq
      %v1290 = vshrl.u32 %v1289, 7
      %v1291 = vsub.s32 2, %v1290
      %v1292 = vrot.slane %v1220, %v1291
      %v1293 = vlaneseq
      %v1294 = vshrl.u32 %v1293, 7
      %v1295 = vsub.s32 2, %v1294
      %v1296 = vrot.slane %v1226, %v1295
      %s1297 = scalar_lea.vmem [#allocation5], 1088
      %v1298 = vld [vmem:[%s1297] sm:$0xff]
      %v1299 = vld [vmem:[%s1297 + $0x8] sm:$0xff]
      %v1300 = vld [vmem:[%s1297 + $0x10] sm:$0xff]
      %v1301 = vld [vmem:[%s1297 + $0x18] sm:$0xff]
      %v1302 = vmul.f32 %v1298, %v1284
      %v1303 = vmul.f32 %v1299, %v1288
      %v1304 = vmul.f32 %v1300, %v1292
      %v1305 = vmul.f32 %v1301, %v1296
      %v1306 = vadd.f32 %v1277, %v1302
      %v1307 = vadd.f32 %v1278, %v1303
      %v1308 = vadd.f32 %v1279, %v1304
      %v1309 = vadd.f32 %v1280, %v1305
      %v1310 = vlaneseq
      %v1311 = vshrl.u32 %v1310, 7
      %v1312 = vsub.s32 3, %v1311
      %v1313 = vrot.slane %v1218, %v1312
      %v1314 = vlaneseq
      %v1315 = vshrl.u32 %v1314, 7
      %v1316 = vsub.s32 3, %v1315
      %v1317 = vrot.slane %v1219, %v1316
      %v1318 = vlaneseq
      %v1319 = vshrl.u32 %v1318, 7
      %v1320 = vsub.s32 3, %v1319
      %v1321 = vrot.slane %v1220, %v1320
      %v1322 = vlaneseq
      %v1323 = vshrl.u32 %v1322, 7
      %v1324 = vsub.s32 3, %v1323
      %v1325 = vrot.slane %v1226, %v1324
      %s1326 = scalar_lea.vmem [#allocation5], 1120
      %v1327 = vld [vmem:[%s1326] sm:$0xff]
      %v1328 = vld [vmem:[%s1326 + $0x8] sm:$0xff]
      %v1329 = vld [vmem:[%s1326 + $0x10] sm:$0xff]
      %v1330 = vld [vmem:[%s1326 + $0x18] sm:$0xff]
      %v1331 = vmul.f32 %v1327, %v1313
      %v1332 = vmul.f32 %v1328, %v1317
      %v1333 = vmul.f32 %v1329, %v1321
      %v1334 = vmul.f32 %v1330, %v1325
      %v1335 = vadd.f32 %v1306, %v1331
      %v1336 = vadd.f32 %v1307, %v1332
      %v1337 = vadd.f32 %v1308, %v1333
      %v1338 = vadd.f32 %v1309, %v1334
      %v1339 = vadd.f32 %v100, %v233
      %v1340 = vadd.f32 %v101, %v234
      %v1341 = vadd.f32 %v102, %v235
      %v1342 = vadd.f32 %v103, %v236
      %v1343 = vadd.f32 %v363, %v493
      %v1344 = vadd.f32 %v364, %v494
      %v1345 = vadd.f32 %v365, %v495
      %v1346 = vadd.f32 %v366, %v496
      %v1347 = vadd.f32 %v623, %v815
      %v1348 = vadd.f32 %v624, %v816
      %v1349 = vadd.f32 %v625, %v817
      %v1350 = vadd.f32 %v626, %v818
      %v1351 = vadd.f32 %v945, %v1075
      %v1352 = vadd.f32 %v946, %v1076
      %v1353 = vadd.f32 %v947, %v1077
      %v1354 = vadd.f32 %v948, %v1078
      %v1355 = vadd.f32 %v1205, %v1335
      %v1356 = vadd.f32 %v1206, %v1336
      %v1357 = vadd.f32 %v1207, %v1337
      %v1358 = vadd.f32 %v1208, %v1338
      %v1359 = vadd.f32 %v1339, %v1343
      %v1360 = vadd.f32 %v1340, %v1344
      %v1361 = vadd.f32 %v1341, %v1345
      %v1362 = vadd.f32 %v1342, %v1346
      %v1363 = vadd.f32 %v1347, %v1351
      %v1364 = vadd.f32 %v1348, %v1352
      %v1365 = vadd.f32 %v1349, %v1353
      %v1366 = vadd.f32 %v1350, %v1354
      %v1367 = vadd.f32 %v1359, %v1363
      %v1368 = vadd.f32 %v1360, %v1364
      %v1369 = vadd.f32 %v1361, %v1365
      %v1370 = vadd.f32 %v1362, %v1366
      %v1371 = vadd.f32 %v1367, %v1355
      %v1372 = vadd.f32 %v1368, %v1356
      %v1373 = vadd.f32 %v1369, %v1357
      %v1374 = vadd.f32 %v1370, %v1358
      %v1375 = vmax.f32 %v1371, 0.0
      %v1376 = vmax.f32 %v1372, 0.0
      %v1377 = vmax.f32 %v1373, 0.0
      %v1378 = vmax.f32 %v1374, 0.0
      %1380 = vrot.lane.b32.xlu0 %v1378, 17
      %v1381 = vpop.permute.xlu0 %1380
      %1386 = vrot.lane.b32.xlu0 %v1375, 17
      %v1387 = vpop.permute.xlu0 %1386
      %1388 = vrot.lane.b32.xlu0 %v1376, 17
      %v1389 = vpop.permute.xlu0 %1388
      %1390 = vrot.lane.b32.xlu0 %v1377, 17
      %v1391 = vpop.permute.xlu0 %1390
      %v1392 = vsel %vm117, %v1387, %v1389
      %v1393 = vsel %vm117, %v1389, %v1391
      %v1394 = vsel %vm117, %v1391, %v1381
      %v1399 = vsel %vm117, %v1381, %v1387
      %v1400 = vlaneseq
      %v1401 = vshrl.u32 %v1400, 7
      %v1402 = vsub.s32 0, %v1401
      %v1403 = vrot.slane %v1399, %v1402
      %v1404 = vlaneseq
      %v1405 = vshrl.u32 %v1404, 7
      %v1406 = vsub.s32 0, %v1405
      %v1407 = vrot.slane %v1392, %v1406
      %v1408 = vlaneseq
      %v1409 = vshrl.u32 %v1408, 7
      %v1410 = vsub.s32 0, %v1409
      %v1411 = vrot.slane %v1393, %v1410
      %v1412 = vlaneseq
      %v1413 = vshrl.u32 %v1412, 7
      %v1414 = vsub.s32 0, %v1413
      %v1415 = vrot.slane %v1394, %v1414
      %v1416 = vld [vmem:[#allocation7] sm:$0xff]
      %v1417 = vld [vmem:[#allocation7 + $0x8] sm:$0xff]
      %v1422 = vcombine.low %v1403, %v1407
      %v1423 = vcombine.low %v1411, %v1415
      %v1426 = vmul.f32 %v1416, %v1422
      %v1427 = vmul.f32 %v1417, %v1423
      %v1428 = vlaneseq
      %v1429 = vshrl.u32 %v1428, 7
      %v1430 = vsub.s32 1, %v1429
      %v1431 = vrot.slane %v1399, %v1430
      %v1432 = vlaneseq
      %v1433 = vshrl.u32 %v1432, 7
      %v1434 = vsub.s32 1, %v1433
      %v1435 = vrot.slane %v1392, %v1434
      %v1436 = vlaneseq
      %v1437 = vshrl.u32 %v1436, 7
      %v1438 = vsub.s32 1, %v1437
      %v1439 = vrot.slane %v1393, %v1438
      %v1440 = vlaneseq
      %v1441 = vshrl.u32 %v1440, 7
      %v1442 = vsub.s32 1, %v1441
      %v1443 = vrot.slane %v1394, %v1442
      %s1444 = scalar_lea.vmem [#allocation7], 16
      %v1445 = vld [vmem:[%s1444] sm:$0xff]
      %v1446 = vld [vmem:[%s1444 + $0x8] sm:$0xff]
      %v1451 = vcombine.low %v1431, %v1435
      %v1452 = vcombine.low %v1439, %v1443
      %v1455 = vmul.f32 %v1445, %v1451
      %v1456 = vmul.f32 %v1446, %v1452
      %v1457 = vadd.f32 %v1426, %v1455
      %v1458 = vadd.f32 %v1427, %v1456
      %v1459 = vlaneseq
      %v1460 = vshrl.u32 %v1459, 7
      %v1461 = vsub.s32 2, %v1460
      %v1462 = vrot.slane %v1399, %v1461
      %v1463 = vlaneseq
      %v1464 = vshrl.u32 %v1463, 7
      %v1465 = vsub.s32 2, %v1464
      %v1466 = vrot.slane %v1392, %v1465
      %v1467 = vlaneseq
      %v1468 = vshrl.u32 %v1467, 7
      %v1469 = vsub.s32 2, %v1468
      %v1470 = vrot.slane %v1393, %v1469
      %v1471 = vlaneseq
      %v1472 = vshrl.u32 %v1471, 7
      %v1473 = vsub.s32 2, %v1472
      %v1474 = vrot.slane %v1394, %v1473
      %s1475 = scalar_lea.vmem [#allocation7], 32
      %v1476 = vld [vmem:[%s1475] sm:$0xff]
      %v1477 = vld [vmem:[%s1475 + $0x8] sm:$0xff]
      %v1482 = vcombine.low %v1462, %v1466
      %v1483 = vcombine.low %v1470, %v1474
      %v1486 = vmul.f32 %v1476, %v1482
      %v1487 = vmul.f32 %v1477, %v1483
      %v1488 = vadd.f32 %v1457, %v1486
      %v1489 = vadd.f32 %v1458, %v1487
      %v1490 = vlaneseq
      %v1491 = vshrl.u32 %v1490, 7
      %v1492 = vsub.s32 3, %v1491
      %v1493 = vrot.slane %v1399, %v1492
      %v1494 = vlaneseq
      %v1495 = vshrl.u32 %v1494, 7
      %v1496 = vsub.s32 3, %v1495
      %v1497 = vrot.slane %v1392, %v1496
      %v1498 = vlaneseq
      %v1499 = vshrl.u32 %v1498, 7
      %v1500 = vsub.s32 3, %v1499
      %v1501 = vrot.slane %v1393, %v1500
      %v1502 = vlaneseq
      %v1503 = vshrl.u32 %v1502, 7
      %v1504 = vsub.s32 3, %v1503
      %v1505 = vrot.slane %v1394, %v1504
      %s1506 = scalar_lea.vmem [#allocation7], 48
      %v1507 = vld [vmem:[%s1506] sm:$0xff]
      %v1508 = vld [vmem:[%s1506 + $0x8] sm:$0xff]
      %v1513 = vcombine.low %v1493, %v1497
      %v1514 = vcombine.low %v1501, %v1505
      %v1517 = vmul.f32 %v1507, %v1513
      %v1518 = vmul.f32 %v1508, %v1514
      %v1519 = vadd.f32 %v1488, %v1517
      %v1520 = vadd.f32 %v1489, %v1518
      %v1521 = vlaneseq
      %v1522 = vshrl.u32 %v1521, 7
      %v1523 = vsub.s32 4, %v1522
      %v1524 = vrot.slane %v1399, %v1523
      %v1525 = vlaneseq
      %v1526 = vshrl.u32 %v1525, 7
      %v1527 = vsub.s32 4, %v1526
      %v1528 = vrot.slane %v1392, %v1527
      %v1529 = vlaneseq
      %v1530 = vshrl.u32 %v1529, 7
      %v1531 = vsub.s32 4, %v1530
      %v1532 = vrot.slane %v1393, %v1531
      %v1533 = vlaneseq
      %v1534 = vshrl.u32 %v1533, 7
      %v1535 = vsub.s32 4, %v1534
      %v1536 = vrot.slane %v1394, %v1535
      %s1537 = scalar_lea.vmem [#allocation7], 64
      %v1538 = vld [vmem:[%s1537] sm:$0xff]
      %v1539 = vld [vmem:[%s1537 + $0x8] sm:$0xff]
      %v1544 = vcombine.low %v1524, %v1528
      %v1545 = vcombine.low %v1532, %v1536
      %v1548 = vmul.f32 %v1538, %v1544
      %v1549 = vmul.f32 %v1539, %v1545
      %v1550 = vadd.f32 %v1519, %v1548
      %v1551 = vadd.f32 %v1520, %v1549
      %v1552 = vlaneseq
      %v1553 = vshrl.u32 %v1552, 7
      %v1554 = vsub.s32 5, %v1553
      %v1555 = vrot.slane %v1399, %v1554
      %v1556 = vlaneseq
      %v1557 = vshrl.u32 %v1556, 7
      %v1558 = vsub.s32 5, %v1557
      %v1559 = vrot.slane %v1392, %v1558
      %v1560 = vlaneseq
      %v1561 = vshrl.u32 %v1560, 7
      %v1562 = vsub.s32 5, %v1561
      %v1563 = vrot.slane %v1393, %v1562
      %v1564 = vlaneseq
      %v1565 = vshrl.u32 %v1564, 7
      %v1566 = vsub.s32 5, %v1565
      %v1567 = vrot.slane %v1394, %v1566
      %s1568 = scalar_lea.vmem [#allocation7], 80
      %v1569 = vld [vmem:[%s1568] sm:$0xff]
      %v1570 = vld [vmem:[%s1568 + $0x8] sm:$0xff]
      %v1575 = vcombine.low %v1555, %v1559
      %v1576 = vcombine.low %v1563, %v1567
      %v1579 = vmul.f32 %v1569, %v1575
      %v1580 = vmul.f32 %v1570, %v1576
      %v1581 = vadd.f32 %v1550, %v1579
      %v1582 = vadd.f32 %v1551, %v1580
      %v1583 = vlaneseq
      %v1584 = vshrl.u32 %v1583, 7
      %v1585 = vsub.s32 6, %v1584
      %v1586 = vrot.slane %v1399, %v1585
      %v1587 = vlaneseq
      %v1588 = vshrl.u32 %v1587, 7
      %v1589 = vsub.s32 6, %v1588
      %v1590 = vrot.slane %v1392, %v1589
      %v1591 = vlaneseq
      %v1592 = vshrl.u32 %v1591, 7
      %v1593 = vsub.s32 6, %v1592
      %v1594 = vrot.slane %v1393, %v1593
      %v1595 = vlaneseq
      %v1596 = vshrl.u32 %v1595, 7
      %v1597 = vsub.s32 6, %v1596
      %v1598 = vrot.slane %v1394, %v1597
      %s1599 = scalar_lea.vmem [#allocation7], 96
      %v1600 = vld [vmem:[%s1599] sm:$0xff]
      %v1601 = vld [vmem:[%s1599 + $0x8] sm:$0xff]
      %v1606 = vcombine.low %v1586, %v1590
      %v1607 = vcombine.low %v1594, %v1598
      %v1610 = vmul.f32 %v1600, %v1606
      %v1611 = vmul.f32 %v1601, %v1607
      %v1612 = vadd.f32 %v1581, %v1610
      %v1613 = vadd.f32 %v1582, %v1611
      %v1614 = vlaneseq
      %v1615 = vshrl.u32 %v1614, 7
      %v1616 = vsub.s32 7, %v1615
      %v1617 = vrot.slane %v1399, %v1616
      %v1618 = vlaneseq
      %v1619 = vshrl.u32 %v1618, 7
      %v1620 = vsub.s32 7, %v1619
      %v1621 = vrot.slane %v1392, %v1620
      %v1622 = vlaneseq
      %v1623 = vshrl.u32 %v1622, 7
      %v1624 = vsub.s32 7, %v1623
      %v1625 = vrot.slane %v1393, %v1624
      %v1626 = vlaneseq
      %v1627 = vshrl.u32 %v1626, 7
      %v1628 = vsub.s32 7, %v1627
      %v1629 = vrot.slane %v1394, %v1628
      %s1630 = scalar_lea.vmem [#allocation7], 112
      %v1631 = vld [vmem:[%s1630] sm:$0xff]
      %v1632 = vld [vmem:[%s1630 + $0x8] sm:$0xff]
      %v1637 = vcombine.low %v1617, %v1621
      %v1638 = vcombine.low %v1625, %v1629
      %v1641 = vmul.f32 %v1631, %v1637
      %v1642 = vmul.f32 %v1632, %v1638
      %v1643 = vadd.f32 %v1612, %v1641
      %v1644 = vadd.f32 %v1613, %v1642
      %1645 = vrot.lane.b32.xlu0 %v1378, 16
      %v1646 = vpop.permute.xlu0 %1645
      %1648 = vrot.lane.b32.xlu0 %v1375, 16
      %v1649 = vpop.permute.xlu0 %1648
      %1650 = vrot.lane.b32.xlu0 %v1376, 16
      %v1651 = vpop.permute.xlu0 %1650
      %1652 = vrot.lane.b32.xlu0 %v1377, 16
      %v1653 = vpop.permute.xlu0 %1652
      %v1654 = vsel %vm246, %v1649, %v1651
      %v1655 = vsel %vm246, %v1651, %v1653
      %v1656 = vsel %vm246, %v1653, %v1646
      %v1661 = vsel %vm246, %v1646, %v1649
      %v1662 = vlaneseq
      %v1663 = vshrl.u32 %v1662, 7
      %v1664 = vsub.s32 0, %v1663
      %v1665 = vrot.slane %v1661, %v1664
      %v1666 = vlaneseq
      %v1667 = vshrl.u32 %v1666, 7
      %v1668 = vsub.s32 0, %v1667
      %v1669 = vrot.slane %v1654, %v1668
      %v1670 = vlaneseq
      %v1671 = vshrl.u32 %v1670, 7
      %v1672 = vsub.s32 0, %v1671
      %v1673 = vrot.slane %v1655, %v1672
      %v1674 = vlaneseq
      %v1675 = vshrl.u32 %v1674, 7
      %v1676 = vsub.s32 0, %v1675
      %v1677 = vrot.slane %v1656, %v1676
      %s1678 = scalar_lea.vmem [#allocation7], 128
      %v1679 = vld [vmem:[%s1678] sm:$0xff]
      %v1680 = vld [vmem:[%s1678 + $0x8] sm:$0xff]
      %v1685 = vcombine.low %v1665, %v1669
      %v1686 = vcombine.low %v1673, %v1677
      %v1689 = vmul.f32 %v1679, %v1685
      %v1690 = vmul.f32 %v1680, %v1686
      %v1691 = vlaneseq
      %v1692 = vshrl.u32 %v1691, 7
      %v1693 = vsub.s32 1, %v1692
      %v1694 = vrot.slane %v1661, %v1693
      %v1695 = vlaneseq
      %v1696 = vshrl.u32 %v1695, 7
      %v1697 = vsub.s32 1, %v1696
      %v1698 = vrot.slane %v1654, %v1697
      %v1699 = vlaneseq
      %v1700 = vshrl.u32 %v1699, 7
      %v1701 = vsub.s32 1, %v1700
      %v1702 = vrot.slane %v1655, %v1701
      %v1703 = vlaneseq
      %v1704 = vshrl.u32 %v1703, 7
      %v1705 = vsub.s32 1, %v1704
      %v1706 = vrot.slane %v1656, %v1705
      %s1707 = scalar_lea.vmem [#allocation7], 144
      %v1708 = vld [vmem:[%s1707] sm:$0xff]
      %v1709 = vld [vmem:[%s1707 + $0x8] sm:$0xff]
      %v1714 = vcombine.low %v1694, %v1698
      %v1715 = vcombine.low %v1702, %v1706
      %v1718 = vmul.f32 %v1708, %v1714
      %v1719 = vmul.f32 %v1709, %v1715
      %v1720 = vadd.f32 %v1689, %v1718
      %v1721 = vadd.f32 %v1690, %v1719
      %v1722 = vlaneseq
      %v1723 = vshrl.u32 %v1722, 7
      %v1724 = vsub.s32 2, %v1723
      %v1725 = vrot.slane %v1661, %v1724
      %v1726 = vlaneseq
      %v1727 = vshrl.u32 %v1726, 7
      %v1728 = vsub.s32 2, %v1727
      %v1729 = vrot.slane %v1654, %v1728
      %v1730 = vlaneseq
      %v1731 = vshrl.u32 %v1730, 7
      %v1732 = vsub.s32 2, %v1731
      %v1733 = vrot.slane %v1655, %v1732
      %v1734 = vlaneseq
      %v1735 = vshrl.u32 %v1734, 7
      %v1736 = vsub.s32 2, %v1735
      %v1737 = vrot.slane %v1656, %v1736
      %s1738 = scalar_lea.vmem [#allocation7], 160
      %v1739 = vld [vmem:[%s1738] sm:$0xff]
      %v1740 = vld [vmem:[%s1738 + $0x8] sm:$0xff]
      %v1745 = vcombine.low %v1725, %v1729
      %v1746 = vcombine.low %v1733, %v1737
      %v1749 = vmul.f32 %v1739, %v1745
      %v1750 = vmul.f32 %v1740, %v1746
      %v1751 = vadd.f32 %v1720, %v1749
      %v1752 = vadd.f32 %v1721, %v1750
      %v1753 = vlaneseq
      %v1754 = vshrl.u32 %v1753, 7
      %v1755 = vsub.s32 3, %v1754
      %v1756 = vrot.slane %v1661, %v1755
      %v1757 = vlaneseq
      %v1758 = vshrl.u32 %v1757, 7
      %v1759 = vsub.s32 3, %v1758
      %v1760 = vrot.slane %v1654, %v1759
      %v1761 = vlaneseq
      %v1762 = vshrl.u32 %v1761, 7
      %v1763 = vsub.s32 3, %v1762
      %v1764 = vrot.slane %v1655, %v1763
      %v1765 = vlaneseq
      %v1766 = vshrl.u32 %v1765, 7
      %v1767 = vsub.s32 3, %v1766
      %v1768 = vrot.slane %v1656, %v1767
      %s1769 = scalar_lea.vmem [#allocation7], 176
      %v1770 = vld [vmem:[%s1769] sm:$0xff]
      %v1771 = vld [vmem:[%s1769 + $0x8] sm:$0xff]
      %v1776 = vcombine.low %v1756, %v1760
      %v1777 = vcombine.low %v1764, %v1768
      %v1780 = vmul.f32 %v1770, %v1776
      %v1781 = vmul.f32 %v1771, %v1777
      %v1782 = vadd.f32 %v1751, %v1780
      %v1783 = vadd.f32 %v1752, %v1781
      %v1784 = vlaneseq
      %v1785 = vshrl.u32 %v1784, 7
      %v1786 = vsub.s32 4, %v1785
      %v1787 = vrot.slane %v1661, %v1786
      %v1788 = vlaneseq
      %v1789 = vshrl.u32 %v1788, 7
      %v1790 = vsub.s32 4, %v1789
      %v1791 = vrot.slane %v1654, %v1790
      %v1792 = vlaneseq
      %v1793 = vshrl.u32 %v1792, 7
      %v1794 = vsub.s32 4, %v1793
      %v1795 = vrot.slane %v1655, %v1794
      %v1796 = vlaneseq
      %v1797 = vshrl.u32 %v1796, 7
      %v1798 = vsub.s32 4, %v1797
      %v1799 = vrot.slane %v1656, %v1798
      %s1800 = scalar_lea.vmem [#allocation7], 192
      %v1801 = vld [vmem:[%s1800] sm:$0xff]
      %v1802 = vld [vmem:[%s1800 + $0x8] sm:$0xff]
      %v1807 = vcombine.low %v1787, %v1791
      %v1808 = vcombine.low %v1795, %v1799
      %v1811 = vmul.f32 %v1801, %v1807
      %v1812 = vmul.f32 %v1802, %v1808
      %v1813 = vadd.f32 %v1782, %v1811
      %v1814 = vadd.f32 %v1783, %v1812
      %v1815 = vlaneseq
      %v1816 = vshrl.u32 %v1815, 7
      %v1817 = vsub.s32 5, %v1816
      %v1818 = vrot.slane %v1661, %v1817
      %v1819 = vlaneseq
      %v1820 = vshrl.u32 %v1819, 7
      %v1821 = vsub.s32 5, %v1820
      %v1822 = vrot.slane %v1654, %v1821
      %v1823 = vlaneseq
      %v1824 = vshrl.u32 %v1823, 7
      %v1825 = vsub.s32 5, %v1824
      %v1826 = vrot.slane %v1655, %v1825
      %v1827 = vlaneseq
      %v1828 = vshrl.u32 %v1827, 7
      %v1829 = vsub.s32 5, %v1828
      %v1830 = vrot.slane %v1656, %v1829
      %s1831 = scalar_lea.vmem [#allocation7], 208
      %v1832 = vld [vmem:[%s1831] sm:$0xff]
      %v1833 = vld [vmem:[%s1831 + $0x8] sm:$0xff]
      %v1838 = vcombine.low %v1818, %v1822
      %v1839 = vcombine.low %v1826, %v1830
      %v1842 = vmul.f32 %v1832, %v1838
      %v1843 = vmul.f32 %v1833, %v1839
      %v1844 = vadd.f32 %v1813, %v1842
      %v1845 = vadd.f32 %v1814, %v1843
      %v1846 = vlaneseq
      %v1847 = vshrl.u32 %v1846, 7
      %v1848 = vsub.s32 6, %v1847
      %v1849 = vrot.slane %v1661, %v1848
      %v1850 = vlaneseq
      %v1851 = vshrl.u32 %v1850, 7
      %v1852 = vsub.s32 6, %v1851
      %v1853 = vrot.slane %v1654, %v1852
      %v1854 = vlaneseq
      %v1855 = vshrl.u32 %v1854, 7
      %v1856 = vsub.s32 6, %v1855
      %v1857 = vrot.slane %v1655, %v1856
      %v1858 = vlaneseq
      %v1859 = vshrl.u32 %v1858, 7
      %v1860 = vsub.s32 6, %v1859
      %v1861 = vrot.slane %v1656, %v1860
      %s1862 = scalar_lea.vmem [#allocation7], 224
      %v1863 = vld [vmem:[%s1862] sm:$0xff]
      %v1864 = vld [vmem:[%s1862 + $0x8] sm:$0xff]
      %v1869 = vcombine.low %v1849, %v1853
      %v1870 = vcombine.low %v1857, %v1861
      %v1873 = vmul.f32 %v1863, %v1869
      %v1874 = vmul.f32 %v1864, %v1870
      %v1875 = vadd.f32 %v1844, %v1873
      %v1876 = vadd.f32 %v1845, %v1874
      %v1877 = vlaneseq
      %v1878 = vshrl.u32 %v1877, 7
      %v1879 = vsub.s32 7, %v1878
      %v1880 = vrot.slane %v1661, %v1879
      %v1881 = vlaneseq
      %v1882 = vshrl.u32 %v1881, 7
      %v1883 = vsub.s32 7, %v1882
      %v1884 = vrot.slane %v1654, %v1883
      %v1885 = vlaneseq
      %v1886 = vshrl.u32 %v1885, 7
      %v1887 = vsub.s32 7, %v1886
      %v1888 = vrot.slane %v1655, %v1887
      %v1889 = vlaneseq
      %v1890 = vshrl.u32 %v1889, 7
      %v1891 = vsub.s32 7, %v1890
      %v1892 = vrot.slane %v1656, %v1891
      %s1893 = scalar_lea.vmem [#allocation7], 240
      %v1894 = vld [vmem:[%s1893] sm:$0xff]
      %v1895 = vld [vmem:[%s1893 + $0x8] sm:$0xff]
      %v1900 = vcombine.low %v1880, %v1884
      %v1901 = vcombine.low %v1888, %v1892
      %v1904 = vmul.f32 %v1894, %v1900
      %v1905 = vmul.f32 %v1895, %v1901
      %v1906 = vadd.f32 %v1875, %v1904
      %v1907 = vadd.f32 %v1876, %v1905
      %1908 = vrot.lane.b32.xlu0 %v1378, 15
      %v1909 = vpop.permute.xlu0 %1908
      %1911 = vrot.lane.b32.xlu0 %v1375, 15
      %v1912 = vpop.permute.xlu0 %1911
      %1913 = vrot.lane.b32.xlu0 %v1376, 15
      %v1914 = vpop.permute.xlu0 %1913
      %1915 = vrot.lane.b32.xlu0 %v1377, 15
      %v1916 = vpop.permute.xlu0 %1915
      %v1917 = vsel %vm376, %v1912, %v1914
      %v1918 = vsel %vm376, %v1914, %v1916
      %v1919 = vsel %vm376, %v1916, %v1909
      %v1924 = vsel %vm376, %v1909, %v1912
      %v1925 = vlaneseq
      %v1926 = vshrl.u32 %v1925, 7
      %v1927 = vsub.s32 0, %v1926
      %v1928 = vrot.slane %v1924, %v1927
      %v1929 = vlaneseq
      %v1930 = vshrl.u32 %v1929, 7
      %v1931 = vsub.s32 0, %v1930
      %v1932 = vrot.slane %v1917, %v1931
      %v1933 = vlaneseq
      %v1934 = vshrl.u32 %v1933, 7
      %v1935 = vsub.s32 0, %v1934
      %v1936 = vrot.slane %v1918, %v1935
      %v1937 = vlaneseq
      %v1938 = vshrl.u32 %v1937, 7
      %v1939 = vsub.s32 0, %v1938
      %v1940 = vrot.slane %v1919, %v1939
      %s1941 = scalar_lea.vmem [#allocation7], 256
      %v1942 = vld [vmem:[%s1941] sm:$0xff]
      %v1943 = vld [vmem:[%s1941 + $0x8] sm:$0xff]
      %v1948 = vcombine.low %v1928, %v1932
      %v1949 = vcombine.low %v1936, %v1940
      %v1952 = vmul.f32 %v1942, %v1948
      %v1953 = vmul.f32 %v1943, %v1949
      %v1954 = vlaneseq
      %v1955 = vshrl.u32 %v1954, 7
      %v1956 = vsub.s32 1, %v1955
      %v1957 = vrot.slane %v1924, %v1956
      %v1958 = vlaneseq
      %v1959 = vshrl.u32 %v1958, 7
      %v1960 = vsub.s32 1, %v1959
      %v1961 = vrot.slane %v1917, %v1960
      %v1962 = vlaneseq
      %v1963 = vshrl.u32 %v1962, 7
      %v1964 = vsub.s32 1, %v1963
      %v1965 = vrot.slane %v1918, %v1964
      %v1966 = vlaneseq
      %v1967 = vshrl.u32 %v1966, 7
      %v1968 = vsub.s32 1, %v1967
      %v1969 = vrot.slane %v1919, %v1968
      %s1970 = scalar_lea.vmem [#allocation7], 272
      %v1971 = vld [vmem:[%s1970] sm:$0xff]
      %v1972 = vld [vmem:[%s1970 + $0x8] sm:$0xff]
      %v1977 = vcombine.low %v1957, %v1961
      %v1978 = vcombine.low %v1965, %v1969
      %v1981 = vmul.f32 %v1971, %v1977
      %v1982 = vmul.f32 %v1972, %v1978
      %v1983 = vadd.f32 %v1952, %v1981
      %v1984 = vadd.f32 %v1953, %v1982
      %v1985 = vlaneseq
      %v1986 = vshrl.u32 %v1985, 7
      %v1987 = vsub.s32 2, %v1986
      %v1988 = vrot.slane %v1924, %v1987
      %v1989 = vlaneseq
      %v1990 = vshrl.u32 %v1989, 7
      %v1991 = vsub.s32 2, %v1990
      %v1992 = vrot.slane %v1917, %v1991
      %v1993 = vlaneseq
      %v1994 = vshrl.u32 %v1993, 7
      %v1995 = vsub.s32 2, %v1994
      %v1996 = vrot.slane %v1918, %v1995
      %v1997 = vlaneseq
      %v1998 = vshrl.u32 %v1997, 7
      %v1999 = vsub.s32 2, %v1998
      %v2000 = vrot.slane %v1919, %v1999
      %s2001 = scalar_lea.vmem [#allocation7], 288
      %v2002 = vld [vmem:[%s2001] sm:$0xff]
      %v2003 = vld [vmem:[%s2001 + $0x8] sm:$0xff]
      %v2008 = vcombine.low %v1988, %v1992
      %v2009 = vcombine.low %v1996, %v2000
      %v2012 = vmul.f32 %v2002, %v2008
      %v2013 = vmul.f32 %v2003, %v2009
      %v2014 = vadd.f32 %v1983, %v2012
      %v2015 = vadd.f32 %v1984, %v2013
      %v2016 = vlaneseq
      %v2017 = vshrl.u32 %v2016, 7
      %v2018 = vsub.s32 3, %v2017
      %v2019 = vrot.slane %v1924, %v2018
      %v2020 = vlaneseq
      %v2021 = vshrl.u32 %v2020, 7
      %v2022 = vsub.s32 3, %v2021
      %v2023 = vrot.slane %v1917, %v2022
      %v2024 = vlaneseq
      %v2025 = vshrl.u32 %v2024, 7
      %v2026 = vsub.s32 3, %v2025
      %v2027 = vrot.slane %v1918, %v2026
      %v2028 = vlaneseq
      %v2029 = vshrl.u32 %v2028, 7
      %v2030 = vsub.s32 3, %v2029
      %v2031 = vrot.slane %v1919, %v2030
      %s2032 = scalar_lea.vmem [#allocation7], 304
      %v2033 = vld [vmem:[%s2032] sm:$0xff]
      %v2034 = vld [vmem:[%s2032 + $0x8] sm:$0xff]
      %v2039 = vcombine.low %v2019, %v2023
      %v2040 = vcombine.low %v2027, %v2031
      %v2043 = vmul.f32 %v2033, %v2039
      %v2044 = vmul.f32 %v2034, %v2040
      %v2045 = vadd.f32 %v2014, %v2043
      %v2046 = vadd.f32 %v2015, %v2044
      %v2047 = vlaneseq
      %v2048 = vshrl.u32 %v2047, 7
      %v2049 = vsub.s32 4, %v2048
      %v2050 = vrot.slane %v1924, %v2049
      %v2051 = vlaneseq
      %v2052 = vshrl.u32 %v2051, 7
      %v2053 = vsub.s32 4, %v2052
      %v2054 = vrot.slane %v1917, %v2053
      %v2055 = vlaneseq
      %v2056 = vshrl.u32 %v2055, 7
      %v2057 = vsub.s32 4, %v2056
      %v2058 = vrot.slane %v1918, %v2057
      %v2059 = vlaneseq
      %v2060 = vshrl.u32 %v2059, 7
      %v2061 = vsub.s32 4, %v2060
      %v2062 = vrot.slane %v1919, %v2061
      %s2063 = scalar_lea.vmem [#allocation7], 320
      %v2064 = vld [vmem:[%s2063] sm:$0xff]
      %v2065 = vld [vmem:[%s2063 + $0x8] sm:$0xff]
      %v2070 = vcombine.low %v2050, %v2054
      %v2071 = vcombine.low %v2058, %v2062
      %v2074 = vmul.f32 %v2064, %v2070
      %v2075 = vmul.f32 %v2065, %v2071
      %v2076 = vadd.f32 %v2045, %v2074
      %v2077 = vadd.f32 %v2046, %v2075
      %v2078 = vlaneseq
      %v2079 = vshrl.u32 %v2078, 7
      %v2080 = vsub.s32 5, %v2079
      %v2081 = vrot.slane %v1924, %v2080
      %v2082 = vlaneseq
      %v2083 = vshrl.u32 %v2082, 7
      %v2084 = vsub.s32 5, %v2083
      %v2085 = vrot.slane %v1917, %v2084
      %v2086 = vlaneseq
      %v2087 = vshrl.u32 %v2086, 7
      %v2088 = vsub.s32 5, %v2087
      %v2089 = vrot.slane %v1918, %v2088
      %v2090 = vlaneseq
      %v2091 = vshrl.u32 %v2090, 7
      %v2092 = vsub.s32 5, %v2091
      %v2093 = vrot.slane %v1919, %v2092
      %s2094 = scalar_lea.vmem [#allocation7], 336
      %v2095 = vld [vmem:[%s2094] sm:$0xff]
      %v2096 = vld [vmem:[%s2094 + $0x8] sm:$0xff]
      %v2101 = vcombine.low %v2081, %v2085
      %v2102 = vcombine.low %v2089, %v2093
      %v2105 = vmul.f32 %v2095, %v2101
      %v2106 = vmul.f32 %v2096, %v2102
      %v2107 = vadd.f32 %v2076, %v2105
      %v2108 = vadd.f32 %v2077, %v2106
      %v2109 = vlaneseq
      %v2110 = vshrl.u32 %v2109, 7
      %v2111 = vsub.s32 6, %v2110
      %v2112 = vrot.slane %v1924, %v2111
      %v2113 = vlaneseq
      %v2114 = vshrl.u32 %v2113, 7
      %v2115 = vsub.s32 6, %v2114
      %v2116 = vrot.slane %v1917, %v2115
      %v2117 = vlaneseq
      %v2118 = vshrl.u32 %v2117, 7
      %v2119 = vsub.s32 6, %v2118
      %v2120 = vrot.slane %v1918, %v2119
      %v2121 = vlaneseq
      %v2122 = vshrl.u32 %v2121, 7
      %v2123 = vsub.s32 6, %v2122
      %v2124 = vrot.slane %v1919, %v2123
      %s2125 = scalar_lea.vmem [#allocation7], 352
      %v2126 = vld [vmem:[%s2125] sm:$0xff]
      %v2127 = vld [vmem:[%s2125 + $0x8] sm:$0xff]
      %v2132 = vcombine.low %v2112, %v2116
      %v2133 = vcombine.low %v2120, %v2124
      %v2136 = vmul.f32 %v2126, %v2132
      %v2137 = vmul.f32 %v2127, %v2133
      %v2138 = vadd.f32 %v2107, %v2136
      %v2139 = vadd.f32 %v2108, %v2137
      %v2140 = vlaneseq
      %v2141 = vshrl.u32 %v2140, 7
      %v2142 = vsub.s32 7, %v2141
      %v2143 = vrot.slane %v1924, %v2142
      %v2144 = vlaneseq
      %v2145 = vshrl.u32 %v2144, 7
      %v2146 = vsub.s32 7, %v2145
      %v2147 = vrot.slane %v1917, %v2146
      %v2148 = vlaneseq
      %v2149 = vshrl.u32 %v2148, 7
      %v2150 = vsub.s32 7, %v2149
      %v2151 = vrot.slane %v1918, %v2150
      %v2152 = vlaneseq
      %v2153 = vshrl.u32 %v2152, 7
      %v2154 = vsub.s32 7, %v2153
      %v2155 = vrot.slane %v1919, %v2154
      %s2156 = scalar_lea.vmem [#allocation7], 368
      %v2157 = vld [vmem:[%s2156] sm:$0xff]
      %v2158 = vld [vmem:[%s2156 + $0x8] sm:$0xff]
      %v2163 = vcombine.low %v2143, %v2147
      %v2164 = vcombine.low %v2151, %v2155
      %v2167 = vmul.f32 %v2157, %v2163
      %v2168 = vmul.f32 %v2158, %v2164
      %v2169 = vadd.f32 %v2138, %v2167
      %v2170 = vadd.f32 %v2139, %v2168
      %2171 = vrot.lane.b32.xlu0 %v1378, 1
      %v2172 = vpop.permute.xlu0 %2171
      %2174 = vrot.lane.b32.xlu0 %v1375, 1
      %v2175 = vpop.permute.xlu0 %2174
      %2176 = vrot.lane.b32.xlu0 %v1376, 1
      %v2177 = vpop.permute.xlu0 %2176
      %2178 = vrot.lane.b32.xlu0 %v1377, 1
      %v2179 = vpop.permute.xlu0 %2178
      %v2180 = vsel %vm506, %v2175, %v2177
      %v2181 = vsel %vm506, %v2177, %v2179
      %v2182 = vsel %vm506, %v2179, %v2172
      %v2187 = vsel %vm506, %v2172, %v2175
      %v2188 = vlaneseq
      %v2189 = vshrl.u32 %v2188, 7
      %v2190 = vsub.s32 0, %v2189
      %v2191 = vrot.slane %v2187, %v2190
      %v2192 = vlaneseq
      %v2193 = vshrl.u32 %v2192, 7
      %v2194 = vsub.s32 0, %v2193
      %v2195 = vrot.slane %v2180, %v2194
      %v2196 = vlaneseq
      %v2197 = vshrl.u32 %v2196, 7
      %v2198 = vsub.s32 0, %v2197
      %v2199 = vrot.slane %v2181, %v2198
      %v2200 = vlaneseq
      %v2201 = vshrl.u32 %v2200, 7
      %v2202 = vsub.s32 0, %v2201
      %v2203 = vrot.slane %v2182, %v2202
      %s2204 = scalar_lea.vmem [#allocation7], 384
      %v2205 = vld [vmem:[%s2204] sm:$0xff]
      %v2206 = vld [vmem:[%s2204 + $0x8] sm:$0xff]
      %v2211 = vcombine.low %v2191, %v2195
      %v2212 = vcombine.low %v2199, %v2203
      %v2215 = vmul.f32 %v2205, %v2211
      %v2216 = vmul.f32 %v2206, %v2212
      %v2217 = vlaneseq
      %v2218 = vshrl.u32 %v2217, 7
      %v2219 = vsub.s32 1, %v2218
      %v2220 = vrot.slane %v2187, %v2219
      %v2221 = vlaneseq
      %v2222 = vshrl.u32 %v2221, 7
      %v2223 = vsub.s32 1, %v2222
      %v2224 = vrot.slane %v2180, %v2223
      %v2225 = vlaneseq
      %v2226 = vshrl.u32 %v2225, 7
      %v2227 = vsub.s32 1, %v2226
      %v2228 = vrot.slane %v2181, %v2227
      %v2229 = vlaneseq
      %v2230 = vshrl.u32 %v2229, 7
      %v2231 = vsub.s32 1, %v2230
      %v2232 = vrot.slane %v2182, %v2231
      %s2233 = scalar_lea.vmem [#allocation7], 400
      %v2234 = vld [vmem:[%s2233] sm:$0xff]
      %v2235 = vld [vmem:[%s2233 + $0x8] sm:$0xff]
      %v2240 = vcombine.low %v2220, %v2224
      %v2241 = vcombine.low %v2228, %v2232
      %v2244 = vmul.f32 %v2234, %v2240
      %v2245 = vmul.f32 %v2235, %v2241
      %v2246 = vadd.f32 %v2215, %v2244
      %v2247 = vadd.f32 %v2216, %v2245
      %v2248 = vlaneseq
      %v2249 = vshrl.u32 %v2248, 7
      %v2250 = vsub.s32 2, %v2249
      %v2251 = vrot.slane %v2187, %v2250
      %v2252 = vlaneseq
      %v2253 = vshrl.u32 %v2252, 7
      %v2254 = vsub.s32 2, %v2253
      %v2255 = vrot.slane %v2180, %v2254
      %v2256 = vlaneseq
      %v2257 = vshrl.u32 %v2256, 7
      %v2258 = vsub.s32 2, %v2257
      %v2259 = vrot.slane %v2181, %v2258
      %v2260 = vlaneseq
      %v2261 = vshrl.u32 %v2260, 7
      %v2262 = vsub.s32 2, %v2261
      %v2263 = vrot.slane %v2182, %v2262
      %s2264 = scalar_lea.vmem [#allocation7], 416
      %v2265 = vld [vmem:[%s2264] sm:$0xff]
      %v2266 = vld [vmem:[%s2264 + $0x8] sm:$0xff]
      %v2271 = vcombine.low %v2251, %v2255
      %v2272 = vcombine.low %v2259, %v2263
      %v2275 = vmul.f32 %v2265, %v2271
      %v2276 = vmul.f32 %v2266, %v2272
      %v2277 = vadd.f32 %v2246, %v2275
      %v2278 = vadd.f32 %v2247, %v2276
      %v2279 = vlaneseq
      %v2280 = vshrl.u32 %v2279, 7
      %v2281 = vsub.s32 3, %v2280
      %v2282 = vrot.slane %v2187, %v2281
      %v2283 = vlaneseq
      %v2284 = vshrl.u32 %v2283, 7
      %v2285 = vsub.s32 3, %v2284
      %v2286 = vrot.slane %v2180, %v2285
      %v2287 = vlaneseq
      %v2288 = vshrl.u32 %v2287, 7
      %v2289 = vsub.s32 3, %v2288
      %v2290 = vrot.slane %v2181, %v2289
      %v2291 = vlaneseq
      %v2292 = vshrl.u32 %v2291, 7
      %v2293 = vsub.s32 3, %v2292
      %v2294 = vrot.slane %v2182, %v2293
      %s2295 = scalar_lea.vmem [#allocation7], 432
      %v2296 = vld [vmem:[%s2295] sm:$0xff]
      %v2297 = vld [vmem:[%s2295 + $0x8] sm:$0xff]
      %v2302 = vcombine.low %v2282, %v2286
      %v2303 = vcombine.low %v2290, %v2294
      %v2306 = vmul.f32 %v2296, %v2302
      %v2307 = vmul.f32 %v2297, %v2303
      %v2308 = vadd.f32 %v2277, %v2306
      %v2309 = vadd.f32 %v2278, %v2307
      %v2310 = vlaneseq
      %v2311 = vshrl.u32 %v2310, 7
      %v2312 = vsub.s32 4, %v2311
      %v2313 = vrot.slane %v2187, %v2312
      %v2314 = vlaneseq
      %v2315 = vshrl.u32 %v2314, 7
      %v2316 = vsub.s32 4, %v2315
      %v2317 = vrot.slane %v2180, %v2316
      %v2318 = vlaneseq
      %v2319 = vshrl.u32 %v2318, 7
      %v2320 = vsub.s32 4, %v2319
      %v2321 = vrot.slane %v2181, %v2320
      %v2322 = vlaneseq
      %v2323 = vshrl.u32 %v2322, 7
      %v2324 = vsub.s32 4, %v2323
      %v2325 = vrot.slane %v2182, %v2324
      %s2326 = scalar_lea.vmem [#allocation7], 448
      %v2327 = vld [vmem:[%s2326] sm:$0xff]
      %v2328 = vld [vmem:[%s2326 + $0x8] sm:$0xff]
      %v2333 = vcombine.low %v2313, %v2317
      %v2334 = vcombine.low %v2321, %v2325
      %v2337 = vmul.f32 %v2327, %v2333
      %v2338 = vmul.f32 %v2328, %v2334
      %v2339 = vadd.f32 %v2308, %v2337
      %v2340 = vadd.f32 %v2309, %v2338
      %v2341 = vlaneseq
      %v2342 = vshrl.u32 %v2341, 7
      %v2343 = vsub.s32 5, %v2342
      %v2344 = vrot.slane %v2187, %v2343
      %v2345 = vlaneseq
      %v2346 = vshrl.u32 %v2345, 7
      %v2347 = vsub.s32 5, %v2346
      %v2348 = vrot.slane %v2180, %v2347
      %v2349 = vlaneseq
      %v2350 = vshrl.u32 %v2349, 7
      %v2351 = vsub.s32 5, %v2350
      %v2352 = vrot.slane %v2181, %v2351
      %v2353 = vlaneseq
      %v2354 = vshrl.u32 %v2353, 7
      %v2355 = vsub.s32 5, %v2354
      %v2356 = vrot.slane %v2182, %v2355
      %s2357 = scalar_lea.vmem [#allocation7], 464
      %v2358 = vld [vmem:[%s2357] sm:$0xff]
      %v2359 = vld [vmem:[%s2357 + $0x8] sm:$0xff]
      %v2364 = vcombine.low %v2344, %v2348
      %v2365 = vcombine.low %v2352, %v2356
      %v2368 = vmul.f32 %v2358, %v2364
      %v2369 = vmul.f32 %v2359, %v2365
      %v2370 = vadd.f32 %v2339, %v2368
      %v2371 = vadd.f32 %v2340, %v2369
      %v2372 = vlaneseq
      %v2373 = vshrl.u32 %v2372, 7
      %v2374 = vsub.s32 6, %v2373
      %v2375 = vrot.slane %v2187, %v2374
      %v2376 = vlaneseq
      %v2377 = vshrl.u32 %v2376, 7
      %v2378 = vsub.s32 6, %v2377
      %v2379 = vrot.slane %v2180, %v2378
      %v2380 = vlaneseq
      %v2381 = vshrl.u32 %v2380, 7
      %v2382 = vsub.s32 6, %v2381
      %v2383 = vrot.slane %v2181, %v2382
      %v2384 = vlaneseq
      %v2385 = vshrl.u32 %v2384, 7
      %v2386 = vsub.s32 6, %v2385
      %v2387 = vrot.slane %v2182, %v2386
      %s2388 = scalar_lea.vmem [#allocation7], 480
      %v2389 = vld [vmem:[%s2388] sm:$0xff]
      %v2390 = vld [vmem:[%s2388 + $0x8] sm:$0xff]
      %v2395 = vcombine.low %v2375, %v2379
      %v2396 = vcombine.low %v2383, %v2387
      %v2399 = vmul.f32 %v2389, %v2395
      %v2400 = vmul.f32 %v2390, %v2396
      %v2401 = vadd.f32 %v2370, %v2399
      %v2402 = vadd.f32 %v2371, %v2400
      %v2403 = vlaneseq
      %v2404 = vshrl.u32 %v2403, 7
      %v2405 = vsub.s32 7, %v2404
      %v2406 = vrot.slane %v2187, %v2405
      %v2407 = vlaneseq
      %v2408 = vshrl.u32 %v2407, 7
      %v2409 = vsub.s32 7, %v2408
      %v2410 = vrot.slane %v2180, %v2409
      %v2411 = vlaneseq
      %v2412 = vshrl.u32 %v2411, 7
      %v2413 = vsub.s32 7, %v2412
      %v2414 = vrot.slane %v2181, %v2413
      %v2415 = vlaneseq
      %v2416 = vshrl.u32 %v2415, 7
      %v2417 = vsub.s32 7, %v2416
      %v2418 = vrot.slane %v2182, %v2417
      %s2419 = scalar_lea.vmem [#allocation7], 496
      %v2420 = vld [vmem:[%s2419] sm:$0xff]
      %v2421 = vld [vmem:[%s2419 + $0x8] sm:$0xff]
      %v2426 = vcombine.low %v2406, %v2410
      %v2427 = vcombine.low %v2414, %v2418
      %v2430 = vmul.f32 %v2420, %v2426
      %v2431 = vmul.f32 %v2421, %v2427
      %v2432 = vadd.f32 %v2401, %v2430
      %v2433 = vadd.f32 %v2402, %v2431
      %v2434 = vlaneseq
      %v2435 = vshrl.u32 %v2434, 7
      %v2436 = vsub.s32 0, %v2435
      %v2437 = vrot.slane %v1375, %v2436
      %v2438 = vlaneseq
      %v2439 = vshrl.u32 %v2438, 7
      %v2440 = vsub.s32 0, %v2439
      %v2441 = vrot.slane %v1376, %v2440
      %v2442 = vlaneseq
      %v2443 = vshrl.u32 %v2442, 7
      %v2444 = vsub.s32 0, %v2443
      %v2445 = vrot.slane %v1377, %v2444
      %v2446 = vlaneseq
      %v2447 = vshrl.u32 %v2446, 7
      %v2448 = vsub.s32 0, %v2447
      %v2449 = vrot.slane %v1378, %v2448
      %s2450 = scalar_lea.vmem [#allocation7], 512
      %v2451 = vld [vmem:[%s2450] sm:$0xff]
      %v2452 = vld [vmem:[%s2450 + $0x8] sm:$0xff]
      %v2457 = vcombine.low %v2437, %v2441
      %v2458 = vcombine.low %v2445, %v2449
      %v2461 = vmul.f32 %v2451, %v2457
      %v2462 = vmul.f32 %v2452, %v2458
      %v2463 = vlaneseq
      %v2464 = vshrl.u32 %v2463, 7
      %v2465 = vsub.s32 1, %v2464
      %v2466 = vrot.slane %v1375, %v2465
      %v2467 = vlaneseq
      %v2468 = vshrl.u32 %v2467, 7
      %v2469 = vsub.s32 1, %v2468
      %v2470 = vrot.slane %v1376, %v2469
      %v2471 = vlaneseq
      %v2472 = vshrl.u32 %v2471, 7
      %v2473 = vsub.s32 1, %v2472
      %v2474 = vrot.slane %v1377, %v2473
      %v2475 = vlaneseq
      %v2476 = vshrl.u32 %v2475, 7
      %v2477 = vsub.s32 1, %v2476
      %v2478 = vrot.slane %v1378, %v2477
      %s2479 = scalar_lea.vmem [#allocation7], 528
      %v2480 = vld [vmem:[%s2479] sm:$0xff]
      %v2481 = vld [vmem:[%s2479 + $0x8] sm:$0xff]
      %v2486 = vcombine.low %v2466, %v2470
      %v2487 = vcombine.low %v2474, %v2478
      %v2490 = vmul.f32 %v2480, %v2486
      %v2491 = vmul.f32 %v2481, %v2487
      %v2492 = vadd.f32 %v2461, %v2490
      %v2493 = vadd.f32 %v2462, %v2491
      %v2494 = vlaneseq
      %v2495 = vshrl.u32 %v2494, 7
      %v2496 = vsub.s32 2, %v2495
      %v2497 = vrot.slane %v1375, %v2496
      %v2498 = vlaneseq
      %v2499 = vshrl.u32 %v2498, 7
      %v2500 = vsub.s32 2, %v2499
      %v2501 = vrot.slane %v1376, %v2500
      %v2502 = vlaneseq
      %v2503 = vshrl.u32 %v2502, 7
      %v2504 = vsub.s32 2, %v2503
      %v2505 = vrot.slane %v1377, %v2504
      %v2506 = vlaneseq
      %v2507 = vshrl.u32 %v2506, 7
      %v2508 = vsub.s32 2, %v2507
      %v2509 = vrot.slane %v1378, %v2508
      %s2510 = scalar_lea.vmem [#allocation7], 544
      %v2511 = vld [vmem:[%s2510] sm:$0xff]
      %v2512 = vld [vmem:[%s2510 + $0x8] sm:$0xff]
      %v2517 = vcombine.low %v2497, %v2501
      %v2518 = vcombine.low %v2505, %v2509
      %v2521 = vmul.f32 %v2511, %v2517
      %v2522 = vmul.f32 %v2512, %v2518
      %v2523 = vadd.f32 %v2492, %v2521
      %v2524 = vadd.f32 %v2493, %v2522
      %v2525 = vlaneseq
      %v2526 = vshrl.u32 %v2525, 7
      %v2527 = vsub.s32 3, %v2526
      %v2528 = vrot.slane %v1375, %v2527
      %v2529 = vlaneseq
      %v2530 = vshrl.u32 %v2529, 7
      %v2531 = vsub.s32 3, %v2530
      %v2532 = vrot.slane %v1376, %v2531
      %v2533 = vlaneseq
      %v2534 = vshrl.u32 %v2533, 7
      %v2535 = vsub.s32 3, %v2534
      %v2536 = vrot.slane %v1377, %v2535
      %v2537 = vlaneseq
      %v2538 = vshrl.u32 %v2537, 7
      %v2539 = vsub.s32 3, %v2538
      %v2540 = vrot.slane %v1378, %v2539
      %s2541 = scalar_lea.vmem [#allocation7], 560
      %v2542 = vld [vmem:[%s2541] sm:$0xff]
      %v2543 = vld [vmem:[%s2541 + $0x8] sm:$0xff]
      %v2548 = vcombine.low %v2528, %v2532
      %v2549 = vcombine.low %v2536, %v2540
      %v2552 = vmul.f32 %v2542, %v2548
      %v2553 = vmul.f32 %v2543, %v2549
      %v2554 = vadd.f32 %v2523, %v2552
      %v2555 = vadd.f32 %v2524, %v2553
      %v2556 = vlaneseq
      %v2557 = vshrl.u32 %v2556, 7
      %v2558 = vsub.s32 4, %v2557
      %v2559 = vrot.slane %v1375, %v2558
      %v2560 = vlaneseq
      %v2561 = vshrl.u32 %v2560, 7
      %v2562 = vsub.s32 4, %v2561
      %v2563 = vrot.slane %v1376, %v2562
      %v2564 = vlaneseq
      %v2565 = vshrl.u32 %v2564, 7
      %v2566 = vsub.s32 4, %v2565
      %v2567 = vrot.slane %v1377, %v2566
      %v2568 = vlaneseq
      %v2569 = vshrl.u32 %v2568, 7
      %v2570 = vsub.s32 4, %v2569
      %v2571 = vrot.slane %v1378, %v2570
      %s2572 = scalar_lea.vmem [#allocation7], 576
      %v2573 = vld [vmem:[%s2572] sm:$0xff]
      %v2574 = vld [vmem:[%s2572 + $0x8] sm:$0xff]
      %v2579 = vcombine.low %v2559, %v2563
      %v2580 = vcombine.low %v2567, %v2571
      %v2583 = vmul.f32 %v2573, %v2579
      %v2584 = vmul.f32 %v2574, %v2580
      %v2585 = vadd.f32 %v2554, %v2583
      %v2586 = vadd.f32 %v2555, %v2584
      %v2587 = vlaneseq
      %v2588 = vshrl.u32 %v2587, 7
      %v2589 = vsub.s32 5, %v2588
      %v2590 = vrot.slane %v1375, %v2589
      %v2591 = vlaneseq
      %v2592 = vshrl.u32 %v2591, 7
      %v2593 = vsub.s32 5, %v2592
      %v2594 = vrot.slane %v1376, %v2593
      %v2595 = vlaneseq
      %v2596 = vshrl.u32 %v2595, 7
      %v2597 = vsub.s32 5, %v2596
      %v2598 = vrot.slane %v1377, %v2597
      %v2599 = vlaneseq
      %v2600 = vshrl.u32 %v2599, 7
      %v2601 = vsub.s32 5, %v2600
      %v2602 = vrot.slane %v1378, %v2601
      %s2603 = scalar_lea.vmem [#allocation7], 592
      %v2604 = vld [vmem:[%s2603] sm:$0xff]
      %v2605 = vld [vmem:[%s2603 + $0x8] sm:$0xff]
      %v2610 = vcombine.low %v2590, %v2594
      %v2611 = vcombine.low %v2598, %v2602
      %v2614 = vmul.f32 %v2604, %v2610
      %v2615 = vmul.f32 %v2605, %v2611
      %v2616 = vadd.f32 %v2585, %v2614
      %v2617 = vadd.f32 %v2586, %v2615
      %v2618 = vlaneseq
      %v2619 = vshrl.u32 %v2618, 7
      %v2620 = vsub.s32 6, %v2619
      %v2621 = vrot.slane %v1375, %v2620
      %v2622 = vlaneseq
      %v2623 = vshrl.u32 %v2622, 7
      %v2624 = vsub.s32 6, %v2623
      %v2625 = vrot.slane %v1376, %v2624
      %v2626 = vlaneseq
      %v2627 = vshrl.u32 %v2626, 7
      %v2628 = vsub.s32 6, %v2627
      %v2629 = vrot.slane %v1377, %v2628
      %v2630 = vlaneseq
      %v2631 = vshrl.u32 %v2630, 7
      %v2632 = vsub.s32 6, %v2631
      %v2633 = vrot.slane %v1378, %v2632
      %s2634 = scalar_lea.vmem [#allocation7], 608
      %v2635 = vld [vmem:[%s2634] sm:$0xff]
      %v2636 = vld [vmem:[%s2634 + $0x8] sm:$0xff]
      %v2641 = vcombine.low %v2621, %v2625
      %v2642 = vcombine.low %v2629, %v2633
      %v2645 = vmul.f32 %v2635, %v2641
      %v2646 = vmul.f32 %v2636, %v2642
      %v2647 = vadd.f32 %v2616, %v2645
      %v2648 = vadd.f32 %v2617, %v2646
      %v2649 = vlaneseq
      %v2650 = vshrl.u32 %v2649, 7
      %v2651 = vsub.s32 7, %v2650
      %v2652 = vrot.slane %v1375, %v2651
      %v2653 = vlaneseq
      %v2654 = vshrl.u32 %v2653, 7
      %v2655 = vsub.s32 7, %v2654
      %v2656 = vrot.slane %v1376, %v2655
      %v2657 = vlaneseq
      %v2658 = vshrl.u32 %v2657, 7
      %v2659 = vsub.s32 7, %v2658
      %v2660 = vrot.slane %v1377, %v2659
      %v2661 = vlaneseq
      %v2662 = vshrl.u32 %v2661, 7
      %v2663 = vsub.s32 7, %v2662
      %v2664 = vrot.slane %v1378, %v2663
      %s2665 = scalar_lea.vmem [#allocation7], 624
      %v2666 = vld [vmem:[%s2665] sm:$0xff]
      %v2667 = vld [vmem:[%s2665 + $0x8] sm:$0xff]
      %v2672 = vcombine.low %v2652, %v2656
      %v2673 = vcombine.low %v2660, %v2664
      %v2676 = vmul.f32 %v2666, %v2672
      %v2677 = vmul.f32 %v2667, %v2673
      %v2678 = vadd.f32 %v2647, %v2676
      %v2679 = vadd.f32 %v2648, %v2677
      %2680 = vrot.lane.b32.xlu0 %v1375, 127
      %v2681 = vpop.permute.xlu0 %2680
      %2682 = vrot.lane.b32.xlu0 %v1376, 127
      %v2683 = vpop.permute.xlu0 %2682
      %2684 = vrot.lane.b32.xlu0 %v1377, 127
      %v2685 = vpop.permute.xlu0 %2684
      %2686 = vrot.lane.b32.xlu0 %v1378, 127
      %v2687 = vpop.permute.xlu0 %2686
      %v2688 = vsel %vm827, %v2681, %v2683
      %v2689 = vsel %vm827, %v2683, %v2685
      %v2690 = vsel %vm827, %v2685, %v2687
      %v2696 = vsel %vm827, %v2687, %v2681
      %v2697 = vlaneseq
      %v2698 = vshrl.u32 %v2697, 7
      %v2699 = vsub.s32 0, %v2698
      %v2700 = vrot.slane %v2688, %v2699
      %v2701 = vlaneseq
      %v2702 = vshrl.u32 %v2701, 7
      %v2703 = vsub.s32 0, %v2702
      %v2704 = vrot.slane %v2689, %v2703
      %v2705 = vlaneseq
      %v2706 = vshrl.u32 %v2705, 7
      %v2707 = vsub.s32 0, %v2706
      %v2708 = vrot.slane %v2690, %v2707
      %v2709 = vlaneseq
      %v2710 = vshrl.u32 %v2709, 7
      %v2711 = vsub.s32 0, %v2710
      %v2712 = vrot.slane %v2696, %v2711
      %s2713 = scalar_lea.vmem [#allocation7], 640
      %v2714 = vld [vmem:[%s2713] sm:$0xff]
      %v2715 = vld [vmem:[%s2713 + $0x8] sm:$0xff]
      %v2720 = vcombine.low %v2700, %v2704
      %v2721 = vcombine.low %v2708, %v2712
      %v2724 = vmul.f32 %v2714, %v2720
      %v2725 = vmul.f32 %v2715, %v2721
      %v2726 = vlaneseq
      %v2727 = vshrl.u32 %v2726, 7
      %v2728 = vsub.s32 1, %v2727
      %v2729 = vrot.slane %v2688, %v2728
      %v2730 = vlaneseq
      %v2731 = vshrl.u32 %v2730, 7
      %v2732 = vsub.s32 1, %v2731
      %v2733 = vrot.slane %v2689, %v2732
      %v2734 = vlaneseq
      %v2735 = vshrl.u32 %v2734, 7
      %v2736 = vsub.s32 1, %v2735
      %v2737 = vrot.slane %v2690, %v2736
      %v2738 = vlaneseq
      %v2739 = vshrl.u32 %v2738, 7
      %v2740 = vsub.s32 1, %v2739
      %v2741 = vrot.slane %v2696, %v2740
      %s2742 = scalar_lea.vmem [#allocation7], 656
      %v2743 = vld [vmem:[%s2742] sm:$0xff]
      %v2744 = vld [vmem:[%s2742 + $0x8] sm:$0xff]
      %v2749 = vcombine.low %v2729, %v2733
      %v2750 = vcombine.low %v2737, %v2741
      %v2753 = vmul.f32 %v2743, %v2749
      %v2754 = vmul.f32 %v2744, %v2750
      %v2755 = vadd.f32 %v2724, %v2753
      %v2756 = vadd.f32 %v2725, %v2754
      %v2757 = vlaneseq
      %v2758 = vshrl.u32 %v2757, 7
      %v2759 = vsub.s32 2, %v2758
      %v2760 = vrot.slane %v2688, %v2759
      %v2761 = vlaneseq
      %v2762 = vshrl.u32 %v2761, 7
      %v2763 = vsub.s32 2, %v2762
      %v2764 = vrot.slane %v2689, %v2763
      %v2765 = vlaneseq
      %v2766 = vshrl.u32 %v2765, 7
      %v2767 = vsub.s32 2, %v2766
      %v2768 = vrot.slane %v2690, %v2767
      %v2769 = vlaneseq
      %v2770 = vshrl.u32 %v2769, 7
      %v2771 = vsub.s32 2, %v2770
      %v2772 = vrot.slane %v2696, %v2771
      %s2773 = scalar_lea.vmem [#allocation7], 672
      %v2774 = vld [vmem:[%s2773] sm:$0xff]
      %v2775 = vld [vmem:[%s2773 + $0x8] sm:$0xff]
      %v2780 = vcombine.low %v2760, %v2764
      %v2781 = vcombine.low %v2768, %v2772
      %v2784 = vmul.f32 %v2774, %v2780
      %v2785 = vmul.f32 %v2775, %v2781
      %v2786 = vadd.f32 %v2755, %v2784
      %v2787 = vadd.f32 %v2756, %v2785
      %v2788 = vlaneseq
      %v2789 = vshrl.u32 %v2788, 7
      %v2790 = vsub.s32 3, %v2789
      %v2791 = vrot.slane %v2688, %v2790
      %v2792 = vlaneseq
      %v2793 = vshrl.u32 %v2792, 7
      %v2794 = vsub.s32 3, %v2793
      %v2795 = vrot.slane %v2689, %v2794
      %v2796 = vlaneseq
      %v2797 = vshrl.u32 %v2796, 7
      %v2798 = vsub.s32 3, %v2797
      %v2799 = vrot.slane %v2690, %v2798
      %v2800 = vlaneseq
      %v2801 = vshrl.u32 %v2800, 7
      %v2802 = vsub.s32 3, %v2801
      %v2803 = vrot.slane %v2696, %v2802
      %s2804 = scalar_lea.vmem [#allocation7], 688
      %v2805 = vld [vmem:[%s2804] sm:$0xff]
      %v2806 = vld [vmem:[%s2804 + $0x8] sm:$0xff]
      %v2811 = vcombine.low %v2791, %v2795
      %v2812 = vcombine.low %v2799, %v2803
      %v2815 = vmul.f32 %v2805, %v2811
      %v2816 = vmul.f32 %v2806, %v2812
      %v2817 = vadd.f32 %v2786, %v2815
      %v2818 = vadd.f32 %v2787, %v2816
      %v2819 = vlaneseq
      %v2820 = vshrl.u32 %v2819, 7
      %v2821 = vsub.s32 4, %v2820
      %v2822 = vrot.slane %v2688, %v2821
      %v2823 = vlaneseq
      %v2824 = vshrl.u32 %v2823, 7
      %v2825 = vsub.s32 4, %v2824
      %v2826 = vrot.slane %v2689, %v2825
      %v2827 = vlaneseq
      %v2828 = vshrl.u32 %v2827, 7
      %v2829 = vsub.s32 4, %v2828
      %v2830 = vrot.slane %v2690, %v2829
      %v2831 = vlaneseq
      %v2832 = vshrl.u32 %v2831, 7
      %v2833 = vsub.s32 4, %v2832
      %v2834 = vrot.slane %v2696, %v2833
      %s2835 = scalar_lea.vmem [#allocation7], 704
      %v2836 = vld [vmem:[%s2835] sm:$0xff]
      %v2837 = vld [vmem:[%s2835 + $0x8] sm:$0xff]
      %v2842 = vcombine.low %v2822, %v2826
      %v2843 = vcombine.low %v2830, %v2834
      %v2846 = vmul.f32 %v2836, %v2842
      %v2847 = vmul.f32 %v2837, %v2843
      %v2848 = vadd.f32 %v2817, %v2846
      %v2849 = vadd.f32 %v2818, %v2847
      %v2850 = vlaneseq
      %v2851 = vshrl.u32 %v2850, 7
      %v2852 = vsub.s32 5, %v2851
      %v2853 = vrot.slane %v2688, %v2852
      %v2854 = vlaneseq
      %v2855 = vshrl.u32 %v2854, 7
      %v2856 = vsub.s32 5, %v2855
      %v2857 = vrot.slane %v2689, %v2856
      %v2858 = vlaneseq
      %v2859 = vshrl.u32 %v2858, 7
      %v2860 = vsub.s32 5, %v2859
      %v2861 = vrot.slane %v2690, %v2860
      %v2862 = vlaneseq
      %v2863 = vshrl.u32 %v2862, 7
      %v2864 = vsub.s32 5, %v2863
      %v2865 = vrot.slane %v2696, %v2864
      %s2866 = scalar_lea.vmem [#allocation7], 720
      %v2867 = vld [vmem:[%s2866] sm:$0xff]
      %v2868 = vld [vmem:[%s2866 + $0x8] sm:$0xff]
      %v2873 = vcombine.low %v2853, %v2857
      %v2874 = vcombine.low %v2861, %v2865
      %v2877 = vmul.f32 %v2867, %v2873
      %v2878 = vmul.f32 %v2868, %v2874
      %v2879 = vadd.f32 %v2848, %v2877
      %v2880 = vadd.f32 %v2849, %v2878
      %v2881 = vlaneseq
      %v2882 = vshrl.u32 %v2881, 7
      %v2883 = vsub.s32 6, %v2882
      %v2884 = vrot.slane %v2688, %v2883
      %v2885 = vlaneseq
      %v2886 = vshrl.u32 %v2885, 7
      %v2887 = vsub.s32 6, %v2886
      %v2888 = vrot.slane %v2689, %v2887
      %v2889 = vlaneseq
      %v2890 = vshrl.u32 %v2889, 7
      %v2891 = vsub.s32 6, %v2890
      %v2892 = vrot.slane %v2690, %v2891
      %v2893 = vlaneseq
      %v2894 = vshrl.u32 %v2893, 7
      %v2895 = vsub.s32 6, %v2894
      %v2896 = vrot.slane %v2696, %v2895
      %s2897 = scalar_lea.vmem [#allocation7], 736
      %v2898 = vld [vmem:[%s2897] sm:$0xff]
      %v2899 = vld [vmem:[%s2897 + $0x8] sm:$0xff]
      %v2904 = vcombine.low %v2884, %v2888
      %v2905 = vcombine.low %v2892, %v2896
      %v2908 = vmul.f32 %v2898, %v2904
      %v2909 = vmul.f32 %v2899, %v2905
      %v2910 = vadd.f32 %v2879, %v2908
      %v2911 = vadd.f32 %v2880, %v2909
      %v2912 = vlaneseq
      %v2913 = vshrl.u32 %v2912, 7
      %v2914 = vsub.s32 7, %v2913
      %v2915 = vrot.slane %v2688, %v2914
      %v2916 = vlaneseq
      %v2917 = vshrl.u32 %v2916, 7
      %v2918 = vsub.s32 7, %v2917
      %v2919 = vrot.slane %v2689, %v2918
      %v2920 = vlaneseq
      %v2921 = vshrl.u32 %v2920, 7
      %v2922 = vsub.s32 7, %v2921
      %v2923 = vrot.slane %v2690, %v2922
      %v2924 = vlaneseq
      %v2925 = vshrl.u32 %v2924, 7
      %v2926 = vsub.s32 7, %v2925
      %v2927 = vrot.slane %v2696, %v2926
      %s2928 = scalar_lea.vmem [#allocation7], 752
      %v2929 = vld [vmem:[%s2928] sm:$0xff]
      %v2930 = vld [vmem:[%s2928 + $0x8] sm:$0xff]
      %v2935 = vcombine.low %v2915, %v2919
      %v2936 = vcombine.low %v2923, %v2927
      %v2939 = vmul.f32 %v2929, %v2935
      %v2940 = vmul.f32 %v2930, %v2936
      %v2941 = vadd.f32 %v2910, %v2939
      %v2942 = vadd.f32 %v2911, %v2940
      %2943 = vrot.lane.b32.xlu0 %v1375, 113
      %v2944 = vpop.permute.xlu0 %2943
      %2945 = vrot.lane.b32.xlu0 %v1376, 113
      %v2946 = vpop.permute.xlu0 %2945
      %2947 = vrot.lane.b32.xlu0 %v1377, 113
      %v2948 = vpop.permute.xlu0 %2947
      %2949 = vrot.lane.b32.xlu0 %v1378, 113
      %v2950 = vpop.permute.xlu0 %2949
      %v2951 = vsel %vm957, %v2944, %v2946
      %v2952 = vsel %vm957, %v2946, %v2948
      %v2953 = vsel %vm957, %v2948, %v2950
      %v2959 = vsel %vm957, %v2950, %v2944
      %v2960 = vlaneseq
      %v2961 = vshrl.u32 %v2960, 7
      %v2962 = vsub.s32 0, %v2961
      %v2963 = vrot.slane %v2951, %v2962
      %v2964 = vlaneseq
      %v2965 = vshrl.u32 %v2964, 7
      %v2966 = vsub.s32 0, %v2965
      %v2967 = vrot.slane %v2952, %v2966
      %v2968 = vlaneseq
      %v2969 = vshrl.u32 %v2968, 7
      %v2970 = vsub.s32 0, %v2969
      %v2971 = vrot.slane %v2953, %v2970
      %v2972 = vlaneseq
      %v2973 = vshrl.u32 %v2972, 7
      %v2974 = vsub.s32 0, %v2973
      %v2975 = vrot.slane %v2959, %v2974
      %s2976 = scalar_lea.vmem [#allocation7], 768
      %v2977 = vld [vmem:[%s2976] sm:$0xff]
      %v2978 = vld [vmem:[%s2976 + $0x8] sm:$0xff]
      %v2983 = vcombine.low %v2963, %v2967
      %v2984 = vcombine.low %v2971, %v2975
      %v2987 = vmul.f32 %v2977, %v2983
      %v2988 = vmul.f32 %v2978, %v2984
      %v2989 = vlaneseq
      %v2990 = vshrl.u32 %v2989, 7
      %v2991 = vsub.s32 1, %v2990
      %v2992 = vrot.slane %v2951, %v2991
      %v2993 = vlaneseq
      %v2994 = vshrl.u32 %v2993, 7
      %v2995 = vsub.s32 1, %v2994
      %v2996 = vrot.slane %v2952, %v2995
      %v2997 = vlaneseq
      %v2998 = vshrl.u32 %v2997, 7
      %v2999 = vsub.s32 1, %v2998
      %v3000 = vrot.slane %v2953, %v2999
      %v3001 = vlaneseq
      %v3002 = vshrl.u32 %v3001, 7
      %v3003 = vsub.s32 1, %v3002
      %v3004 = vrot.slane %v2959, %v3003
      %s3005 = scalar_lea.vmem [#allocation7], 784
      %v3006 = vld [vmem:[%s3005] sm:$0xff]
      %v3007 = vld [vmem:[%s3005 + $0x8] sm:$0xff]
      %v3012 = vcombine.low %v2992, %v2996
      %v3013 = vcombine.low %v3000, %v3004
      %v3016 = vmul.f32 %v3006, %v3012
      %v3017 = vmul.f32 %v3007, %v3013
      %v3018 = vadd.f32 %v2987, %v3016
      %v3019 = vadd.f32 %v2988, %v3017
      %v3020 = vlaneseq
      %v3021 = vshrl.u32 %v3020, 7
      %v3022 = vsub.s32 2, %v3021
      %v3023 = vrot.slane %v2951, %v3022
      %v3024 = vlaneseq
      %v3025 = vshrl.u32 %v3024, 7
      %v3026 = vsub.s32 2, %v3025
      %v3027 = vrot.slane %v2952, %v3026
      %v3028 = vlaneseq
      %v3029 = vshrl.u32 %v3028, 7
      %v3030 = vsub.s32 2, %v3029
      %v3031 = vrot.slane %v2953, %v3030
      %v3032 = vlaneseq
      %v3033 = vshrl.u32 %v3032, 7
      %v3034 = vsub.s32 2, %v3033
      %v3035 = vrot.slane %v2959, %v3034
      %s3036 = scalar_lea.vmem [#allocation7], 800
      %v3037 = vld [vmem:[%s3036] sm:$0xff]
      %v3038 = vld [vmem:[%s3036 + $0x8] sm:$0xff]
      %v3043 = vcombine.low %v3023, %v3027
      %v3044 = vcombine.low %v3031, %v3035
      %v3047 = vmul.f32 %v3037, %v3043
      %v3048 = vmul.f32 %v3038, %v3044
      %v3049 = vadd.f32 %v3018, %v3047
      %v3050 = vadd.f32 %v3019, %v3048
      %v3051 = vlaneseq
      %v3052 = vshrl.u32 %v3051, 7
      %v3053 = vsub.s32 3, %v3052
      %v3054 = vrot.slane %v2951, %v3053
      %v3055 = vlaneseq
      %v3056 = vshrl.u32 %v3055, 7
      %v3057 = vsub.s32 3, %v3056
      %v3058 = vrot.slane %v2952, %v3057
      %v3059 = vlaneseq
      %v3060 = vshrl.u32 %v3059, 7
      %v3061 = vsub.s32 3, %v3060
      %v3062 = vrot.slane %v2953, %v3061
      %v3063 = vlaneseq
      %v3064 = vshrl.u32 %v3063, 7
      %v3065 = vsub.s32 3, %v3064
      %v3066 = vrot.slane %v2959, %v3065
      %s3067 = scalar_lea.vmem [#allocation7], 816
      %v3068 = vld [vmem:[%s3067] sm:$0xff]
      %v3069 = vld [vmem:[%s3067 + $0x8] sm:$0xff]
      %v3074 = vcombine.low %v3054, %v3058
      %v3075 = vcombine.low %v3062, %v3066
      %v3078 = vmul.f32 %v3068, %v3074
      %v3079 = vmul.f32 %v3069, %v3075
      %v3080 = vadd.f32 %v3049, %v3078
      %v3081 = vadd.f32 %v3050, %v3079
      %v3082 = vlaneseq
      %v3083 = vshrl.u32 %v3082, 7
      %v3084 = vsub.s32 4, %v3083
      %v3085 = vrot.slane %v2951, %v3084
      %v3086 = vlaneseq
      %v3087 = vshrl.u32 %v3086, 7
      %v3088 = vsub.s32 4, %v3087
      %v3089 = vrot.slane %v2952, %v3088
      %v3090 = vlaneseq
      %v3091 = vshrl.u32 %v3090, 7
      %v3092 = vsub.s32 4, %v3091
      %v3093 = vrot.slane %v2953, %v3092
      %v3094 = vlaneseq
      %v3095 = vshrl.u32 %v3094, 7
      %v3096 = vsub.s32 4, %v3095
      %v3097 = vrot.slane %v2959, %v3096
      %s3098 = scalar_lea.vmem [#allocation7], 832
      %v3099 = vld [vmem:[%s3098] sm:$0xff]
      %v3100 = vld [vmem:[%s3098 + $0x8] sm:$0xff]
      %v3105 = vcombine.low %v3085, %v3089
      %v3106 = vcombine.low %v3093, %v3097
      %v3109 = vmul.f32 %v3099, %v3105
      %v3110 = vmul.f32 %v3100, %v3106
      %v3111 = vadd.f32 %v3080, %v3109
      %v3112 = vadd.f32 %v3081, %v3110
      %v3113 = vlaneseq
      %v3114 = vshrl.u32 %v3113, 7
      %v3115 = vsub.s32 5, %v3114
      %v3116 = vrot.slane %v2951, %v3115
      %v3117 = vlaneseq
      %v3118 = vshrl.u32 %v3117, 7
      %v3119 = vsub.s32 5, %v3118
      %v3120 = vrot.slane %v2952, %v3119
      %v3121 = vlaneseq
      %v3122 = vshrl.u32 %v3121, 7
      %v3123 = vsub.s32 5, %v3122
      %v3124 = vrot.slane %v2953, %v3123
      %v3125 = vlaneseq
      %v3126 = vshrl.u32 %v3125, 7
      %v3127 = vsub.s32 5, %v3126
      %v3128 = vrot.slane %v2959, %v3127
      %s3129 = scalar_lea.vmem [#allocation7], 848
      %v3130 = vld [vmem:[%s3129] sm:$0xff]
      %v3131 = vld [vmem:[%s3129 + $0x8] sm:$0xff]
      %v3136 = vcombine.low %v3116, %v3120
      %v3137 = vcombine.low %v3124, %v3128
      %v3140 = vmul.f32 %v3130, %v3136
      %v3141 = vmul.f32 %v3131, %v3137
      %v3142 = vadd.f32 %v3111, %v3140
      %v3143 = vadd.f32 %v3112, %v3141
      %v3144 = vlaneseq
      %v3145 = vshrl.u32 %v3144, 7
      %v3146 = vsub.s32 6, %v3145
      %v3147 = vrot.slane %v2951, %v3146
      %v3148 = vlaneseq
      %v3149 = vshrl.u32 %v3148, 7
      %v3150 = vsub.s32 6, %v3149
      %v3151 = vrot.slane %v2952, %v3150
      %v3152 = vlaneseq
      %v3153 = vshrl.u32 %v3152, 7
      %v3154 = vsub.s32 6, %v3153
      %v3155 = vrot.slane %v2953, %v3154
      %v3156 = vlaneseq
      %v3157 = vshrl.u32 %v3156, 7
      %v3158 = vsub.s32 6, %v3157
      %v3159 = vrot.slane %v2959, %v3158
      %s3160 = scalar_lea.vmem [#allocation7], 864
      %v3161 = vld [vmem:[%s3160] sm:$0xff]
      %v3162 = vld [vmem:[%s3160 + $0x8] sm:$0xff]
      %v3167 = vcombine.low %v3147, %v3151
      %v3168 = vcombine.low %v3155, %v3159
      %v3171 = vmul.f32 %v3161, %v3167
      %v3172 = vmul.f32 %v3162, %v3168
      %v3173 = vadd.f32 %v3142, %v3171
      %v3174 = vadd.f32 %v3143, %v3172
      %v3175 = vlaneseq
      %v3176 = vshrl.u32 %v3175, 7
      %v3177 = vsub.s32 7, %v3176
      %v3178 = vrot.slane %v2951, %v3177
      %v3179 = vlaneseq
      %v3180 = vshrl.u32 %v3179, 7
      %v3181 = vsub.s32 7, %v3180
      %v3182 = vrot.slane %v2952, %v3181
      %v3183 = vlaneseq
      %v3184 = vshrl.u32 %v3183, 7
      %v3185 = vsub.s32 7, %v3184
      %v3186 = vrot.slane %v2953, %v3185
      %v3187 = vlaneseq
      %v3188 = vshrl.u32 %v3187, 7
      %v3189 = vsub.s32 7, %v3188
      %v3190 = vrot.slane %v2959, %v3189
      %s3191 = scalar_lea.vmem [#allocation7], 880
      %v3192 = vld [vmem:[%s3191] sm:$0xff]
      %v3193 = vld [vmem:[%s3191 + $0x8] sm:$0xff]
      %v3198 = vcombine.low %v3178, %v3182
      %v3199 = vcombine.low %v3186, %v3190
      %v3202 = vmul.f32 %v3192, %v3198
      %v3203 = vmul.f32 %v3193, %v3199
      %v3204 = vadd.f32 %v3173, %v3202
      %v3205 = vadd.f32 %v3174, %v3203
      %3206 = vrot.lane.b32.xlu0 %v1375, 112
      %v3207 = vpop.permute.xlu0 %3206
      %3208 = vrot.lane.b32.xlu0 %v1376, 112
      %v3209 = vpop.permute.xlu0 %3208
      %3210 = vrot.lane.b32.xlu0 %v1377, 112
      %v3211 = vpop.permute.xlu0 %3210
      %3212 = vrot.lane.b32.xlu0 %v1378, 112
      %v3213 = vpop.permute.xlu0 %3212
      %v3214 = vsel %vm1087, %v3207, %v3209
      %v3215 = vsel %vm1087, %v3209, %v3211
      %v3216 = vsel %vm1087, %v3211, %v3213
      %v3222 = vsel %vm1087, %v3213, %v3207
      %v3223 = vlaneseq
      %v3224 = vshrl.u32 %v3223, 7
      %v3225 = vsub.s32 0, %v3224
      %v3226 = vrot.slane %v3214, %v3225
      %v3227 = vlaneseq
      %v3228 = vshrl.u32 %v3227, 7
      %v3229 = vsub.s32 0, %v3228
      %v3230 = vrot.slane %v3215, %v3229
      %v3231 = vlaneseq
      %v3232 = vshrl.u32 %v3231, 7
      %v3233 = vsub.s32 0, %v3232
      %v3234 = vrot.slane %v3216, %v3233
      %v3235 = vlaneseq
      %v3236 = vshrl.u32 %v3235, 7
      %v3237 = vsub.s32 0, %v3236
      %v3238 = vrot.slane %v3222, %v3237
      %s3239 = scalar_lea.vmem [#allocation7], 896
      %v3240 = vld [vmem:[%s3239] sm:$0xff]
      %v3241 = vld [vmem:[%s3239 + $0x8] sm:$0xff]
      %v3246 = vcombine.low %v3226, %v3230
      %v3247 = vcombine.low %v3234, %v3238
      %v3250 = vmul.f32 %v3240, %v3246
      %v3251 = vmul.f32 %v3241, %v3247
      %v3252 = vlaneseq
      %v3253 = vshrl.u32 %v3252, 7
      %v3254 = vsub.s32 1, %v3253
      %v3255 = vrot.slane %v3214, %v3254
      %v3256 = vlaneseq
      %v3257 = vshrl.u32 %v3256, 7
      %v3258 = vsub.s32 1, %v3257
      %v3259 = vrot.slane %v3215, %v3258
      %v3260 = vlaneseq
      %v3261 = vshrl.u32 %v3260, 7
      %v3262 = vsub.s32 1, %v3261
      %v3263 = vrot.slane %v3216, %v3262
      %v3264 = vlaneseq
      %v3265 = vshrl.u32 %v3264, 7
      %v3266 = vsub.s32 1, %v3265
      %v3267 = vrot.slane %v3222, %v3266
      %s3268 = scalar_lea.vmem [#allocation7], 912
      %v3269 = vld [vmem:[%s3268] sm:$0xff]
      %v3270 = vld [vmem:[%s3268 + $0x8] sm:$0xff]
      %v3275 = vcombine.low %v3255, %v3259
      %v3276 = vcombine.low %v3263, %v3267
      %v3279 = vmul.f32 %v3269, %v3275
      %v3280 = vmul.f32 %v3270, %v3276
      %v3281 = vadd.f32 %v3250, %v3279
      %v3282 = vadd.f32 %v3251, %v3280
      %v3283 = vlaneseq
      %v3284 = vshrl.u32 %v3283, 7
      %v3285 = vsub.s32 2, %v3284
      %v3286 = vrot.slane %v3214, %v3285
      %v3287 = vlaneseq
      %v3288 = vshrl.u32 %v3287, 7
      %v3289 = vsub.s32 2, %v3288
      %v3290 = vrot.slane %v3215, %v3289
      %v3291 = vlaneseq
      %v3292 = vshrl.u32 %v3291, 7
      %v3293 = vsub.s32 2, %v3292
      %v3294 = vrot.slane %v3216, %v3293
      %v3295 = vlaneseq
      %v3296 = vshrl.u32 %v3295, 7
      %v3297 = vsub.s32 2, %v3296
      %v3298 = vrot.slane %v3222, %v3297
      %s3299 = scalar_lea.vmem [#allocation7], 928
      %v3300 = vld [vmem:[%s3299] sm:$0xff]
      %v3301 = vld [vmem:[%s3299 + $0x8] sm:$0xff]
      %v3306 = vcombine.low %v3286, %v3290
      %v3307 = vcombine.low %v3294, %v3298
      %v3310 = vmul.f32 %v3300, %v3306
      %v3311 = vmul.f32 %v3301, %v3307
      %v3312 = vadd.f32 %v3281, %v3310
      %v3313 = vadd.f32 %v3282, %v3311
      %v3314 = vlaneseq
      %v3315 = vshrl.u32 %v3314, 7
      %v3316 = vsub.s32 3, %v3315
      %v3317 = vrot.slane %v3214, %v3316
      %v3318 = vlaneseq
      %v3319 = vshrl.u32 %v3318, 7
      %v3320 = vsub.s32 3, %v3319
      %v3321 = vrot.slane %v3215, %v3320
      %v3322 = vlaneseq
      %v3323 = vshrl.u32 %v3322, 7
      %v3324 = vsub.s32 3, %v3323
      %v3325 = vrot.slane %v3216, %v3324
      %v3326 = vlaneseq
      %v3327 = vshrl.u32 %v3326, 7
      %v3328 = vsub.s32 3, %v3327
      %v3329 = vrot.slane %v3222, %v3328
      %s3330 = scalar_lea.vmem [#allocation7], 944
      %v3331 = vld [vmem:[%s3330] sm:$0xff]
      %v3332 = vld [vmem:[%s3330 + $0x8] sm:$0xff]
      %v3337 = vcombine.low %v3317, %v3321
      %v3338 = vcombine.low %v3325, %v3329
      %v3341 = vmul.f32 %v3331, %v3337
      %v3342 = vmul.f32 %v3332, %v3338
      %v3343 = vadd.f32 %v3312, %v3341
      %v3344 = vadd.f32 %v3313, %v3342
      %v3345 = vlaneseq
      %v3346 = vshrl.u32 %v3345, 7
      %v3347 = vsub.s32 4, %v3346
      %v3348 = vrot.slane %v3214, %v3347
      %v3349 = vlaneseq
      %v3350 = vshrl.u32 %v3349, 7
      %v3351 = vsub.s32 4, %v3350
      %v3352 = vrot.slane %v3215, %v3351
      %v3353 = vlaneseq
      %v3354 = vshrl.u32 %v3353, 7
      %v3355 = vsub.s32 4, %v3354
      %v3356 = vrot.slane %v3216, %v3355
      %v3357 = vlaneseq
      %v3358 = vshrl.u32 %v3357, 7
      %v3359 = vsub.s32 4, %v3358
      %v3360 = vrot.slane %v3222, %v3359
      %s3361 = scalar_lea.vmem [#allocation7], 960
      %v3362 = vld [vmem:[%s3361] sm:$0xff]
      %v3363 = vld [vmem:[%s3361 + $0x8] sm:$0xff]
      %v3368 = vcombine.low %v3348, %v3352
      %v3369 = vcombine.low %v3356, %v3360
      %v3372 = vmul.f32 %v3362, %v3368
      %v3373 = vmul.f32 %v3363, %v3369
      %v3374 = vadd.f32 %v3343, %v3372
      %v3375 = vadd.f32 %v3344, %v3373
      %v3376 = vlaneseq
      %v3377 = vshrl.u32 %v3376, 7
      %v3378 = vsub.s32 5, %v3377
      %v3379 = vrot.slane %v3214, %v3378
      %v3380 = vlaneseq
      %v3381 = vshrl.u32 %v3380, 7
      %v3382 = vsub.s32 5, %v3381
      %v3383 = vrot.slane %v3215, %v3382
      %v3384 = vlaneseq
      %v3385 = vshrl.u32 %v3384, 7
      %v3386 = vsub.s32 5, %v3385
      %v3387 = vrot.slane %v3216, %v3386
      %v3388 = vlaneseq
      %v3389 = vshrl.u32 %v3388, 7
      %v3390 = vsub.s32 5, %v3389
      %v3391 = vrot.slane %v3222, %v3390
      %s3392 = scalar_lea.vmem [#allocation7], 976
      %v3393 = vld [vmem:[%s3392] sm:$0xff]
      %v3394 = vld [vmem:[%s3392 + $0x8] sm:$0xff]
      %v3399 = vcombine.low %v3379, %v3383
      %v3400 = vcombine.low %v3387, %v3391
      %v3403 = vmul.f32 %v3393, %v3399
      %v3404 = vmul.f32 %v3394, %v3400
      %v3405 = vadd.f32 %v3374, %v3403
      %v3406 = vadd.f32 %v3375, %v3404
      %v3407 = vlaneseq
      %v3408 = vshrl.u32 %v3407, 7
      %v3409 = vsub.s32 6, %v3408
      %v3410 = vrot.slane %v3214, %v3409
      %v3411 = vlaneseq
      %v3412 = vshrl.u32 %v3411, 7
      %v3413 = vsub.s32 6, %v3412
      %v3414 = vrot.slane %v3215, %v3413
      %v3415 = vlaneseq
      %v3416 = vshrl.u32 %v3415, 7
      %v3417 = vsub.s32 6, %v3416
      %v3418 = vrot.slane %v3216, %v3417
      %v3419 = vlaneseq
      %v3420 = vshrl.u32 %v3419, 7
      %v3421 = vsub.s32 6, %v3420
      %v3422 = vrot.slane %v3222, %v3421
      %s3423 = scalar_lea.vmem [#allocation7], 992
      %v3424 = vld [vmem:[%s3423] sm:$0xff]
      %v3425 = vld [vmem:[%s3423 + $0x8] sm:$0xff]
      %v3430 = vcombine.low %v3410, %v3414
      %v3431 = vcombine.low %v3418, %v3422
      %v3434 = vmul.f32 %v3424, %v3430
      %v3435 = vmul.f32 %v3425, %v3431
      %v3436 = vadd.f32 %v3405, %v3434
      %v3437 = vadd.f32 %v3406, %v3435
      %v3438 = vlaneseq
      %v3439 = vshrl.u32 %v3438, 7
      %v3440 = vsub.s32 7, %v3439
      %v3441 = vrot.slane %v3214, %v3440
      %v3442 = vlaneseq
      %v3443 = vshrl.u32 %v3442, 7
      %v3444 = vsub.s32 7, %v3443
      %v3445 = vrot.slane %v3215, %v3444
      %v3446 = vlaneseq
      %v3447 = vshrl.u32 %v3446, 7
      %v3448 = vsub.s32 7, %v3447
      %v3449 = vrot.slane %v3216, %v3448
      %v3450 = vlaneseq
      %v3451 = vshrl.u32 %v3450, 7
      %v3452 = vsub.s32 7, %v3451
      %v3453 = vrot.slane %v3222, %v3452
      %s3454 = scalar_lea.vmem [#allocation7], 1008
      %v3455 = vld [vmem:[%s3454] sm:$0xff]
      %v3456 = vld [vmem:[%s3454 + $0x8] sm:$0xff]
      %v3461 = vcombine.low %v3441, %v3445
      %v3462 = vcombine.low %v3449, %v3453
      %v3465 = vmul.f32 %v3455, %v3461
      %v3466 = vmul.f32 %v3456, %v3462
      %v3467 = vadd.f32 %v3436, %v3465
      %v3468 = vadd.f32 %v3437, %v3466
      %3469 = vrot.lane.b32.xlu0 %v1375, 111
      %v3470 = vpop.permute.xlu0 %3469
      %3471 = vrot.lane.b32.xlu0 %v1376, 111
      %v3472 = vpop.permute.xlu0 %3471
      %3473 = vrot.lane.b32.xlu0 %v1377, 111
      %v3474 = vpop.permute.xlu0 %3473
      %3475 = vrot.lane.b32.xlu0 %v1378, 111
      %v3476 = vpop.permute.xlu0 %3475
      %v3477 = vsel %vm1217, %v3470, %v3472
      %v3478 = vsel %vm1217, %v3472, %v3474
      %v3479 = vsel %vm1217, %v3474, %v3476
      %v3485 = vsel %vm1217, %v3476, %v3470
      %v3486 = vlaneseq
      %v3487 = vshrl.u32 %v3486, 7
      %v3488 = vsub.s32 0, %v3487
      %v3489 = vrot.slane %v3477, %v3488
      %v3490 = vlaneseq
      %v3491 = vshrl.u32 %v3490, 7
      %v3492 = vsub.s32 0, %v3491
      %v3493 = vrot.slane %v3478, %v3492
      %v3494 = vlaneseq
      %v3495 = vshrl.u32 %v3494, 7
      %v3496 = vsub.s32 0, %v3495
      %v3497 = vrot.slane %v3479, %v3496
      %v3498 = vlaneseq
      %v3499 = vshrl.u32 %v3498, 7
      %v3500 = vsub.s32 0, %v3499
      %v3501 = vrot.slane %v3485, %v3500
      %s3502 = scalar_lea.vmem [#allocation7], 1024
      %v3503 = vld [vmem:[%s3502] sm:$0xff]
      %v3504 = vld [vmem:[%s3502 + $0x8] sm:$0xff]
      %v3509 = vcombine.low %v3489, %v3493
      %v3510 = vcombine.low %v3497, %v3501
      %v3513 = vmul.f32 %v3503, %v3509
      %v3514 = vmul.f32 %v3504, %v3510
      %v3515 = vlaneseq
      %v3516 = vshrl.u32 %v3515, 7
      %v3517 = vsub.s32 1, %v3516
      %v3518 = vrot.slane %v3477, %v3517
      %v3519 = vlaneseq
      %v3520 = vshrl.u32 %v3519, 7
      %v3521 = vsub.s32 1, %v3520
      %v3522 = vrot.slane %v3478, %v3521
      %v3523 = vlaneseq
      %v3524 = vshrl.u32 %v3523, 7
      %v3525 = vsub.s32 1, %v3524
      %v3526 = vrot.slane %v3479, %v3525
      %v3527 = vlaneseq
      %v3528 = vshrl.u32 %v3527, 7
      %v3529 = vsub.s32 1, %v3528
      %v3530 = vrot.slane %v3485, %v3529
      %s3531 = scalar_lea.vmem [#allocation7], 1040
      %v3532 = vld [vmem:[%s3531] sm:$0xff]
      %v3533 = vld [vmem:[%s3531 + $0x8] sm:$0xff]
      %v3538 = vcombine.low %v3518, %v3522
      %v3539 = vcombine.low %v3526, %v3530
      %v3542 = vmul.f32 %v3532, %v3538
      %v3543 = vmul.f32 %v3533, %v3539
      %v3544 = vadd.f32 %v3513, %v3542
      %v3545 = vadd.f32 %v3514, %v3543
      %v3546 = vlaneseq
      %v3547 = vshrl.u32 %v3546, 7
      %v3548 = vsub.s32 2, %v3547
      %v3549 = vrot.slane %v3477, %v3548
      %v3550 = vlaneseq
      %v3551 = vshrl.u32 %v3550, 7
      %v3552 = vsub.s32 2, %v3551
      %v3553 = vrot.slane %v3478, %v3552
      %v3554 = vlaneseq
      %v3555 = vshrl.u32 %v3554, 7
      %v3556 = vsub.s32 2, %v3555
      %v3557 = vrot.slane %v3479, %v3556
      %v3558 = vlaneseq
      %v3559 = vshrl.u32 %v3558, 7
      %v3560 = vsub.s32 2, %v3559
      %v3561 = vrot.slane %v3485, %v3560
      %s3562 = scalar_lea.vmem [#allocation7], 1056
      %v3563 = vld [vmem:[%s3562] sm:$0xff]
      %v3564 = vld [vmem:[%s3562 + $0x8] sm:$0xff]
      %v3569 = vcombine.low %v3549, %v3553
      %v3570 = vcombine.low %v3557, %v3561
      %v3573 = vmul.f32 %v3563, %v3569
      %v3574 = vmul.f32 %v3564, %v3570
      %v3575 = vadd.f32 %v3544, %v3573
      %v3576 = vadd.f32 %v3545, %v3574
      %v3577 = vlaneseq
      %v3578 = vshrl.u32 %v3577, 7
      %v3579 = vsub.s32 3, %v3578
      %v3580 = vrot.slane %v3477, %v3579
      %v3581 = vlaneseq
      %v3582 = vshrl.u32 %v3581, 7
      %v3583 = vsub.s32 3, %v3582
      %v3584 = vrot.slane %v3478, %v3583
      %v3585 = vlaneseq
      %v3586 = vshrl.u32 %v3585, 7
      %v3587 = vsub.s32 3, %v3586
      %v3588 = vrot.slane %v3479, %v3587
      %v3589 = vlaneseq
      %v3590 = vshrl.u32 %v3589, 7
      %v3591 = vsub.s32 3, %v3590
      %v3592 = vrot.slane %v3485, %v3591
      %s3593 = scalar_lea.vmem [#allocation7], 1072
      %v3594 = vld [vmem:[%s3593] sm:$0xff]
      %v3595 = vld [vmem:[%s3593 + $0x8] sm:$0xff]
      %v3600 = vcombine.low %v3580, %v3584
      %v3601 = vcombine.low %v3588, %v3592
      %v3604 = vmul.f32 %v3594, %v3600
      %v3605 = vmul.f32 %v3595, %v3601
      %v3606 = vadd.f32 %v3575, %v3604
      %v3607 = vadd.f32 %v3576, %v3605
      %v3608 = vlaneseq
      %v3609 = vshrl.u32 %v3608, 7
      %v3610 = vsub.s32 4, %v3609
      %v3611 = vrot.slane %v3477, %v3610
      %v3612 = vlaneseq
      %v3613 = vshrl.u32 %v3612, 7
      %v3614 = vsub.s32 4, %v3613
      %v3615 = vrot.slane %v3478, %v3614
      %v3616 = vlaneseq
      %v3617 = vshrl.u32 %v3616, 7
      %v3618 = vsub.s32 4, %v3617
      %v3619 = vrot.slane %v3479, %v3618
      %v3620 = vlaneseq
      %v3621 = vshrl.u32 %v3620, 7
      %v3622 = vsub.s32 4, %v3621
      %v3623 = vrot.slane %v3485, %v3622
      %s3624 = scalar_lea.vmem [#allocation7], 1088
      %v3625 = vld [vmem:[%s3624] sm:$0xff]
      %v3626 = vld [vmem:[%s3624 + $0x8] sm:$0xff]
      %v3631 = vcombine.low %v3611, %v3615
      %v3632 = vcombine.low %v3619, %v3623
      %v3635 = vmul.f32 %v3625, %v3631
      %v3636 = vmul.f32 %v3626, %v3632
      %v3637 = vadd.f32 %v3606, %v3635
      %v3638 = vadd.f32 %v3607, %v3636
      %v3639 = vlaneseq
      %v3640 = vshrl.u32 %v3639, 7
      %v3641 = vsub.s32 5, %v3640
      %v3642 = vrot.slane %v3477, %v3641
      %v3643 = vlaneseq
      %v3644 = vshrl.u32 %v3643, 7
      %v3645 = vsub.s32 5, %v3644
      %v3646 = vrot.slane %v3478, %v3645
      %v3647 = vlaneseq
      %v3648 = vshrl.u32 %v3647, 7
      %v3649 = vsub.s32 5, %v3648
      %v3650 = vrot.slane %v3479, %v3649
      %v3651 = vlaneseq
      %v3652 = vshrl.u32 %v3651, 7
      %v3653 = vsub.s32 5, %v3652
      %v3654 = vrot.slane %v3485, %v3653
      %s3655 = scalar_lea.vmem [#allocation7], 1104
      %v3656 = vld [vmem:[%s3655] sm:$0xff]
      %v3657 = vld [vmem:[%s3655 + $0x8] sm:$0xff]
      %v3662 = vcombine.low %v3642, %v3646
      %v3663 = vcombine.low %v3650, %v3654
      %v3666 = vmul.f32 %v3656, %v3662
      %v3667 = vmul.f32 %v3657, %v3663
      %v3668 = vadd.f32 %v3637, %v3666
      %v3669 = vadd.f32 %v3638, %v3667
      %v3670 = vlaneseq
      %v3671 = vshrl.u32 %v3670, 7
      %v3672 = vsub.s32 6, %v3671
      %v3673 = vrot.slane %v3477, %v3672
      %v3674 = vlaneseq
      %v3675 = vshrl.u32 %v3674, 7
      %v3676 = vsub.s32 6, %v3675
      %v3677 = vrot.slane %v3478, %v3676
      %v3678 = vlaneseq
      %v3679 = vshrl.u32 %v3678, 7
      %v3680 = vsub.s32 6, %v3679
      %v3681 = vrot.slane %v3479, %v3680
      %v3682 = vlaneseq
      %v3683 = vshrl.u32 %v3682, 7
      %v3684 = vsub.s32 6, %v3683
      %v3685 = vrot.slane %v3485, %v3684
      %s3686 = scalar_lea.vmem [#allocation7], 1120
      %v3687 = vld [vmem:[%s3686] sm:$0xff]
      %v3688 = vld [vmem:[%s3686 + $0x8] sm:$0xff]
      %v3693 = vcombine.low %v3673, %v3677
      %v3694 = vcombine.low %v3681, %v3685
      %v3697 = vmul.f32 %v3687, %v3693
      %v3698 = vmul.f32 %v3688, %v3694
      %v3699 = vadd.f32 %v3668, %v3697
      %v3700 = vadd.f32 %v3669, %v3698
      %v3701 = vlaneseq
      %v3702 = vshrl.u32 %v3701, 7
      %v3703 = vsub.s32 7, %v3702
      %v3704 = vrot.slane %v3477, %v3703
      %v3705 = vlaneseq
      %v3706 = vshrl.u32 %v3705, 7
      %v3707 = vsub.s32 7, %v3706
      %v3708 = vrot.slane %v3478, %v3707
      %v3709 = vlaneseq
      %v3710 = vshrl.u32 %v3709, 7
      %v3711 = vsub.s32 7, %v3710
      %v3712 = vrot.slane %v3479, %v3711
      %v3713 = vlaneseq
      %v3714 = vshrl.u32 %v3713, 7
      %v3715 = vsub.s32 7, %v3714
      %v3716 = vrot.slane %v3485, %v3715
      %s3717 = scalar_lea.vmem [#allocation7], 1136
      %v3718 = vld [vmem:[%s3717] sm:$0xff]
      %v3719 = vld [vmem:[%s3717 + $0x8] sm:$0xff]
      %v3724 = vcombine.low %v3704, %v3708
      %v3725 = vcombine.low %v3712, %v3716
      %v3728 = vmul.f32 %v3718, %v3724
      %v3729 = vmul.f32 %v3719, %v3725
      %v3730 = vadd.f32 %v3699, %v3728
      %v3731 = vadd.f32 %v3700, %v3729
      %v3732 = vadd.f32 %v85, %v1643
      %v3733 = vadd.f32 %v86, %v1644
      %v3734 = vadd.f32 %v1906, %v2169
      %v3735 = vadd.f32 %v1907, %v2170
      %v3736 = vadd.f32 %v2432, %v2678
      %v3737 = vadd.f32 %v2433, %v2679
      %v3738 = vadd.f32 %v2941, %v3204
      %v3739 = vadd.f32 %v2942, %v3205
      %v3740 = vadd.f32 %v3467, %v3730
      %v3741 = vadd.f32 %v3468, %v3731
      %v3742 = vadd.f32 %v3732, %v3734
      %v3743 = vadd.f32 %v3733, %v3735
      %v3744 = vadd.f32 %v3736, %v3738
      %v3745 = vadd.f32 %v3737, %v3739
      %v3746 = vadd.f32 %v3742, %v3744
      %v3747 = vadd.f32 %v3743, %v3745
      %v3748 = vadd.f32 %v3746, %v3740
      %v3749 = vadd.f32 %v3747, %v3741
      %v3750 = vmul.f32 %v3748, 0.01
      %v3751 = vmul.f32 %v3749, 0.01
      %v3752 = vadd.f32 %v95, %v3750
      %v3753 = vadd.f32 %v96, %v3751
    $region46: #{tpu_custom_call.1} parent=1 // loop_footer
      %s94 = sadd.s32 1, %s90
    $region47: #{tpu_custom_call.1} parent=1 // loop_footer_branch
      %89 = sbr.rel target = $region43
    $region48: #{tpu_custom_call.1} parent=1 // loop_exit
      _
    %3754 = vst [vmem:[#allocation11] sm:$0xff] %v95
    %3755 = vst [vmem:[#allocation11 + $0x8] sm:$0xff] %v96
    // Predicated region
    $region49: #{tpu_custom_call.1} parent=1 // pred_check
      _
    $region50: #{tpu_custom_call.1} parent=1 // pred_check_branch
      %3757 = sbr.rel (0) target = $region52
    $region51: #{tpu_custom_call.1} parent=1 // pred_region
      %s3759 = ssub.s32 256, 256
      %3760 = vsyncadd [#allocation4], %s3759
      %s3762 = sshll.u32 [#allocation11], 4
      %s3763 = int_to_ptr.vmem [resolvable:$true] %s3762
      %3765 = dma.vmem_to_hbm [thread:$0]  %s3763, 256, %s5, [#allocation4]
    $region52: #{tpu_custom_call.1} parent=1 // pred_fallthru
      _
    // Predicated region
    $region53: #{tpu_custom_call.1} parent=1 // pred_check
      _
    $region54: #{tpu_custom_call.1} parent=1 // pred_check_branch
      %3767 = sbr.rel (0) target = $region56
    $region55: #{tpu_custom_call.1} parent=1 // pred_region
      %3768 = dma.done [#allocation4], 256
    $region56: #{tpu_custom_call.1} parent=1 // pred_fallthru
      _
    %3769 = vsyncpa [#allocation3], 1
    %3770 = vsyncpa [#allocation6], 1
    %3771 = vsyncpa [#allocation9], 1
    %3772 = vsyncpa [#allocation4], 1

</llo_original>
